<compile_context>
chip_gen: v7x
topology: tpu7x:2x2x1
jax: 0.10.0
libtpu: 0.0.40
codegen_flags: <defaults>
</compile_context>

<pallas_src>
import functools
import jax
import jax.numpy as jnp
from jax.experimental import pallas as pl
from jax.experimental.pallas import tpu as pltpu

# ----- KANLinear hyperparameters (defaults from the PyTorch module) -----
GRID_SIZE = 5
SPLINE_ORDER = 3
GRID_RANGE = (-1.0, 1.0)
_H = (GRID_RANGE[1] - GRID_RANGE[0]) / GRID_SIZE
# grid buffer: arange(-spline_order, grid_size+spline_order+1) * h + grid_range[0]
GRID_KNOTS = tuple(float((i - SPLINE_ORDER) * _H + GRID_RANGE[0])
                   for i in range(GRID_SIZE + 2 * SPLINE_ORDER + 1))
NUM_BASES = GRID_SIZE + SPLINE_ORDER       # 8 bases per input feature
KNOT0 = GRID_KNOTS[0]                      # leftmost (extended) knot
INV_H = 1.0 / _H
LN_EPS = 1e-5
_LANE = 128


def _round_up(x, m):
    return (x + m - 1) // m * m


# ------------------------------ Pallas kernel ------------------------------
def _embeddings_kernel(f_true, d_true, tile_b, patches,
                       x_ref, ln1w_ref, ln1b_ref, w_ref, ln2w_ref, ln2b_ref,
                       pos_ref, o_ref):
    fp = x_ref.shape[-1]            # padded patch_dim (multiple of 128)
    dp = o_ref.shape[-1]            # padded dim       (multiple of 128)
    t_rows = tile_b * patches
    mxu_dtype = w_ref.dtype         # bf16 by default (f32 optional)

    x = x_ref[...].reshape(t_rows, fp)          # (T, Fp) f32; padded lanes are 0

    # ---- LayerNorm(patch_dim): two-pass variance, masked to TRUE features ----
    f_mask = jax.lax.broadcasted_iota(jnp.int32, (1, fp), 1) < f_true
    inv_f = 1.0 / f_true
    mu = jnp.sum(x, axis=-1, keepdims=True) * inv_f
    xc = jnp.where(f_mask, x - mu, 0.0)
    var = jnp.sum(xc * xc, axis=-1, keepdims=True) * inv_f
    xn = xc * jax.lax.rsqrt(var + LN_EPS) * ln1w_ref[...] + ln1b_ref[...]
    # padded lanes of ln1 weight/bias are 0 -> xn == 0 there; padded weight
    # rows below are also 0, so pad lanes contribute nothing to the matmul.

    # ---- KANLinear base activation + base matmul (bf16 operands, f32 acc) ----
    silu = xn * jax.nn.sigmoid(xn)
    acc = jnp.dot(silu.astype(mxu_dtype), w_ref[pl.ds(0, fp), :],
                  preferred_element_type=jnp.float32)            # (T, Dp) f32

    # ---- cubic B-spline blending weights (local support, uniform knots) ----
    t = (xn - KNOT0) * INV_H
    span = jnp.floor(t)                         # knot-span index (float, f32)
    u = t - span                                # local coordinate in [0, 1)
    u2 = u * u
    u3 = u2 * u
    om = 1.0 - u
    sixth = 1.0 / 6.0
    w3 = u3 * sixth                                       # weight of B_{span}
    w2 = (-3.0 * u3 + 3.0 * u2 + 3.0 * u + 1.0) * sixth   # weight of B_{span-1}
    w1 = (3.0 * u3 - 6.0 * u2 + 4.0) * sixth              # weight of B_{span-2}
    w0 = om * om * om * sixth                             # weight of B_{span-3}
    zero = jnp.zeros_like(w0)

    # ---- per-basis accumulating dots (no (T, 9*fp) concatenate) ----
    # basis_j is nonzero only when span in {j, j+1, j+2, j+3}; out-of-range x
    # matches nothing -> all-zero bases, like the half-open Cox-de-Boor chain.
    for j in range(NUM_BASES):
        basis_j = jnp.where(span == float(j), w3,
                    jnp.where(span == float(j + 1), w2,
                      jnp.where(span == float(j + 2), w1,
                        jnp.where(span == float(j + 3), w0, zero))))
        acc = acc + jnp.dot(basis_j.astype(mxu_dtype),
                            w_ref[pl.ds((j + 1) * fp, fp), :],
                            preferred_element_type=jnp.float32)

    # ---- LayerNorm(dim): padded lanes of acc are exactly 0 ----
    d_mask = jax.lax.broadcasted_iota(jnp.int32, (1, dp), 1) < d_true
    inv_d = 1.0 / d_true
    mu2 = jnp.sum(acc, axis=-1, keepdims=True) * inv_d
    ac = jnp.where(d_mask, acc - mu2, 0.0)
    var2 = jnp.sum(ac * ac, axis=-1, keepdims=True) * inv_d
    y = ac * jax.lax.rsqrt(var2 + LN_EPS) * ln2w_ref[...] + ln2b_ref[...]

    # ---- + positional embedding, lane-dense (Dp multiple of 128) store ----
    y3 = y.reshape(tile_b, patches, dp)
    o_ref[...] = (y3 + pos_ref[...][None, :, :]).astype(o_ref.dtype)


# --------------------------- host-side preparation ---------------------------
def prepare_params(params, *, patch_dim, dim, weight_dtype=jnp.bfloat16):
    """Fuse / pad the weights once; cache the result outside the call path."""
    fp = _round_up(patch_dim, _LANE)
    dp = _round_up(dim, _LANE)

    # Fused weight: rows [0:fp) = base_weight^T; rows [(1+j)*fp:(2+j)*fp) =
    # scaled_spline_weight[:, :, j]^T.  All zero-padded to (fp, dp) blocks.
    bw_t = params["base_weight"].astype(jnp.float32).T                   # (in, dim)
    sw = (params["spline_weight"] *
          params["spline_scaler"][..., None]).astype(jnp.float32)        # (dim, in, K)
    blocks = [jnp.pad(bw_t, ((0, fp - patch_dim), (0, dp - dim)))]
    for j in range(NUM_BASES):
        blocks.append(jnp.pad(sw[:, :, j].T, ((0, fp - patch_dim), (0, dp - dim))))
    w_cat = jnp.concatenate(blocks, axis=0).astype(weight_dtype)         # ((K+1)*fp, dp)

    return {
        "w_cat": w_cat,
        "ln1w": jnp.pad(params["ln1_w"].astype(jnp.float32),
                        (0, fp - patch_dim)).reshape(1, fp),
        "ln1b": jnp.pad(params["ln1_b"].astype(jnp.float32),
                        (0, fp - patch_dim)).reshape(1, fp),
        "ln2w": jnp.pad(params["ln2_w"].astype(jnp.float32),
                        (0, dp - dim)).reshape(1, dp),
        "ln2b": jnp.pad(params["ln2_b"].astype(jnp.float32),
                        (0, dp - dim)).reshape(1, dp),
        "pos": jnp.pad(params["pos_emb"].astype(jnp.float32)[0],
                       ((0, 0), (0, dp - dim))),                         # (patches, dp)
        "patch_dim": patch_dim,
        "dim": dim,
    }


def _vmem_limit_bytes():
    """Per-generation VMEM budget (v5e/v6e: 128 MiB, v7x: 64 MiB physical)."""
    try:
        cap = int(pltpu.get_tpu_info().vmem_capacity_bytes)
    except Exception:
        cap = 64 * 1024 * 1024
    return max(32 * 1024 * 1024, cap - 16 * 1024 * 1024)


def _pick_tile_b(B, patches, fp, dp, w_resident_bytes, vmem_limit, target_rows):
    # f32 in/out token tiles (double-buffered) plus a rough allowance for
    # in-kernel temporaries (xn, silu, spline polys, basis, acc, ...).
    bytes_per_row = 2 * 4 * (fp + dp) + 12 * 4 * max(fp, dp)
    avail = max(vmem_limit - w_resident_bytes, bytes_per_row * patches)
    max_rows = max(patches, avail // bytes_per_row)
    tile_b = max(1, min(B, min(target_rows, max_rows) // patches))
    # Keep >= 2 grid steps so both v7x TensorCores get work (no-op for big B).
    if B >= 2:
        tile_b = min(tile_b, (B + 1) // 2)
    return tile_b


# ------------------------------- host wrapper -------------------------------
def embeddings_forward(x_img, params, *, patch_size, dim,
                       target_tile_rows=512, weight_dtype=jnp.bfloat16,
                       out_dtype=jnp.float32):
    """x_img: (B, C, H, W) float32.  Returns (B, patches, dim) out_dtype."""
    B, C, H, W = x_img.shape
    p = patch_size
    hp, wp = H // p, W // p
    patches = hp * wp
    patch_dim = C * p * p
    fp = _round_up(patch_dim, _LANE)
    dp = _round_up(dim, _LANE)

    prep = params if "w_cat" in params else prepare_params(
        params, patch_dim=patch_dim, dim=dim, weight_dtype=weight_dtype)

    # Rearrange 'b c (h p1) (w p2) -> b (h w) (c p1 p2)'  (layout glue, plain JAX)
    xp = (x_img.reshape(B, C, hp, p, wp, p)
               .transpose(0, 2, 4, 1, 3, 5)
               .reshape(B, patches, patch_dim)).astype(jnp.float32)

    vmem_limit = _vmem_limit_bytes()
    w_bytes = prep["w_cat"].size * prep["w_cat"].dtype.itemsize
    tile_b = _pick_tile_b(B, patches, fp, dp, 2 * w_bytes, vmem_limit,
                          target_tile_rows)
    b_pad = _round_up(B, tile_b)
    grid = (b_pad // tile_b,)

    x3 = jnp.pad(xp, ((0, b_pad - B), (0, 0), (0, fp - patch_dim)))

    kernel = functools.partial(_embeddings_kernel, patch_dim, dim, tile_b, patches)

    def _run(single_buffer_consts):
        const_kwargs = {}
        if single_buffer_consts:
            # Constant-index operands: no point double-buffering them.
            const_kwargs = dict(pipeline_mode=pl.Buffered(1))
        in_specs = [
            pl.BlockSpec((tile_b, patches, fp), lambda i: (i, 0, 0)),     # tokens
            pl.BlockSpec((1, fp), lambda i: (0, 0), **const_kwargs),      # ln1 w
            pl.BlockSpec((1, fp), lambda i: (0, 0), **const_kwargs),      # ln1 b
            pl.BlockSpec(((NUM_BASES + 1) * fp, dp), lambda i: (0, 0),
                         **const_kwargs),                                 # fused W
            pl.BlockSpec((1, dp), lambda i: (0, 0), **const_kwargs),      # ln2 w
            pl.BlockSpec((1, dp), lambda i: (0, 0), **const_kwargs),      # ln2 b
            pl.BlockSpec((patches, dp), lambda i: (0, 0), **const_kwargs),  # pos
        ]
        return pl.pallas_call(
            kernel,
            out_shape=jax.ShapeDtypeStruct((b_pad, patches, dp), out_dtype),
            grid_spec=pl.GridSpec(
                grid=grid,
                in_specs=in_specs,
                out_specs=pl.BlockSpec((tile_b, patches, dp),
                                       lambda i: (i, 0, 0)),
            ),
            compiler_params=pltpu.CompilerParams(
                dimension_semantics=("parallel",),
                vmem_limit_bytes=int(vmem_limit)),
        )(x3, prep["ln1w"], prep["ln1b"], prep["w_cat"],
          prep["ln2w"], prep["ln2b"], prep["pos"])

    try:
        out = _run(True)
    except Exception:
        # pl.Buffered(1) not supported on this JAX version -> default buffering.
        out = _run(False)

    return out[:B, :, :dim]


# ------------------- pure-JAX reference (matches PyTorch) -------------------
def _layernorm_ref(x, w, b):
    mu = jnp.mean(x, axis=-1, keepdims=True)
    var = jnp.mean((x - mu) ** 2, axis=-1, keepdims=True)
    return (x - mu) * jax.lax.rsqrt(var + LN_EPS) * w + b


def _b_spline_bases_ref(xn):
    """Original Cox-de-Boor recursion (independent check of the kernel math)."""
    k0 = GRID_KNOTS
    bases = [((xn >= k0[j]) & (xn < k0[j + 1])).astype(jnp.float32)
             for j in range(len(k0) - 1)]
    for k in range(1, SPLINE_ORDER + 1):
        new_bases = []
        for j in range(len(bases) - 1):
            left = (xn - k0[j]) / (k0[j + k] - k0[j]) * bases[j]
            right = (k0[j + k + 1] - xn) / (k0[j + k + 1] - k0[j + 1]) * bases[j + 1]
            new_bases.append(left + right)
        bases = new_bases
    return bases


def embeddings_reference(x_img, params, *, patch_size, dim):
    B, C, H, W = x_img.shape
    p = patch_size
    hp, wp = H // p, W // p
    patches = hp * wp
    patch_dim = C * p * p
    xp = (x_img.reshape(B, C, hp, p, wp, p)
               .transpose(0, 2, 4, 1, 3, 5)
               .reshape(B * patches, patch_dim)).astype(jnp.float32)

    xn = _layernorm_ref(xp, params["ln1_w"], params["ln1_b"])
    base = (xn * jax.nn.sigmoid(xn)) @ params["base_weight"].T
    bases = jnp.stack(_b_spline_bases_ref(xn), axis=-1)                   # (N, in, K)
    sw = params["spline_weight"] * params["spline_scaler"][..., None]     # (dim, in, K)
    spline = jnp.einsum("nik,oik->no", bases, sw)
    y = _layernorm_ref(base + spline, params["ln2_w"], params["ln2_b"])
    return y.reshape(B, patches, dim) + params["pos_emb"]


def init_params(key, patch_dim, dim, patches):
    ks = jax.random.split(key, 4)
    bound = 1.0 / jnp.sqrt(patch_dim)
    return {
        "ln1_w": jnp.ones((patch_dim,), jnp.float32),
        "ln1_b": jnp.zeros((patch_dim,), jnp.float32),
        "base_weight": jax.random.uniform(ks[0], (dim, patch_dim), jnp.float32,
                                          -bound, bound),
        "spline_weight": 0.1 * jax.random.normal(ks[1], (dim, patch_dim, NUM_BASES),
                                                 jnp.float32),
        "spline_scaler": jax.random.uniform(ks[2], (dim, patch_dim), jnp.float32,
                                            -bound, bound),
        "ln2_w": jnp.ones((dim,), jnp.float32),
        "ln2_b": jnp.zeros((dim,), jnp.float32),
        "pos_emb": jax.random.normal(ks[3], (1, patches, dim), jnp.float32),
    }


if __name__ == "__main__":
    # Small shapes consistent with the module: B=2, C=3, img_size=16, patch=4, dim=32
    B, C, img_size_, patch_size_, dim_ = 2, 3, 16, 4, 32
    patches = (img_size_ // patch_size_) ** 2        # 16
    patch_dim = patch_size_ ** 2 * C                 # 48

    key = jax.random.PRNGKey(0)
    k_x, k_p = jax.random.split(key)
    x = jax.random.normal(k_x, (B, C, img_size_, img_size_), jnp.float32)
    params = init_params(k_p, patch_dim, dim_, patches)

    ref = jax.block_until_ready(
        embeddings_reference(x, params, patch_size=patch_size_, dim=dim_))

    # Default bf16-MXU path, with weights fused/padded once via prepare_params.
    prepared = prepare_params(params, patch_dim=patch_dim, dim=dim_,
                              weight_dtype=jnp.bfloat16)
    out = jax.block_until_ready(
        embeddings_forward(x, prepared, patch_size=patch_size_, dim=dim_))
    assert out.shape == (B, patches, dim_)
    err_bf16 = float(jnp.max(jnp.abs(out.astype(jnp.float32) - ref)))
    assert err_bf16 < 5e-2, f"bf16 path mismatch vs JAX reference: {err_bf16}"

    # f32 weight path: tight check of the kernel math itself.
    out_f32 = jax.block_until_ready(
        embeddings_forward(x, params, patch_size=patch_size_, dim=dim_,
                           weight_dtype=jnp.float32))
    err_f32 = float(jnp.max(jnp.abs(out_f32 - ref)))
    assert err_f32 < 2e-2, f"f32 path mismatch vs JAX reference: {err_f32}"

    print("KERNEL_OK")
</pallas_src>

<mosaic_0001>
module attributes {stable_mosaic.version = 11 : i64} {
  func.func @_embeddings_kernel(%arg0: i32, %arg1: memref<1x16x128xf32, #tpu.memory_space<vmem>>, %arg2: memref<1x128xf32, #tpu.memory_space<vmem>>, %arg3: memref<1x128xf32, #tpu.memory_space<vmem>>, %arg4: memref<1152x128xbf16, #tpu.memory_space<vmem>>, %arg5: memref<1x128xf32, #tpu.memory_space<vmem>>, %arg6: memref<1x128xf32, #tpu.memory_space<vmem>>, %arg7: memref<16x128xf32, #tpu.memory_space<vmem>>, %arg8: memref<1x16x128xf32, #tpu.memory_space<vmem>>) attributes {dimension_semantics = [#tpu.dimension_semantics<parallel>], iteration_bounds = array<i64: 2>, scalar_prefetch = 0 : i64, scratch_operands = 0 : i64, tpu.core_type = #tpu.core_type<tc>, window_params = [{transform_indices = @transform_0, window_bounds = array<i64: 1, 16, 128>}, {pipeline_mode = #tpu.pipeline_mode<synchronous>, transform_indices = @transform_1, window_bounds = array<i64: 1, 128>}, {pipeline_mode = #tpu.pipeline_mode<synchronous>, transform_indices = @transform_2, window_bounds = array<i64: 1, 128>}, {pipeline_mode = #tpu.pipeline_mode<synchronous>, transform_indices = @transform_3, window_bounds = array<i64: 1152, 128>}, {pipeline_mode = #tpu.pipeline_mode<synchronous>, transform_indices = @transform_4, window_bounds = array<i64: 1, 128>}, {pipeline_mode = #tpu.pipeline_mode<synchronous>, transform_indices = @transform_5, window_bounds = array<i64: 1, 128>}, {pipeline_mode = #tpu.pipeline_mode<synchronous>, transform_indices = @transform_6, window_bounds = array<i64: 16, 128>}, {transform_indices = @transform_7, window_bounds = array<i64: 1, 16, 128>}]} {
    %c0 = arith.constant 0 : index
    %c0_0 = arith.constant 0 : index
    %c0_1 = arith.constant 0 : index
    %0 = vector.load %arg1[%c0, %c0_0, %c0_1] : memref<1x16x128xf32, #tpu.memory_space<vmem>>, vector<1x16x128xf32>
    %1 = vector.shape_cast %0 : vector<1x16x128xf32> to vector<16x128xf32>
    %2 = tpu.iota {dimensions = array<i32: 1>} : vector<1x128xi32>
    %c48_i32 = arith.constant 48 : i32
    %3 = vector.broadcast %c48_i32 : i32 to vector<1x128xi32>
    %4 = arith.cmpi slt, %2, %3 : vector<1x128xi32>
    %cst = arith.constant dense<0.000000e+00> : vector<16xf32>
    %5 = vector.multi_reduction <add>, %1, %cst [1] : vector<16x128xf32> to vector<16xf32>
    %6 = vector.shape_cast %5 : vector<16xf32> to vector<16x1xf32>
    %cst_2 = arith.constant 0.020833334 : f32
    %7 = vector.broadcast %cst_2 : f32 to vector<16x1xf32>
    %8 = arith.mulf %6, %7 : vector<16x1xf32>
    %9 = vector.broadcast %8 : vector<16x1xf32> to vector<16x128xf32>
    %10 = arith.subf %1, %9 : vector<16x128xf32>
    %cst_3 = arith.constant 0.000000e+00 : f32
    %11 = vector.shape_cast %4 : vector<1x128xi1> to vector<1x128xi1>
    %12 = vector.broadcast %11 : vector<1x128xi1> to vector<16x128xi1>
    %13 = vector.broadcast %cst_3 : f32 to vector<16x128xf32>
    %14 = arith.select %12, %10, %13 : vector<16x128xi1>, vector<16x128xf32>
    %15 = arith.mulf %14, %14 : vector<16x128xf32>
    %cst_4 = arith.constant dense<0.000000e+00> : vector<16xf32>
    %16 = vector.multi_reduction <add>, %15, %cst_4 [1] : vector<16x128xf32> to vector<16xf32>
    %17 = vector.shape_cast %16 : vector<16xf32> to vector<16x1xf32>
    %cst_5 = arith.constant 0.020833334 : f32
    %18 = vector.broadcast %cst_5 : f32 to vector<16x1xf32>
    %19 = arith.mulf %17, %18 : vector<16x1xf32>
    %cst_6 = arith.constant 9.99999974E-6 : f32
    %20 = vector.broadcast %cst_6 : f32 to vector<16x1xf32>
    %21 = arith.addf %19, %20 : vector<16x1xf32>
    %22 = math.rsqrt %21 : vector<16x1xf32>
    %23 = vector.broadcast %22 : vector<16x1xf32> to vector<16x128xf32>
    %24 = arith.mulf %14, %23 : vector<16x128xf32>
    %c0_7 = arith.constant 0 : index
    %c0_8 = arith.constant 0 : index
    %25 = vector.load %arg2[%c0_7, %c0_8] : memref<1x128xf32, #tpu.memory_space<vmem>>, vector<1x128xf32>
    %26 = vector.broadcast %25 : vector<1x128xf32> to vector<16x128xf32>
    %27 = arith.mulf %24, %26 : vector<16x128xf32>
    %c0_9 = arith.constant 0 : index
    %c0_10 = arith.constant 0 : index
    %28 = vector.load %arg3[%c0_9, %c0_10] : memref<1x128xf32, #tpu.memory_space<vmem>>, vector<1x128xf32>
    %29 = vector.broadcast %28 : vector<1x128xf32> to vector<16x128xf32>
    %30 = arith.addf %27, %29 : vector<16x128xf32>
    %31 = arith.negf %30 : vector<16x128xf32>
    %32 = math.exp %31 : vector<16x128xf32>
    %cst_11 = arith.constant 1.000000e+00 : f32
    %33 = vector.broadcast %cst_11 : f32 to vector<16x128xf32>
    %34 = arith.addf %33, %32 : vector<16x128xf32>
    %35 = arith.divf %33, %34 : vector<16x128xf32>
    %36 = arith.mulf %30, %35 : vector<16x128xf32>
    %37 = arith.truncf %36 : vector<16x128xf32> to vector<16x128xbf16>
    %c0_12 = arith.constant 0 : index
    %c0_13 = arith.constant 0 : index
    %38 = vector.load %arg4[%c0_12, %c0_13] : memref<1152x128xbf16, #tpu.memory_space<vmem>>, vector<128x128xbf16>
    %cst_14 = arith.constant dense<0.000000e+00> : vector<16x128xf32>
    %39 = tpu.matmul %37, %38, %cst_14 {dimension_numbers = #tpu.dot_dimension_numbers<[1], [0], [0], [1], [0, 0, 1, 1], [], []>} : vector<16x128xbf16>, vector<128x128xbf16>, vector<16x128xf32> -> vector<16x128xf32>
    %cst_15 = arith.constant -2.200000e+00 : f32
    %40 = vector.broadcast %cst_15 : f32 to vector<16x128xf32>
    %41 = arith.subf %30, %40 : vector<16x128xf32>
    %cst_16 = arith.constant 2.500000e+00 : f32
    %42 = vector.broadcast %cst_16 : f32 to vector<16x128xf32>
    %43 = arith.mulf %41, %42 : vector<16x128xf32>
    %44 = math.floor %43 : vector<16x128xf32>
    %45 = arith.subf %43, %44 : vector<16x128xf32>
    %46 = arith.mulf %45, %45 : vector<16x128xf32>
    %47 = arith.mulf %46, %45 : vector<16x128xf32>
    %cst_17 = arith.constant 1.000000e+00 : f32
    %48 = vector.broadcast %cst_17 : f32 to vector<16x128xf32>
    %49 = arith.subf %48, %45 : vector<16x128xf32>
    %cst_18 = arith.constant 0.166666672 : f32
    %50 = vector.broadcast %cst_18 : f32 to vector<16x128xf32>
    %51 = arith.mulf %47, %50 : vector<16x128xf32>
    %cst_19 = arith.constant -3.000000e+00 : f32
    %52 = vector.broadcast %cst_19 : f32 to vector<16x128xf32>
    %53 = arith.mulf %52, %47 : vector<16x128xf32>
    %cst_20 = arith.constant 3.000000e+00 : f32
    %54 = vector.broadcast %cst_20 : f32 to vector<16x128xf32>
    %55 = arith.mulf %54, %46 : vector<16x128xf32>
    %56 = arith.addf %53, %55 : vector<16x128xf32>
    %cst_21 = arith.constant 3.000000e+00 : f32
    %57 = vector.broadcast %cst_21 : f32 to vector<16x128xf32>
    %58 = arith.mulf %57, %45 : vector<16x128xf32>
    %59 = arith.addf %56, %58 : vector<16x128xf32>
    %cst_22 = arith.constant 1.000000e+00 : f32
    %60 = vector.broadcast %cst_22 : f32 to vector<16x128xf32>
    %61 = arith.addf %59, %60 : vector<16x128xf32>
    %cst_23 = arith.constant 0.166666672 : f32
    %62 = vector.broadcast %cst_23 : f32 to vector<16x128xf32>
    %63 = arith.mulf %61, %62 : vector<16x128xf32>
    %cst_24 = arith.constant 3.000000e+00 : f32
    %64 = vector.broadcast %cst_24 : f32 to vector<16x128xf32>
    %65 = arith.mulf %64, %47 : vector<16x128xf32>
    %cst_25 = arith.constant 6.000000e+00 : f32
    %66 = vector.broadcast %cst_25 : f32 to vector<16x128xf32>
    %67 = arith.mulf %66, %46 : vector<16x128xf32>
    %68 = arith.subf %65, %67 : vector<16x128xf32>
    %cst_26 = arith.constant 4.000000e+00 : f32
    %69 = vector.broadcast %cst_26 : f32 to vector<16x128xf32>
    %70 = arith.addf %68, %69 : vector<16x128xf32>
    %cst_27 = arith.constant 0.166666672 : f32
    %71 = vector.broadcast %cst_27 : f32 to vector<16x128xf32>
    %72 = arith.mulf %70, %71 : vector<16x128xf32>
    %73 = arith.mulf %49, %49 : vector<16x128xf32>
    %74 = arith.mulf %73, %49 : vector<16x128xf32>
    %cst_28 = arith.constant 0.166666672 : f32
    %75 = vector.broadcast %cst_28 : f32 to vector<16x128xf32>
    %76 = arith.mulf %74, %75 : vector<16x128xf32>
    %cst_29 = arith.constant 0.000000e+00 : f32
    %77 = vector.broadcast %cst_29 : f32 to vector<16x128xf32>
    %cst_30 = arith.constant 0.000000e+00 : f32
    %78 = vector.broadcast %cst_30 : f32 to vector<16x128xf32>
    %79 = arith.cmpf oeq, %44, %78 : vector<16x128xf32>
    %cst_31 = arith.constant 1.000000e+00 : f32
    %80 = vector.broadcast %cst_31 : f32 to vector<16x128xf32>
    %81 = arith.cmpf oeq, %44, %80 : vector<16x128xf32>
    %cst_32 = arith.constant 2.000000e+00 : f32
    %82 = vector.broadcast %cst_32 : f32 to vector<16x128xf32>
    %83 = arith.cmpf oeq, %44, %82 : vector<16x128xf32>
    %cst_33 = arith.constant 3.000000e+00 : f32
    %84 = vector.broadcast %cst_33 : f32 to vector<16x128xf32>
    %85 = arith.cmpf oeq, %44, %84 : vector<16x128xf32>
    %86 = arith.select %85, %76, %77 : vector<16x128xi1>, vector<16x128xf32>
    %87 = arith.select %83, %72, %86 : vector<16x128xi1>, vector<16x128xf32>
    %88 = arith.select %81, %63, %87 : vector<16x128xi1>, vector<16x128xf32>
    %89 = arith.select %79, %51, %88 : vector<16x128xi1>, vector<16x128xf32>
    %90 = arith.truncf %89 : vector<16x128xf32> to vector<16x128xbf16>
    %c128 = arith.constant 128 : index
    %c0_34 = arith.constant 0 : index
    %91 = vector.load %arg4[%c128, %c0_34] : memref<1152x128xbf16, #tpu.memory_space<vmem>>, vector<128x128xbf16>
    %cst_35 = arith.constant dense<0.000000e+00> : vector<16x128xf32>
    %92 = tpu.matmul %90, %91, %cst_35 {dimension_numbers = #tpu.dot_dimension_numbers<[1], [0], [0], [1], [0, 0, 1, 1], [], []>} : vector<16x128xbf16>, vector<128x128xbf16>, vector<16x128xf32> -> vector<16x128xf32>
    %93 = arith.addf %39, %92 : vector<16x128xf32>
    %cst_36 = arith.constant 1.000000e+00 : f32
    %94 = vector.broadcast %cst_36 : f32 to vector<16x128xf32>
    %95 = arith.cmpf oeq, %44, %94 : vector<16x128xf32>
    %cst_37 = arith.constant 2.000000e+00 : f32
    %96 = vector.broadcast %cst_37 : f32 to vector<16x128xf32>
    %97 = arith.cmpf oeq, %44, %96 : vector<16x128xf32>
    %cst_38 = arith.constant 3.000000e+00 : f32
    %98 = vector.broadcast %cst_38 : f32 to vector<16x128xf32>
    %99 = arith.cmpf oeq, %44, %98 : vector<16x128xf32>
    %cst_39 = arith.constant 4.000000e+00 : f32
    %100 = vector.broadcast %cst_39 : f32 to vector<16x128xf32>
    %101 = arith.cmpf oeq, %44, %100 : vector<16x128xf32>
    %102 = arith.select %101, %76, %77 : vector<16x128xi1>, vector<16x128xf32>
    %103 = arith.select %99, %72, %102 : vector<16x128xi1>, vector<16x128xf32>
    %104 = arith.select %97, %63, %103 : vector<16x128xi1>, vector<16x128xf32>
    %105 = arith.select %95, %51, %104 : vector<16x128xi1>, vector<16x128xf32>
    %106 = arith.truncf %105 : vector<16x128xf32> to vector<16x128xbf16>
    %c256 = arith.constant 256 : index
    %c0_40 = arith.constant 0 : index
    %107 = vector.load %arg4[%c256, %c0_40] : memref<1152x128xbf16, #tpu.memory_space<vmem>>, vector<128x128xbf16>
    %cst_41 = arith.constant dense<0.000000e+00> : vector<16x128xf32>
    %108 = tpu.matmul %106, %107, %cst_41 {dimension_numbers = #tpu.dot_dimension_numbers<[1], [0], [0], [1], [0, 0, 1, 1], [], []>} : vector<16x128xbf16>, vector<128x128xbf16>, vector<16x128xf32> -> vector<16x128xf32>
    %109 = arith.addf %93, %108 : vector<16x128xf32>
    %cst_42 = arith.constant 2.000000e+00 : f32
    %110 = vector.broadcast %cst_42 : f32 to vector<16x128xf32>
    %111 = arith.cmpf oeq, %44, %110 : vector<16x128xf32>
    %cst_43 = arith.constant 3.000000e+00 : f32
    %112 = vector.broadcast %cst_43 : f32 to vector<16x128xf32>
    %113 = arith.cmpf oeq, %44, %112 : vector<16x128xf32>
    %cst_44 = arith.constant 4.000000e+00 : f32
    %114 = vector.broadcast %cst_44 : f32 to vector<16x128xf32>
    %115 = arith.cmpf oeq, %44, %114 : vector<16x128xf32>
    %cst_45 = arith.constant 5.000000e+00 : f32
    %116 = vector.broadcast %cst_45 : f32 to vector<16x128xf32>
    %117 = arith.cmpf oeq, %44, %116 : vector<16x128xf32>
    %118 = arith.select %117, %76, %77 : vector<16x128xi1>, vector<16x128xf32>
    %119 = arith.select %115, %72, %118 : vector<16x128xi1>, vector<16x128xf32>
    %120 = arith.select %113, %63, %119 : vector<16x128xi1>, vector<16x128xf32>
    %121 = arith.select %111, %51, %120 : vector<16x128xi1>, vector<16x128xf32>
    %122 = arith.truncf %121 : vector<16x128xf32> to vector<16x128xbf16>
    %c384 = arith.constant 384 : index
    %c0_46 = arith.constant 0 : index
    %123 = vector.load %arg4[%c384, %c0_46] : memref<1152x128xbf16, #tpu.memory_space<vmem>>, vector<128x128xbf16>
    %cst_47 = arith.constant dense<0.000000e+00> : vector<16x128xf32>
    %124 = tpu.matmul %122, %123, %cst_47 {dimension_numbers = #tpu.dot_dimension_numbers<[1], [0], [0], [1], [0, 0, 1, 1], [], []>} : vector<16x128xbf16>, vector<128x128xbf16>, vector<16x128xf32> -> vector<16x128xf32>
    %125 = arith.addf %109, %124 : vector<16x128xf32>
    %cst_48 = arith.constant 3.000000e+00 : f32
    %126 = vector.broadcast %cst_48 : f32 to vector<16x128xf32>
    %127 = arith.cmpf oeq, %44, %126 : vector<16x128xf32>
    %cst_49 = arith.constant 4.000000e+00 : f32
    %128 = vector.broadcast %cst_49 : f32 to vector<16x128xf32>
    %129 = arith.cmpf oeq, %44, %128 : vector<16x128xf32>
    %cst_50 = arith.constant 5.000000e+00 : f32
    %130 = vector.broadcast %cst_50 : f32 to vector<16x128xf32>
    %131 = arith.cmpf oeq, %44, %130 : vector<16x128xf32>
    %cst_51 = arith.constant 6.000000e+00 : f32
    %132 = vector.broadcast %cst_51 : f32 to vector<16x128xf32>
    %133 = arith.cmpf oeq, %44, %132 : vector<16x128xf32>
    %134 = arith.select %133, %76, %77 : vector<16x128xi1>, vector<16x128xf32>
    %135 = arith.select %131, %72, %134 : vector<16x128xi1>, vector<16x128xf32>
    %136 = arith.select %129, %63, %135 : vector<16x128xi1>, vector<16x128xf32>
    %137 = arith.select %127, %51, %136 : vector<16x128xi1>, vector<16x128xf32>
    %138 = arith.truncf %137 : vector<16x128xf32> to vector<16x128xbf16>
    %c512 = arith.constant 512 : index
    %c0_52 = arith.constant 0 : index
    %139 = vector.load %arg4[%c512, %c0_52] : memref<1152x128xbf16, #tpu.memory_space<vmem>>, vector<128x128xbf16>
    %cst_53 = arith.constant dense<0.000000e+00> : vector<16x128xf32>
    %140 = tpu.matmul %138, %139, %cst_53 {dimension_numbers = #tpu.dot_dimension_numbers<[1], [0], [0], [1], [0, 0, 1, 1], [], []>} : vector<16x128xbf16>, vector<128x128xbf16>, vector<16x128xf32> -> vector<16x128xf32>
    %141 = arith.addf %125, %140 : vector<16x128xf32>
    %cst_54 = arith.constant 4.000000e+00 : f32
    %142 = vector.broadcast %cst_54 : f32 to vector<16x128xf32>
    %143 = arith.cmpf oeq, %44, %142 : vector<16x128xf32>
    %cst_55 = arith.constant 5.000000e+00 : f32
    %144 = vector.broadcast %cst_55 : f32 to vector<16x128xf32>
    %145 = arith.cmpf oeq, %44, %144 : vector<16x128xf32>
    %cst_56 = arith.constant 6.000000e+00 : f32
    %146 = vector.broadcast %cst_56 : f32 to vector<16x128xf32>
    %147 = arith.cmpf oeq, %44, %146 : vector<16x128xf32>
    %cst_57 = arith.constant 7.000000e+00 : f32
    %148 = vector.broadcast %cst_57 : f32 to vector<16x128xf32>
    %149 = arith.cmpf oeq, %44, %148 : vector<16x128xf32>
    %150 = arith.select %149, %76, %77 : vector<16x128xi1>, vector<16x128xf32>
    %151 = arith.select %147, %72, %150 : vector<16x128xi1>, vector<16x128xf32>
    %152 = arith.select %145, %63, %151 : vector<16x128xi1>, vector<16x128xf32>
    %153 = arith.select %143, %51, %152 : vector<16x128xi1>, vector<16x128xf32>
    %154 = arith.truncf %153 : vector<16x128xf32> to vector<16x128xbf16>
    %c640 = arith.constant 640 : index
    %c0_58 = arith.constant 0 : index
    %155 = vector.load %arg4[%c640, %c0_58] : memref<1152x128xbf16, #tpu.memory_space<vmem>>, vector<128x128xbf16>
    %cst_59 = arith.constant dense<0.000000e+00> : vector<16x128xf32>
    %156 = tpu.matmul %154, %155, %cst_59 {dimension_numbers = #tpu.dot_dimension_numbers<[1], [0], [0], [1], [0, 0, 1, 1], [], []>} : vector<16x128xbf16>, vector<128x128xbf16>, vector<16x128xf32> -> vector<16x128xf32>
    %157 = arith.addf %141, %156 : vector<16x128xf32>
    %cst_60 = arith.constant 5.000000e+00 : f32
    %158 = vector.broadcast %cst_60 : f32 to vector<16x128xf32>
    %159 = arith.cmpf oeq, %44, %158 : vector<16x128xf32>
    %cst_61 = arith.constant 6.000000e+00 : f32
    %160 = vector.broadcast %cst_61 : f32 to vector<16x128xf32>
    %161 = arith.cmpf oeq, %44, %160 : vector<16x128xf32>
    %cst_62 = arith.constant 7.000000e+00 : f32
    %162 = vector.broadcast %cst_62 : f32 to vector<16x128xf32>
    %163 = arith.cmpf oeq, %44, %162 : vector<16x128xf32>
    %cst_63 = arith.constant 8.000000e+00 : f32
    %164 = vector.broadcast %cst_63 : f32 to vector<16x128xf32>
    %165 = arith.cmpf oeq, %44, %164 : vector<16x128xf32>
    %166 = arith.select %165, %76, %77 : vector<16x128xi1>, vector<16x128xf32>
    %167 = arith.select %163, %72, %166 : vector<16x128xi1>, vector<16x128xf32>
    %168 = arith.select %161, %63, %167 : vector<16x128xi1>, vector<16x128xf32>
    %169 = arith.select %159, %51, %168 : vector<16x128xi1>, vector<16x128xf32>
    %170 = arith.truncf %169 : vector<16x128xf32> to vector<16x128xbf16>
    %c768 = arith.constant 768 : index
    %c0_64 = arith.constant 0 : index
    %171 = vector.load %arg4[%c768, %c0_64] : memref<1152x128xbf16, #tpu.memory_space<vmem>>, vector<128x128xbf16>
    %cst_65 = arith.constant dense<0.000000e+00> : vector<16x128xf32>
    %172 = tpu.matmul %170, %171, %cst_65 {dimension_numbers = #tpu.dot_dimension_numbers<[1], [0], [0], [1], [0, 0, 1, 1], [], []>} : vector<16x128xbf16>, vector<128x128xbf16>, vector<16x128xf32> -> vector<16x128xf32>
    %173 = arith.addf %157, %172 : vector<16x128xf32>
    %cst_66 = arith.constant 6.000000e+00 : f32
    %174 = vector.broadcast %cst_66 : f32 to vector<16x128xf32>
    %175 = arith.cmpf oeq, %44, %174 : vector<16x128xf32>
    %cst_67 = arith.constant 7.000000e+00 : f32
    %176 = vector.broadcast %cst_67 : f32 to vector<16x128xf32>
    %177 = arith.cmpf oeq, %44, %176 : vector<16x128xf32>
    %cst_68 = arith.constant 8.000000e+00 : f32
    %178 = vector.broadcast %cst_68 : f32 to vector<16x128xf32>
    %179 = arith.cmpf oeq, %44, %178 : vector<16x128xf32>
    %cst_69 = arith.constant 9.000000e+00 : f32
    %180 = vector.broadcast %cst_69 : f32 to vector<16x128xf32>
    %181 = arith.cmpf oeq, %44, %180 : vector<16x128xf32>
    %182 = arith.select %181, %76, %77 : vector<16x128xi1>, vector<16x128xf32>
    %183 = arith.select %179, %72, %182 : vector<16x128xi1>, vector<16x128xf32>
    %184 = arith.select %177, %63, %183 : vector<16x128xi1>, vector<16x128xf32>
    %185 = arith.select %175, %51, %184 : vector<16x128xi1>, vector<16x128xf32>
    %186 = arith.truncf %185 : vector<16x128xf32> to vector<16x128xbf16>
    %c896 = arith.constant 896 : index
    %c0_70 = arith.constant 0 : index
    %187 = vector.load %arg4[%c896, %c0_70] : memref<1152x128xbf16, #tpu.memory_space<vmem>>, vector<128x128xbf16>
    %cst_71 = arith.constant dense<0.000000e+00> : vector<16x128xf32>
    %188 = tpu.matmul %186, %187, %cst_71 {dimension_numbers = #tpu.dot_dimension_numbers<[1], [0], [0], [1], [0, 0, 1, 1], [], []>} : vector<16x128xbf16>, vector<128x128xbf16>, vector<16x128xf32> -> vector<16x128xf32>
    %189 = arith.addf %173, %188 : vector<16x128xf32>
    %cst_72 = arith.constant 7.000000e+00 : f32
    %190 = vector.broadcast %cst_72 : f32 to vector<16x128xf32>
    %191 = arith.cmpf oeq, %44, %190 : vector<16x128xf32>
    %cst_73 = arith.constant 8.000000e+00 : f32
    %192 = vector.broadcast %cst_73 : f32 to vector<16x128xf32>
    %193 = arith.cmpf oeq, %44, %192 : vector<16x128xf32>
    %cst_74 = arith.constant 9.000000e+00 : f32
    %194 = vector.broadcast %cst_74 : f32 to vector<16x128xf32>
    %195 = arith.cmpf oeq, %44, %194 : vector<16x128xf32>
    %cst_75 = arith.constant 1.000000e+01 : f32
    %196 = vector.broadcast %cst_75 : f32 to vector<16x128xf32>
    %197 = arith.cmpf oeq, %44, %196 : vector<16x128xf32>
    %198 = arith.select %197, %76, %77 : vector<16x128xi1>, vector<16x128xf32>
    %199 = arith.select %195, %72, %198 : vector<16x128xi1>, vector<16x128xf32>
    %200 = arith.select %193, %63, %199 : vector<16x128xi1>, vector<16x128xf32>
    %201 = arith.select %191, %51, %200 : vector<16x128xi1>, vector<16x128xf32>
    %202 = arith.truncf %201 : vector<16x128xf32> to vector<16x128xbf16>
    %c1024 = arith.constant 1024 : index
    %c0_76 = arith.constant 0 : index
    %203 = vector.load %arg4[%c1024, %c0_76] : memref<1152x128xbf16, #tpu.memory_space<vmem>>, vector<128x128xbf16>
    %cst_77 = arith.constant dense<0.000000e+00> : vector<16x128xf32>
    %204 = tpu.matmul %202, %203, %cst_77 {dimension_numbers = #tpu.dot_dimension_numbers<[1], [0], [0], [1], [0, 0, 1, 1], [], []>} : vector<16x128xbf16>, vector<128x128xbf16>, vector<16x128xf32> -> vector<16x128xf32>
    %205 = arith.addf %189, %204 : vector<16x128xf32>
    %206 = tpu.iota {dimensions = array<i32: 1>} : vector<1x128xi32>
    %c32_i32 = arith.constant 32 : i32
    %207 = vector.broadcast %c32_i32 : i32 to vector<1x128xi32>
    %208 = arith.cmpi slt, %206, %207 : vector<1x128xi32>
    %cst_78 = arith.constant dense<0.000000e+00> : vector<16xf32>
    %209 = vector.multi_reduction <add>, %205, %cst_78 [1] : vector<16x128xf32> to vector<16xf32>
    %210 = vector.shape_cast %209 : vector<16xf32> to vector<16x1xf32>
    %cst_79 = arith.constant 3.125000e-02 : f32
    %211 = vector.broadcast %cst_79 : f32 to vector<16x1xf32>
    %212 = arith.mulf %210, %211 : vector<16x1xf32>
    %213 = vector.broadcast %212 : vector<16x1xf32> to vector<16x128xf32>
    %214 = arith.subf %205, %213 : vector<16x128xf32>
    %cst_80 = arith.constant 0.000000e+00 : f32
    %215 = vector.shape_cast %208 : vector<1x128xi1> to vector<1x128xi1>
    %216 = vector.broadcast %215 : vector<1x128xi1> to vector<16x128xi1>
    %217 = vector.broadcast %cst_80 : f32 to vector<16x128xf32>
    %218 = arith.select %216, %214, %217 : vector<16x128xi1>, vector<16x128xf32>
    %219 = arith.mulf %218, %218 : vector<16x128xf32>
    %cst_81 = arith.constant dense<0.000000e+00> : vector<16xf32>
    %220 = vector.multi_reduction <add>, %219, %cst_81 [1] : vector<16x128xf32> to vector<16xf32>
    %221 = vector.shape_cast %220 : vector<16xf32> to vector<16x1xf32>
    %cst_82 = arith.constant 3.125000e-02 : f32
    %222 = vector.broadcast %cst_82 : f32 to vector<16x1xf32>
    %223 = arith.mulf %221, %222 : vector<16x1xf32>
    %cst_83 = arith.constant 9.99999974E-6 : f32
    %224 = vector.broadcast %cst_83 : f32 to vector<16x1xf32>
    %225 = arith.addf %223, %224 : vector<16x1xf32>
    %226 = math.rsqrt %225 : vector<16x1xf32>
    %227 = vector.broadcast %226 : vector<16x1xf32> to vector<16x128xf32>
    %228 = arith.mulf %218, %227 : vector<16x128xf32>
    %c0_84 = arith.constant 0 : index
    %c0_85 = arith.constant 0 : index
    %229 = vector.load %arg5[%c0_84, %c0_85] : memref<1x128xf32, #tpu.memory_space<vmem>>, vector<1x128xf32>
    %230 = vector.broadcast %229 : vector<1x128xf32> to vector<16x128xf32>
    %231 = arith.mulf %228, %230 : vector<16x128xf32>
    %c0_86 = arith.constant 0 : index
    %c0_87 = arith.constant 0 : index
    %232 = vector.load %arg6[%c0_86, %c0_87] : memref<1x128xf32, #tpu.memory_space<vmem>>, vector<1x128xf32>
    %233 = vector.broadcast %232 : vector<1x128xf32> to vector<16x128xf32>
    %234 = arith.addf %231, %233 : vector<16x128xf32>
    %235 = vector.shape_cast %234 : vector<16x128xf32> to vector<1x16x128xf32>
    %c0_88 = arith.constant 0 : index
    %c0_89 = arith.constant 0 : index
    %236 = vector.load %arg7[%c0_88, %c0_89] : memref<16x128xf32, #tpu.memory_space<vmem>>, vector<16x128xf32>
    %237 = vector.shape_cast %236 : vector<16x128xf32> to vector<1x16x128xf32>
    %238 = arith.addf %235, %237 : vector<1x16x128xf32>
    %c0_90 = arith.constant 0 : index
    %c0_91 = arith.constant 0 : index
    %c0_92 = arith.constant 0 : index
    %239 = vector.load %arg8[%c0_90, %c0_91, %c0_92] : memref<1x16x128xf32, #tpu.memory_space<vmem>>, vector<1x16x128xf32>
    tpu.vector_store %arg8[%c0_90, %c0_91, %c0_92], %238 {strides = array<i32>} : memref<1x16x128xf32, #tpu.memory_space<vmem>>, vector<1x16x128xf32>,
    return
  }
  func.func @transform_0(%arg0: i32) -> (i32, i32, i32) {
    %c0_i32 = arith.constant 0 : i32
    %c0_i32_0 = arith.constant 0 : i32
    %c0_i32_1 = arith.constant 0 : i32
    return %arg0, %c0_i32, %c0_i32_0 : i32, i32, i32
  }
  func.func @transform_1(%arg0: i32) -> (i32, i32) {
    %c0_i32 = arith.constant 0 : i32
    %c0_i32_0 = arith.constant 0 : i32
    %c0_i32_1 = arith.constant 0 : i32
    return %c0_i32, %c0_i32_0 : i32, i32
  }
  func.func @transform_2(%arg0: i32) -> (i32, i32) {
    %c0_i32 = arith.constant 0 : i32
    %c0_i32_0 = arith.constant 0 : i32
    %c0_i32_1 = arith.constant 0 : i32
    return %c0_i32, %c0_i32_0 : i32, i32
  }
  func.func @transform_3(%arg0: i32) -> (i32, i32) {
    %c0_i32 = arith.constant 0 : i32
    %c0_i32_0 = arith.constant 0 : i32
    %c0_i32_1 = arith.constant 0 : i32
    return %c0_i32, %c0_i32_0 : i32, i32
  }
  func.func @transform_4(%arg0: i32) -> (i32, i32) {
    %c0_i32 = arith.constant 0 : i32
    %c0_i32_0 = arith.constant 0 : i32
    %c0_i32_1 = arith.constant 0 : i32
    return %c0_i32, %c0_i32_0 : i32, i32
  }
  func.func @transform_5(%arg0: i32) -> (i32, i32) {
    %c0_i32 = arith.constant 0 : i32
    %c0_i32_0 = arith.constant 0 : i32
    %c0_i32_1 = arith.constant 0 : i32
    return %c0_i32, %c0_i32_0 : i32, i32
  }
  func.func @transform_6(%arg0: i32) -> (i32, i32) {
    %c0_i32 = arith.constant 0 : i32
    %c0_i32_0 = arith.constant 0 : i32
    %c0_i32_1 = arith.constant 0 : i32
    return %c0_i32, %c0_i32_0 : i32, i32
  }
  func.func @transform_7(%arg0: i32) -> (i32, i32, i32) {
    %c0_i32 = arith.constant 0 : i32
    %c0_i32_0 = arith.constant 0 : i32
    %c0_i32_1 = arith.constant 0 : i32
    return %arg0, %c0_i32, %c0_i32_0 : i32, i32, i32
  }
}

module attributes {stable_mosaic.version = 11 : i64} {
  func.func @_embeddings_kernel(%arg0: i32, %arg1: memref<1x16x128xf32, #tpu.memory_space<vmem>>, %arg2: memref<1x128xf32, #tpu.memory_space<vmem>>, %arg3: memref<1x128xf32, #tpu.memory_space<vmem>>, %arg4: memref<1152x128xbf16, #tpu.memory_space<vmem>>, %arg5: memref<1x128xf32, #tpu.memory_space<vmem>>, %arg6: memref<1x128xf32, #tpu.memory_space<vmem>>, %arg7: memref<16x128xf32, #tpu.memory_space<vmem>>, %arg8: memref<1x16x128xf32, #tpu.memory_space<vmem>>) attributes {dimension_semantics = [#tpu.dimension_semantics<parallel>], iteration_bounds = array<i64: 2>, scalar_prefetch = 0 : i64, scratch_operands = 0 : i64, tpu.core_type = #tpu.core_type<tc>, window_params = [{transform_indices = @transform_0, window_bounds = array<i64: 1, 16, 128>}, {pipeline_mode = #tpu.pipeline_mode<synchronous>, transform_indices = @transform_1, window_bounds = array<i64: 1, 128>}, {pipeline_mode = #tpu.pipeline_mode<synchronous>, transform_indices = @transform_2, window_bounds = array<i64: 1, 128>}, {pipeline_mode = #tpu.pipeline_mode<synchronous>, transform_indices = @transform_3, window_bounds = array<i64: 1152, 128>}, {pipeline_mode = #tpu.pipeline_mode<synchronous>, transform_indices = @transform_4, window_bounds = array<i64: 1, 128>}, {pipeline_mode = #tpu.pipeline_mode<synchronous>, transform_indices = @transform_5, window_bounds = array<i64: 1, 128>}, {pipeline_mode = #tpu.pipeline_mode<synchronous>, transform_indices = @transform_6, window_bounds = array<i64: 16, 128>}, {transform_indices = @transform_7, window_bounds = array<i64: 1, 16, 128>}]} {
    %c0 = arith.constant 0 : index
    %c0_0 = arith.constant 0 : index
    %c0_1 = arith.constant 0 : index
    %0 = vector.load %arg1[%c0, %c0_0, %c0_1] : memref<1x16x128xf32, #tpu.memory_space<vmem>>, vector<1x16x128xf32>
    %1 = vector.shape_cast %0 : vector<1x16x128xf32> to vector<16x128xf32>
    %2 = tpu.iota {dimensions = array<i32: 1>} : vector<1x128xi32>
    %c48_i32 = arith.constant 48 : i32
    %3 = vector.broadcast %c48_i32 : i32 to vector<1x128xi32>
    %4 = arith.cmpi slt, %2, %3 : vector<1x128xi32>
    %cst = arith.constant dense<0.000000e+00> : vector<16xf32>
    %5 = vector.multi_reduction <add>, %1, %cst [1] : vector<16x128xf32> to vector<16xf32>
    %6 = vector.shape_cast %5 : vector<16xf32> to vector<16x1xf32>
    %cst_2 = arith.constant 0.020833334 : f32
    %7 = vector.broadcast %cst_2 : f32 to vector<16x1xf32>
    %8 = arith.mulf %6, %7 : vector<16x1xf32>
    %9 = vector.broadcast %8 : vector<16x1xf32> to vector<16x128xf32>
    %10 = arith.subf %1, %9 : vector<16x128xf32>
    %cst_3 = arith.constant 0.000000e+00 : f32
    %11 = vector.shape_cast %4 : vector<1x128xi1> to vector<1x128xi1>
    %12 = vector.broadcast %11 : vector<1x128xi1> to vector<16x128xi1>
    %13 = vector.broadcast %cst_3 : f32 to vector<16x128xf32>
    %14 = arith.select %12, %10, %13 : vector<16x128xi1>, vector<16x128xf32>
    %15 = arith.mulf %14, %14 : vector<16x128xf32>
    %cst_4 = arith.constant dense<0.000000e+00> : vector<16xf32>
    %16 = vector.multi_reduction <add>, %15, %cst_4 [1] : vector<16x128xf32> to vector<16xf32>
    %17 = vector.shape_cast %16 : vector<16xf32> to vector<16x1xf32>
    %cst_5 = arith.constant 0.020833334 : f32
    %18 = vector.broadcast %cst_5 : f32 to vector<16x1xf32>
    %19 = arith.mulf %17, %18 : vector<16x1xf32>
    %cst_6 = arith.constant 9.99999974E-6 : f32
    %20 = vector.broadcast %cst_6 : f32 to vector<16x1xf32>
    %21 = arith.addf %19, %20 : vector<16x1xf32>
    %22 = math.rsqrt %21 : vector<16x1xf32>
    %23 = vector.broadcast %22 : vector<16x1xf32> to vector<16x128xf32>
    %24 = arith.mulf %14, %23 : vector<16x128xf32>
    %c0_7 = arith.constant 0 : index
    %c0_8 = arith.constant 0 : index
    %25 = vector.load %arg2[%c0_7, %c0_8] : memref<1x128xf32, #tpu.memory_space<vmem>>, vector<1x128xf32>
    %26 = vector.broadcast %25 : vector<1x128xf32> to vector<16x128xf32>
    %27 = arith.mulf %24, %26 : vector<16x128xf32>
    %c0_9 = arith.constant 0 : index
    %c0_10 = arith.constant 0 : index
    %28 = vector.load %arg3[%c0_9, %c0_10] : memref<1x128xf32, #tpu.memory_space<vmem>>, vector<1x128xf32>
    %29 = vector.broadcast %28 : vector<1x128xf32> to vector<16x128xf32>
    %30 = arith.addf %27, %29 : vector<16x128xf32>
    %31 = arith.negf %30 : vector<16x128xf32>
    %32 = math.exp %31 : vector<16x128xf32>
    %cst_11 = arith.constant 1.000000e+00 : f32
    %33 = vector.broadcast %cst_11 : f32 to vector<16x128xf32>
    %34 = arith.addf %33, %32 : vector<16x128xf32>
    %35 = arith.divf %33, %34 : vector<16x128xf32>
    %36 = arith.mulf %30, %35 : vector<16x128xf32>
    %37 = arith.truncf %36 : vector<16x128xf32> to vector<16x128xbf16>
    %c0_12 = arith.constant 0 : index
    %c0_13 = arith.constant 0 : index
    %38 = vector.load %arg4[%c0_12, %c0_13] : memref<1152x128xbf16, #tpu.memory_space<vmem>>, vector<128x128xbf16>
    %cst_14 = arith.constant dense<0.000000e+00> : vector<16x128xf32>
    %39 = tpu.matmul %37, %38, %cst_14 {dimension_numbers = #tpu.dot_dimension_numbers<[1], [0], [0], [1], [0, 0, 1, 1], [], []>} : vector<16x128xbf16>, vector<128x128xbf16>, vector<16x128xf32> -> vector<16x128xf32>
    %cst_15 = arith.constant -2.200000e+00 : f32
    %40 = vector.broadcast %cst_15 : f32 to vector<16x128xf32>
    %41 = arith.subf %30, %40 : vector<16x128xf32>
    %cst_16 = arith.constant 2.500000e+00 : f32
    %42 = vector.broadcast %cst_16 : f32 to vector<16x128xf32>
    %43 = arith.mulf %41, %42 : vector<16x128xf32>
    %44 = math.floor %43 : vector<16x128xf32>
    %45 = arith.subf %43, %44 : vector<16x128xf32>
    %46 = arith.mulf %45, %45 : vector<16x128xf32>
    %47 = arith.mulf %46, %45 : vector<16x128xf32>
    %cst_17 = arith.constant 1.000000e+00 : f32
    %48 = vector.broadcast %cst_17 : f32 to vector<16x128xf32>
    %49 = arith.subf %48, %45 : vector<16x128xf32>
    %cst_18 = arith.constant 0.166666672 : f32
    %50 = vector.broadcast %cst_18 : f32 to vector<16x128xf32>
    %51 = arith.mulf %47, %50 : vector<16x128xf32>
    %cst_19 = arith.constant -3.000000e+00 : f32
    %52 = vector.broadcast %cst_19 : f32 to vector<16x128xf32>
    %53 = arith.mulf %52, %47 : vector<16x128xf32>
    %cst_20 = arith.constant 3.000000e+00 : f32
    %54 = vector.broadcast %cst_20 : f32 to vector<16x128xf32>
    %55 = arith.mulf %54, %46 : vector<16x128xf32>
    %56 = arith.addf %53, %55 : vector<16x128xf32>
    %cst_21 = arith.constant 3.000000e+00 : f32
    %57 = vector.broadcast %cst_21 : f32 to vector<16x128xf32>
    %58 = arith.mulf %57, %45 : vector<16x128xf32>
    %59 = arith.addf %56, %58 : vector<16x128xf32>
    %cst_22 = arith.constant 1.000000e+00 : f32
    %60 = vector.broadcast %cst_22 : f32 to vector<16x128xf32>
    %61 = arith.addf %59, %60 : vector<16x128xf32>
    %cst_23 = arith.constant 0.166666672 : f32
    %62 = vector.broadcast %cst_23 : f32 to vector<16x128xf32>
    %63 = arith.mulf %61, %62 : vector<16x128xf32>
    %cst_24 = arith.constant 3.000000e+00 : f32
    %64 = vector.broadcast %cst_24 : f32 to vector<16x128xf32>
    %65 = arith.mulf %64, %47 : vector<16x128xf32>
    %cst_25 = arith.constant 6.000000e+00 : f32
    %66 = vector.broadcast %cst_25 : f32 to vector<16x128xf32>
    %67 = arith.mulf %66, %46 : vector<16x128xf32>
    %68 = arith.subf %65, %67 : vector<16x128xf32>
    %cst_26 = arith.constant 4.000000e+00 : f32
    %69 = vector.broadcast %cst_26 : f32 to vector<16x128xf32>
    %70 = arith.addf %68, %69 : vector<16x128xf32>
    %cst_27 = arith.constant 0.166666672 : f32
    %71 = vector.broadcast %cst_27 : f32 to vector<16x128xf32>
    %72 = arith.mulf %70, %71 : vector<16x128xf32>
    %73 = arith.mulf %49, %49 : vector<16x128xf32>
    %74 = arith.mulf %73, %49 : vector<16x128xf32>
    %cst_28 = arith.constant 0.166666672 : f32
    %75 = vector.broadcast %cst_28 : f32 to vector<16x128xf32>
    %76 = arith.mulf %74, %75 : vector<16x128xf32>
    %cst_29 = arith.constant 0.000000e+00 : f32
    %77 = vector.broadcast %cst_29 : f32 to vector<16x128xf32>
    %cst_30 = arith.constant 0.000000e+00 : f32
    %78 = vector.broadcast %cst_30 : f32 to vector<16x128xf32>
    %79 = arith.cmpf oeq, %44, %78 : vector<16x128xf32>
    %cst_31 = arith.constant 1.000000e+00 : f32
    %80 = vector.broadcast %cst_31 : f32 to vector<16x128xf32>
    %81 = arith.cmpf oeq, %44, %80 : vector<16x128xf32>
    %cst_32 = arith.constant 2.000000e+00 : f32
    %82 = vector.broadcast %cst_32 : f32 to vector<16x128xf32>
    %83 = arith.cmpf oeq, %44, %82 : vector<16x128xf32>
    %cst_33 = arith.constant 3.000000e+00 : f32
    %84 = vector.broadcast %cst_33 : f32 to vector<16x128xf32>
    %85 = arith.cmpf oeq, %44, %84 : vector<16x128xf32>
    %86 = arith.select %85, %76, %77 : vector<16x128xi1>, vector<16x128xf32>
    %87 = arith.select %83, %72, %86 : vector<16x128xi1>, vector<16x128xf32>
    %88 = arith.select %81, %63, %87 : vector<16x128xi1>, vector<16x128xf32>
    %89 = arith.select %79, %51, %88 : vector<16x128xi1>, vector<16x128xf32>
    %90 = arith.truncf %89 : vector<16x128xf32> to vector<16x128xbf16>
    %c128 = arith.constant 128 : index
    %c0_34 = arith.constant 0 : index
    %91 = vector.load %arg4[%c128, %c0_34] : memref<1152x128xbf16, #tpu.memory_space<vmem>>, vector<128x128xbf16>
    %cst_35 = arith.constant dense<0.000000e+00> : vector<16x128xf32>
    %92 = tpu.matmul %90, %91, %cst_35 {dimension_numbers = #tpu.dot_dimension_numbers<[1], [0], [0], [1], [0, 0, 1, 1], [], []>} : vector<16x128xbf16>, vector<128x128xbf16>, vector<16x128xf32> -> vector<16x128xf32>
    %93 = arith.addf %39, %92 : vector<16x128xf32>
    %cst_36 = arith.constant 1.000000e+00 : f32
    %94 = vector.broadcast %cst_36 : f32 to vector<16x128xf32>
    %95 = arith.cmpf oeq, %44, %94 : vector<16x128xf32>
    %cst_37 = arith.constant 2.000000e+00 : f32
    %96 = vector.broadcast %cst_37 : f32 to vector<16x128xf32>
    %97 = arith.cmpf oeq, %44, %96 : vector<16x128xf32>
    %cst_38 = arith.constant 3.000000e+00 : f32
    %98 = vector.broadcast %cst_38 : f32 to vector<16x128xf32>
    %99 = arith.cmpf oeq, %44, %98 : vector<16x128xf32>
    %cst_39 = arith.constant 4.000000e+00 : f32
    %100 = vector.broadcast %cst_39 : f32 to vector<16x128xf32>
    %101 = arith.cmpf oeq, %44, %100 : vector<16x128xf32>
    %102 = arith.select %101, %76, %77 : vector<16x128xi1>, vector<16x128xf32>
    %103 = arith.select %99, %72, %102 : vector<16x128xi1>, vector<16x128xf32>
    %104 = arith.select %97, %63, %103 : vector<16x128xi1>, vector<16x128xf32>
    %105 = arith.select %95, %51, %104 : vector<16x128xi1>, vector<16x128xf32>
    %106 = arith.truncf %105 : vector<16x128xf32> to vector<16x128xbf16>
    %c256 = arith.constant 256 : index
    %c0_40 = arith.constant 0 : index
    %107 = vector.load %arg4[%c256, %c0_40] : memref<1152x128xbf16, #tpu.memory_space<vmem>>, vector<128x128xbf16>
    %cst_41 = arith.constant dense<0.000000e+00> : vector<16x128xf32>
    %108 = tpu.matmul %106, %107, %cst_41 {dimension_numbers = #tpu.dot_dimension_numbers<[1], [0], [0], [1], [0, 0, 1, 1], [], []>} : vector<16x128xbf16>, vector<128x128xbf16>, vector<16x128xf32> -> vector<16x128xf32>
    %109 = arith.addf %93, %108 : vector<16x128xf32>
    %cst_42 = arith.constant 2.000000e+00 : f32
    %110 = vector.broadcast %cst_42 : f32 to vector<16x128xf32>
    %111 = arith.cmpf oeq, %44, %110 : vector<16x128xf32>
    %cst_43 = arith.constant 3.000000e+00 : f32
    %112 = vector.broadcast %cst_43 : f32 to vector<16x128xf32>
    %113 = arith.cmpf oeq, %44, %112 : vector<16x128xf32>
    %cst_44 = arith.constant 4.000000e+00 : f32
    %114 = vector.broadcast %cst_44 : f32 to vector<16x128xf32>
    %115 = arith.cmpf oeq, %44, %114 : vector<16x128xf32>
    %cst_45 = arith.constant 5.000000e+00 : f32
    %116 = vector.broadcast %cst_45 : f32 to vector<16x128xf32>
    %117 = arith.cmpf oeq, %44, %116 : vector<16x128xf32>
    %118 = arith.select %117, %76, %77 : vector<16x128xi1>, vector<16x128xf32>
    %119 = arith.select %115, %72, %118 : vector<16x128xi1>, vector<16x128xf32>
    %120 = arith.select %113, %63, %119 : vector<16x128xi1>, vector<16x128xf32>
    %121 = arith.select %111, %51, %120 : vector<16x128xi1>, vector<16x128xf32>
    %122 = arith.truncf %121 : vector<16x128xf32> to vector<16x128xbf16>
    %c384 = arith.constant 384 : index
    %c0_46 = arith.constant 0 : index
    %123 = vector.load %arg4[%c384, %c0_46] : memref<1152x128xbf16, #tpu.memory_space<vmem>>, vector<128x128xbf16>
    %cst_47 = arith.constant dense<0.000000e+00> : vector<16x128xf32>
    %124 = tpu.matmul %122, %123, %cst_47 {dimension_numbers = #tpu.dot_dimension_numbers<[1], [0], [0], [1], [0, 0, 1, 1], [], []>} : vector<16x128xbf16>, vector<128x128xbf16>, vector<16x128xf32> -> vector<16x128xf32>
    %125 = arith.addf %109, %124 : vector<16x128xf32>
    %cst_48 = arith.constant 3.000000e+00 : f32
    %126 = vector.broadcast %cst_48 : f32 to vector<16x128xf32>
    %127 = arith.cmpf oeq, %44, %126 : vector<16x128xf32>
    %cst_49 = arith.constant 4.000000e+00 : f32
    %128 = vector.broadcast %cst_49 : f32 to vector<16x128xf32>
    %129 = arith.cmpf oeq, %44, %128 : vector<16x128xf32>
    %cst_50 = arith.constant 5.000000e+00 : f32
    %130 = vector.broadcast %cst_50 : f32 to vector<16x128xf32>
    %131 = arith.cmpf oeq, %44, %130 : vector<16x128xf32>
    %cst_51 = arith.constant 6.000000e+00 : f32
    %132 = vector.broadcast %cst_51 : f32 to vector<16x128xf32>
    %133 = arith.cmpf oeq, %44, %132 : vector<16x128xf32>
    %134 = arith.select %133, %76, %77 : vector<16x128xi1>, vector<16x128xf32>
    %135 = arith.select %131, %72, %134 : vector<16x128xi1>, vector<16x128xf32>
    %136 = arith.select %129, %63, %135 : vector<16x128xi1>, vector<16x128xf32>
    %137 = arith.select %127, %51, %136 : vector<16x128xi1>, vector<16x128xf32>
    %138 = arith.truncf %137 : vector<16x128xf32> to vector<16x128xbf16>
    %c512 = arith.constant 512 : index
    %c0_52 = arith.constant 0 : index
    %139 = vector.load %arg4[%c512, %c0_52] : memref<1152x128xbf16, #tpu.memory_space<vmem>>, vector<128x128xbf16>
    %cst_53 = arith.constant dense<0.000000e+00> : vector<16x128xf32>
    %140 = tpu.matmul %138, %139, %cst_53 {dimension_numbers = #tpu.dot_dimension_numbers<[1], [0], [0], [1], [0, 0, 1, 1], [], []>} : vector<16x128xbf16>, vector<128x128xbf16>, vector<16x128xf32> -> vector<16x128xf32>
    %141 = arith.addf %125, %140 : vector<16x128xf32>
    %cst_54 = arith.constant 4.000000e+00 : f32
    %142 = vector.broadcast %cst_54 : f32 to vector<16x128xf32>
    %143 = arith.cmpf oeq, %44, %142 : vector<16x128xf32>
    %cst_55 = arith.constant 5.000000e+00 : f32
    %144 = vector.broadcast %cst_55 : f32 to vector<16x128xf32>
    %145 = arith.cmpf oeq, %44, %144 : vector<16x128xf32>
    %cst_56 = arith.constant 6.000000e+00 : f32
    %146 = vector.broadcast %cst_56 : f32 to vector<16x128xf32>
    %147 = arith.cmpf oeq, %44, %146 : vector<16x128xf32>
    %cst_57 = arith.constant 7.000000e+00 : f32
    %148 = vector.broadcast %cst_57 : f32 to vector<16x128xf32>
    %149 = arith.cmpf oeq, %44, %148 : vector<16x128xf32>
    %150 = arith.select %149, %76, %77 : vector<16x128xi1>, vector<16x128xf32>
    %151 = arith.select %147, %72, %150 : vector<16x128xi1>, vector<16x128xf32>
    %152 = arith.select %145, %63, %151 : vector<16x128xi1>, vector<16x128xf32>
    %153 = arith.select %143, %51, %152 : vector<16x128xi1>, vector<16x128xf32>
    %154 = arith.truncf %153 : vector<16x128xf32> to vector<16x128xbf16>
    %c640 = arith.constant 640 : index
    %c0_58 = arith.constant 0 : index
    %155 = vector.load %arg4[%c640, %c0_58] : memref<1152x128xbf16, #tpu.memory_space<vmem>>, vector<128x128xbf16>
    %cst_59 = arith.constant dense<0.000000e+00> : vector<16x128xf32>
    %156 = tpu.matmul %154, %155, %cst_59 {dimension_numbers = #tpu.dot_dimension_numbers<[1], [0], [0], [1], [0, 0, 1, 1], [], []>} : vector<16x128xbf16>, vector<128x128xbf16>, vector<16x128xf32> -> vector<16x128xf32>
    %157 = arith.addf %141, %156 : vector<16x128xf32>
    %cst_60 = arith.constant 5.000000e+00 : f32
    %158 = vector.broadcast %cst_60 : f32 to vector<16x128xf32>
    %159 = arith.cmpf oeq, %44, %158 : vector<16x128xf32>
    %cst_61 = arith.constant 6.000000e+00 : f32
    %160 = vector.broadcast %cst_61 : f32 to vector<16x128xf32>
    %161 = arith.cmpf oeq, %44, %160 : vector<16x128xf32>
    %cst_62 = arith.constant 7.000000e+00 : f32
    %162 = vector.broadcast %cst_62 : f32 to vector<16x128xf32>
    %163 = arith.cmpf oeq, %44, %162 : vector<16x128xf32>
    %cst_63 = arith.constant 8.000000e+00 : f32
    %164 = vector.broadcast %cst_63 : f32 to vector<16x128xf32>
    %165 = arith.cmpf oeq, %44, %164 : vector<16x128xf32>
    %166 = arith.select %165, %76, %77 : vector<16x128xi1>, vector<16x128xf32>
    %167 = arith.select %163, %72, %166 : vector<16x128xi1>, vector<16x128xf32>
    %168 = arith.select %161, %63, %167 : vector<16x128xi1>, vector<16x128xf32>
    %169 = arith.select %159, %51, %168 : vector<16x128xi1>, vector<16x128xf32>
    %170 = arith.truncf %169 : vector<16x128xf32> to vector<16x128xbf16>
    %c768 = arith.constant 768 : index
    %c0_64 = arith.constant 0 : index
    %171 = vector.load %arg4[%c768, %c0_64] : memref<1152x128xbf16, #tpu.memory_space<vmem>>, vector<128x128xbf16>
    %cst_65 = arith.constant dense<0.000000e+00> : vector<16x128xf32>
    %172 = tpu.matmul %170, %171, %cst_65 {dimension_numbers = #tpu.dot_dimension_numbers<[1], [0], [0], [1], [0, 0, 1, 1], [], []>} : vector<16x128xbf16>, vector<128x128xbf16>, vector<16x128xf32> -> vector<16x128xf32>
    %173 = arith.addf %157, %172 : vector<16x128xf32>
    %cst_66 = arith.constant 6.000000e+00 : f32
    %174 = vector.broadcast %cst_66 : f32 to vector<16x128xf32>
    %175 = arith.cmpf oeq, %44, %174 : vector<16x128xf32>
    %cst_67 = arith.constant 7.000000e+00 : f32
    %176 = vector.broadcast %cst_67 : f32 to vector<16x128xf32>
    %177 = arith.cmpf oeq, %44, %176 : vector<16x128xf32>
    %cst_68 = arith.constant 8.000000e+00 : f32
    %178 = vector.broadcast %cst_68 : f32 to vector<16x128xf32>
    %179 = arith.cmpf oeq, %44, %178 : vector<16x128xf32>
    %cst_69 = arith.constant 9.000000e+00 : f32
    %180 = vector.broadcast %cst_69 : f32 to vector<16x128xf32>
    %181 = arith.cmpf oeq, %44, %180 : vector<16x128xf32>
    %182 = arith.select %181, %76, %77 : vector<16x128xi1>, vector<16x128xf32>
    %183 = arith.select %179, %72, %182 : vector<16x128xi1>, vector<16x128xf32>
    %184 = arith.select %177, %63, %183 : vector<16x128xi1>, vector<16x128xf32>
    %185 = arith.select %175, %51, %184 : vector<16x128xi1>, vector<16x128xf32>
    %186 = arith.truncf %185 : vector<16x128xf32> to vector<16x128xbf16>
    %c896 = arith.constant 896 : index
    %c0_70 = arith.constant 0 : index
    %187 = vector.load %arg4[%c896, %c0_70] : memref<1152x128xbf16, #tpu.memory_space<vmem>>, vector<128x128xbf16>
    %cst_71 = arith.constant dense<0.000000e+00> : vector<16x128xf32>
    %188 = tpu.matmul %186, %187, %cst_71 {dimension_numbers = #tpu.dot_dimension_numbers<[1], [0], [0], [1], [0, 0, 1, 1], [], []>} : vector<16x128xbf16>, vector<128x128xbf16>, vector<16x128xf32> -> vector<16x128xf32>
    %189 = arith.addf %173, %188 : vector<16x128xf32>
    %cst_72 = arith.constant 7.000000e+00 : f32
    %190 = vector.broadcast %cst_72 : f32 to vector<16x128xf32>
    %191 = arith.cmpf oeq, %44, %190 : vector<16x128xf32>
    %cst_73 = arith.constant 8.000000e+00 : f32
    %192 = vector.broadcast %cst_73 : f32 to vector<16x128xf32>
    %193 = arith.cmpf oeq, %44, %192 : vector<16x128xf32>
    %cst_74 = arith.constant 9.000000e+00 : f32
    %194 = vector.broadcast %cst_74 : f32 to vector<16x128xf32>
    %195 = arith.cmpf oeq, %44, %194 : vector<16x128xf32>
    %cst_75 = arith.constant 1.000000e+01 : f32
    %196 = vector.broadcast %cst_75 : f32 to vector<16x128xf32>
    %197 = arith.cmpf oeq, %44, %196 : vector<16x128xf32>
    %198 = arith.select %197, %76, %77 : vector<16x128xi1>, vector<16x128xf32>
    %199 = arith.select %195, %72, %198 : vector<16x128xi1>, vector<16x128xf32>
    %200 = arith.select %193, %63, %199 : vector<16x128xi1>, vector<16x128xf32>
    %201 = arith.select %191, %51, %200 : vector<16x128xi1>, vector<16x128xf32>
    %202 = arith.truncf %201 : vector<16x128xf32> to vector<16x128xbf16>
    %c1024 = arith.constant 1024 : index
    %c0_76 = arith.constant 0 : index
    %203 = vector.load %arg4[%c1024, %c0_76] : memref<1152x128xbf16, #tpu.memory_space<vmem>>, vector<128x128xbf16>
    %cst_77 = arith.constant dense<0.000000e+00> : vector<16x128xf32>
    %204 = tpu.matmul %202, %203, %cst_77 {dimension_numbers = #tpu.dot_dimension_numbers<[1], [0], [0], [1], [0, 0, 1, 1], [], []>} : vector<16x128xbf16>, vector<128x128xbf16>, vector<16x128xf32> -> vector<16x128xf32>
    %205 = arith.addf %189, %204 : vector<16x128xf32>
    %206 = tpu.iota {dimensions = array<i32: 1>} : vector<1x128xi32>
    %c32_i32 = arith.constant 32 : i32
    %207 = vector.broadcast %c32_i32 : i32 to vector<1x128xi32>
    %208 = arith.cmpi slt, %206, %207 : vector<1x128xi32>
    %cst_78 = arith.constant dense<0.000000e+00> : vector<16xf32>
    %209 = vector.multi_reduction <add>, %205, %cst_78 [1] : vector<16x128xf32> to vector<16xf32>
    %210 = vector.shape_cast %209 : vector<16xf32> to vector<16x1xf32>
    %cst_79 = arith.constant 3.125000e-02 : f32
    %211 = vector.broadcast %cst_79 : f32 to vector<16x1xf32>
    %212 = arith.mulf %210, %211 : vector<16x1xf32>
    %213 = vector.broadcast %212 : vector<16x1xf32> to vector<16x128xf32>
    %214 = arith.subf %205, %213 : vector<16x128xf32>
    %cst_80 = arith.constant 0.000000e+00 : f32
    %215 = vector.shape_cast %208 : vector<1x128xi1> to vector<1x128xi1>
    %216 = vector.broadcast %215 : vector<1x128xi1> to vector<16x128xi1>
    %217 = vector.broadcast %cst_80 : f32 to vector<16x128xf32>
    %218 = arith.select %216, %214, %217 : vector<16x128xi1>, vector<16x128xf32>
    %219 = arith.mulf %218, %218 : vector<16x128xf32>
    %cst_81 = arith.constant dense<0.000000e+00> : vector<16xf32>
    %220 = vector.multi_reduction <add>, %219, %cst_81 [1] : vector<16x128xf32> to vector<16xf32>
    %221 = vector.shape_cast %220 : vector<16xf32> to vector<16x1xf32>
    %cst_82 = arith.constant 3.125000e-02 : f32
    %222 = vector.broadcast %cst_82 : f32 to vector<16x1xf32>
    %223 = arith.mulf %221, %222 : vector<16x1xf32>
    %cst_83 = arith.constant 9.99999974E-6 : f32
    %224 = vector.broadcast %cst_83 : f32 to vector<16x1xf32>
    %225 = arith.addf %223, %224 : vector<16x1xf32>
    %226 = math.rsqrt %225 : vector<16x1xf32>
    %227 = vector.broadcast %226 : vector<16x1xf32> to vector<16x128xf32>
    %228 = arith.mulf %218, %227 : vector<16x128xf32>
    %c0_84 = arith.constant 0 : index
    %c0_85 = arith.constant 0 : index
    %229 = vector.load %arg5[%c0_84, %c0_85] : memref<1x128xf32, #tpu.memory_space<vmem>>, vector<1x128xf32>
    %230 = vector.broadcast %229 : vector<1x128xf32> to vector<16x128xf32>
    %231 = arith.mulf %228, %230 : vector<16x128xf32>
    %c0_86 = arith.constant 0 : index
    %c0_87 = arith.constant 0 : index
    %232 = vector.load %arg6[%c0_86, %c0_87] : memref<1x128xf32, #tpu.memory_space<vmem>>, vector<1x128xf32>
    %233 = vector.broadcast %232 : vector<1x128xf32> to vector<16x128xf32>
    %234 = arith.addf %231, %233 : vector<16x128xf32>
    %235 = vector.shape_cast %234 : vector<16x128xf32> to vector<1x16x128xf32>
    %c0_88 = arith.constant 0 : index
    %c0_89 = arith.constant 0 : index
    %236 = vector.load %arg7[%c0_88, %c0_89] : memref<16x128xf32, #tpu.memory_space<vmem>>, vector<16x128xf32>
    %237 = vector.shape_cast %236 : vector<16x128xf32> to vector<1x16x128xf32>
    %238 = arith.addf %235, %237 : vector<1x16x128xf32>
    %c0_90 = arith.constant 0 : index
    %c0_91 = arith.constant 0 : index
    %c0_92 = arith.constant 0 : index
    %239 = vector.load %arg8[%c0_90, %c0_91, %c0_92] : memref<1x16x128xf32, #tpu.memory_space<vmem>>, vector<1x16x128xf32>
    tpu.vector_store %arg8[%c0_90, %c0_91, %c0_92], %238 {strides = array<i32>} : memref<1x16x128xf32, #tpu.memory_space<vmem>>, vector<1x16x128xf32>,
    return
  }
  func.func @transform_0(%arg0: i32) -> (i32, i32, i32) {
    %c0_i32 = arith.constant 0 : i32
    %c0_i32_0 = arith.constant 0 : i32
    %c0_i32_1 = arith.constant 0 : i32
    return %arg0, %c0_i32, %c0_i32_0 : i32, i32, i32
  }
  func.func @transform_1(%arg0: i32) -> (i32, i32) {
    %c0_i32 = arith.constant 0 : i32
    %c0_i32_0 = arith.constant 0 : i32
    %c0_i32_1 = arith.constant 0 : i32
    return %c0_i32, %c0_i32_0 : i32, i32
  }
  func.func @transform_2(%arg0: i32) -> (i32, i32) {
    %c0_i32 = arith.constant 0 : i32
    %c0_i32_0 = arith.constant 0 : i32
    %c0_i32_1 = arith.constant 0 : i32
    return %c0_i32, %c0_i32_0 : i32, i32
  }
  func.func @transform_3(%arg0: i32) -> (i32, i32) {
    %c0_i32 = arith.constant 0 : i32
    %c0_i32_0 = arith.constant 0 : i32
    %c0_i32_1 = arith.constant 0 : i32
    return %c0_i32, %c0_i32_0 : i32, i32
  }
  func.func @transform_4(%arg0: i32) -> (i32, i32) {
    %c0_i32 = arith.constant 0 : i32
    %c0_i32_0 = arith.constant 0 : i32
    %c0_i32_1 = arith.constant 0 : i32
    return %c0_i32, %c0_i32_0 : i32, i32
  }
  func.func @transform_5(%arg0: i32) -> (i32, i32) {
    %c0_i32 = arith.constant 0 : i32
    %c0_i32_0 = arith.constant 0 : i32
    %c0_i32_1 = arith.constant 0 : i32
    return %c0_i32, %c0_i32_0 : i32, i32
  }
  func.func @transform_6(%arg0: i32) -> (i32, i32) {
    %c0_i32 = arith.constant 0 : i32
    %c0_i32_0 = arith.constant 0 : i32
    %c0_i32_1 = arith.constant 0 : i32
    return %c0_i32, %c0_i32_0 : i32, i32
  }
  func.func @transform_7(%arg0: i32) -> (i32, i32, i32) {
    %c0_i32 = arith.constant 0 : i32
    %c0_i32_0 = arith.constant 0 : i32
    %c0_i32_1 = arith.constant 0 : i32
    return %arg0, %c0_i32, %c0_i32_0 : i32, i32, i32
  }
}

</mosaic_0001>

<llo_original>
// kernel: tpu_custom_call.1
$region0: #{tpu_custom_call.1}
  #allocation0 [shape = 'u32[]', space=smem, size = 0x4, offset = 0x4, fixed_abs, tag = 'smem constant byte address 0x4 - core index']
  #allocation1 [shape = 'u32[144,128]{1,0:T(1,128)}', space=vmem, size = 0x12000, scoped, tag = 'internal scratch']
  %s0 = inlined_call_operand.hbm [shape: f32[2,16,128], index: 0, kind: input, shape index: {}]
  %s1 = inlined_call_operand.vmem [shape: f32[1,128], index: 1, kind: input, shape index: {}]
  %s2 = inlined_call_operand.vmem [shape: f32[1,128], index: 2, kind: input, shape index: {}]
  %s3 = inlined_call_operand.hbm [shape: bf16[1152,128], index: 3, kind: input, shape index: {}]
  %s4 = inlined_call_operand.vmem [shape: f32[1,128], index: 4, kind: input, shape index: {}]
  %s5 = inlined_call_operand.vmem [shape: f32[1,128], index: 5, kind: input, shape index: {}]
  %s6 = inlined_call_operand.vmem [shape: f32[16,128], index: 6, kind: input, shape index: {}]
  %s7 = inlined_call_operand.hbm [shape: f32[2,16,128], index: 7, kind: output, shape index: {}]
  %s8 = sld [smem:[#allocation0]]
  $region69: #{tpu_custom_call.1} parent=0
    _
  %s10 = ssub.s32 1, %s8
  %s11 = scalar_select 0, %s10, %s8
  $region1: #{tpu_custom_call.1} parent=0
    #allocation2 [shape = 'u8[16384]{0}', space=vmem, size = 0x4000, scoped, tag = 'input window, operand 0']
    #allocation3 [shape = 's32[2]{0}', space=sflag, size = 0x8, scoped, tag = 'scoped memory for tpu_custom_call.1']
    #allocation4 [shape = 's32[2]{0}', space=sflag, size = 0x8, scoped, tag = 'scoped memory for tpu_custom_call.1']
    #allocation5 [shape = 'u8[294912]{0}', space=vmem, size = 0x48000, scoped, tag = 'input window, operand 3, single buffered']
    #allocation6 [shape = 's32[1]{0}', space=sflag, size = 0x4, scoped, tag = 'scoped memory for tpu_custom_call.1']
    #allocation7 [shape = 'u8[16384]{0}', space=vmem, size = 0x4000, scoped, tag = 'output window, operand 0']
    %12 = vsyncpa [#allocation3], 0
    %s13 = scalar_lea.sflag [#allocation3], 1
    %14 = vsyncpa %s13, 0
    %15 = vsyncpa [#allocation6], 0
    %16 = vsyncpa [#allocation4], 0
    %s17 = scalar_lea.sflag [#allocation4], 1
    %18 = vsyncpa %s17, 0
    loop: start=0, step=1, limit=4
    $region2: #{tpu_custom_call.1} parent=1 // loop_pre_header
      _
    $region3: #{tpu_custom_call.1} parent=1 // loop_header
      %s20 = sphi 0, %s24
      %p21 = scmp.ge.s32.totalorder %s20, 4
      %s30 = sphi 0, %s32
      %s33 = sphi 0, %s30
      %s34 = sphi 0, %s33
      %s50 = sphi 0, %s34
      %s54 = sphi 0, %s54
      %s56 = sphi 0, %s54
      %s57 = sphi 0, %s56
      %s71 = sphi 0, %s57
      %s75 = sphi 0, %s75
      %s77 = sphi 0, %s75
      %s78 = sphi 0, %s77
      %s92 = sphi 0, %s78
      %s96 = sphi 0, %s96
      %s98 = sphi 0, %s96
      %s99 = sphi 0, %s98
      %s113 = sphi 0, %s99
      %s117 = sphi 0, %s117
      %s119 = sphi 0, %s117
      %s120 = sphi 0, %s119
      %s134 = sphi 0, %s120
      %s138 = sphi 0, %s138
      %s140 = sphi 0, %s138
      %s141 = sphi 0, %s140
      %s155 = sphi 0, %s141
      %s159 = sphi 0, %s159
      %s161 = sphi 0, %s159
      %s162 = sphi 0, %s161
      %s176 = sphi 0, %s162
      %s182 = sphi 0, %s184
      %s185 = sphi 0, %s182
      %s186 = sphi 0, %s185
      %s202 = sphi 0, %s186
    $region4: #{tpu_custom_call.1} parent=1 // loop_header_branch
      %23 = sbr.rel (%p21) target = $region8
    $region5: #{tpu_custom_call.1} parent=1 // loop_body
      %s25 = ssub.s32 %s20, 1
      %s26 = ssub.s32 %s20, 2
      %s27 = sadd.s32 %s20, 1
      %s28 = ssub.s32 %s20, %s27
      %p29 = scmp.eq.s32.totalorder %s28, 0
      %s31 = sadd.s32 %s30, 1
      %s32 = scalar_select %p29, %s30, %s31
      %p35 = pneg %p29
      %p36 = scmp.eq.s32.totalorder %s20, 1
      %p37 = por %p35, %p36
      %p38 = scmp.ne.s32.totalorder %s30, %s33
      %p39 = scmp.eq.s32.totalorder %s20, 0
      %p40 = por %p38, %p39
      %p41 = scmp.ne.s32.totalorder %s30, %s33
      %p42 = scmp.eq.s32.totalorder %s25, 1
      %p43 = por %p41, %p42
      %p44 = scmp.ne.s32.totalorder %s33, %s34
      %p45 = scmp.eq.s32.totalorder %s25, 0
      %p46 = por %p44, %p45
      %p47 = scmp.ne.s32.totalorder %s33, %s34
      %p48 = scmp.eq.s32.totalorder %s26, 1
      %p49 = por %p47, %p48
      %p51 = scmp.ne.s32.totalorder %s34, %s50
      %p52 = scmp.eq.s32.totalorder %s26, 0
      %p53 = por %p51, %p52
      %s55 = sadd.s32 %s54, 1
      %p58 = scmp.eq.s32.totalorder %s20, 1
      %p59 = scmp.ne.s32.totalorder %s54, %s56
      %p60 = scmp.eq.s32.totalorder %s20, 0
      %p61 = por %p59, %p60
      %p62 = scmp.ne.s32.totalorder %s54, %s56
      %p63 = scmp.eq.s32.totalorder %s25, 1
      %p64 = por %p62, %p63
      %p65 = scmp.ne.s32.totalorder %s56, %s57
      %p66 = scmp.eq.s32.totalorder %s25, 0
      %p67 = por %p65, %p66
      %p68 = scmp.ne.s32.totalorder %s56, %s57
      %p69 = scmp.eq.s32.totalorder %s26, 1
      %p70 = por %p68, %p69
      %p72 = scmp.ne.s32.totalorder %s57, %s71
      %p73 = scmp.eq.s32.totalorder %s26, 0
      %p74 = por %p72, %p73
      %s76 = sadd.s32 %s75, 1
      %p79 = scmp.eq.s32.totalorder %s20, 1
      %p80 = scmp.ne.s32.totalorder %s75, %s77
      %p81 = scmp.eq.s32.totalorder %s20, 0
      %p82 = por %p80, %p81
      %p83 = scmp.ne.s32.totalorder %s75, %s77
      %p84 = scmp.eq.s32.totalorder %s25, 1
      %p85 = por %p83, %p84
      %p86 = scmp.ne.s32.totalorder %s77, %s78
      %p87 = scmp.eq.s32.totalorder %s25, 0
      %p88 = por %p86, %p87
      %p89 = scmp.ne.s32.totalorder %s77, %s78
      %p90 = scmp.eq.s32.totalorder %s26, 1
      %p91 = por %p89, %p90
      %p93 = scmp.ne.s32.totalorder %s78, %s92
      %p94 = scmp.eq.s32.totalorder %s26, 0
      %p95 = por %p93, %p94
      %s97 = sadd.s32 %s96, 1
      %p100 = scmp.eq.s32.totalorder %s20, 1
      %p101 = scmp.ne.s32.totalorder %s96, %s98
      %p102 = scmp.eq.s32.totalorder %s20, 0
      %p103 = por %p101, %p102
      %p104 = scmp.ne.s32.totalorder %s96, %s98
      %p105 = scmp.eq.s32.totalorder %s25, 1
      %p106 = por %p104, %p105
      %p107 = scmp.ne.s32.totalorder %s98, %s99
      %p108 = scmp.eq.s32.totalorder %s25, 0
      %p109 = por %p107, %p108
      %p110 = scmp.ne.s32.totalorder %s98, %s99
      %p111 = scmp.eq.s32.totalorder %s26, 1
      %p112 = por %p110, %p111
      %p114 = scmp.ne.s32.totalorder %s99, %s113
      %p115 = scmp.eq.s32.totalorder %s26, 0
      %p116 = por %p114, %p115
      %s118 = sadd.s32 %s117, 1
      %p121 = scmp.eq.s32.totalorder %s20, 1
      %p122 = scmp.ne.s32.totalorder %s117, %s119
      %p123 = scmp.eq.s32.totalorder %s20, 0
      %p124 = por %p122, %p123
      %p125 = scmp.ne.s32.totalorder %s117, %s119
      %p126 = scmp.eq.s32.totalorder %s25, 1
      %p127 = por %p125, %p126
      %p128 = scmp.ne.s32.totalorder %s119, %s120
      %p129 = scmp.eq.s32.totalorder %s25, 0
      %p130 = por %p128, %p129
      %p131 = scmp.ne.s32.totalorder %s119, %s120
      %p132 = scmp.eq.s32.totalorder %s26, 1
      %p133 = por %p131, %p132
      %p135 = scmp.ne.s32.totalorder %s120, %s134
      %p136 = scmp.eq.s32.totalorder %s26, 0
      %p137 = por %p135, %p136
      %s139 = sadd.s32 %s138, 1
      %p142 = scmp.eq.s32.totalorder %s20, 1
      %p143 = scmp.ne.s32.totalorder %s138, %s140
      %p144 = scmp.eq.s32.totalorder %s20, 0
      %p145 = por %p143, %p144
      %p146 = scmp.ne.s32.totalorder %s138, %s140
      %p147 = scmp.eq.s32.totalorder %s25, 1
      %p148 = por %p146, %p147
      %p149 = scmp.ne.s32.totalorder %s140, %s141
      %p150 = scmp.eq.s32.totalorder %s25, 0
      %p151 = por %p149, %p150
      %p152 = scmp.ne.s32.totalorder %s140, %s141
      %p153 = scmp.eq.s32.totalorder %s26, 1
      %p154 = por %p152, %p153
      %p156 = scmp.ne.s32.totalorder %s141, %s155
      %p157 = scmp.eq.s32.totalorder %s26, 0
      %p158 = por %p156, %p157
      %s160 = sadd.s32 %s159, 1
      %p163 = scmp.eq.s32.totalorder %s20, 1
      %p164 = scmp.ne.s32.totalorder %s159, %s161
      %p165 = scmp.eq.s32.totalorder %s20, 0
      %p166 = por %p164, %p165
      %p167 = scmp.ne.s32.totalorder %s159, %s161
      %p168 = scmp.eq.s32.totalorder %s25, 1
      %p169 = por %p167, %p168
      %p170 = scmp.ne.s32.totalorder %s161, %s162
      %p171 = scmp.eq.s32.totalorder %s25, 0
      %p172 = por %p170, %p171
      %p173 = scmp.ne.s32.totalorder %s161, %s162
      %p174 = scmp.eq.s32.totalorder %s26, 1
      %p175 = por %p173, %p174
      %p177 = scmp.ne.s32.totalorder %s162, %s176
      %p178 = scmp.eq.s32.totalorder %s26, 0
      %p179 = por %p177, %p178
      %s180 = ssub.s32 %s20, %s27
      %p181 = scmp.eq.s32.totalorder %s180, 0
      %s183 = sadd.s32 %s182, 1
      %s184 = scalar_select %p181, %s182, %s183
      %p187 = pneg %p181
      %p188 = scmp.eq.s32.totalorder %s20, 1
      %p189 = por %p187, %p188
      %p190 = scmp.ne.s32.totalorder %s182, %s185
      %p191 = scmp.eq.s32.totalorder %s20, 0
      %p192 = por %p190, %p191
      %p193 = scmp.ne.s32.totalorder %s182, %s185
      %p194 = scmp.eq.s32.totalorder %s25, 1
      %p195 = por %p193, %p194
      %p196 = scmp.ne.s32.totalorder %s185, %s186
      %p197 = scmp.eq.s32.totalorder %s25, 0
      %p198 = por %p196, %p197
      %p199 = scmp.ne.s32.totalorder %s185, %s186
      %p200 = scmp.eq.s32.totalorder %s26, 1
      %p201 = por %p199, %p200
      %p203 = scmp.ne.s32.totalorder %s186, %s202
      %p204 = scmp.eq.s32.totalorder %s26, 0
      %p205 = por %p203, %p204
      %p206 = scmp.le.s32.totalorder 1, %s20
      %p207 = scmp.lt.s32.totalorder %s20, 3
      %p208 = pnand %p206, %p207
      %p209 = pneg %p208
      // Predicated region
      $region9: #{tpu_custom_call.1} parent=5 // pred_check
        _
      $region10: #{tpu_custom_call.1} parent=5 // pred_check_branch
        %211 = sbr.rel (%p208) target = $region12
      $region11: #{tpu_custom_call.1} parent=5 // pred_region
        %s212 = ssub.s32 %s20, 1
        // Predicated region
        $region13: #{tpu_custom_call.1} parent=11 // pred_check
          %p213 = pneg %p67
        $region14: #{tpu_custom_call.1} parent=11 // pred_check_branch
          %215 = sbr.rel (%p213) target = $region16
        $region15: #{tpu_custom_call.1} parent=11 // pred_region
          _
        $region16: #{tpu_custom_call.1} parent=11 // pred_fallthru
          _
        // Predicated region
        $region17: #{tpu_custom_call.1} parent=11 // pred_check
          %p216 = pneg %p88
        $region18: #{tpu_custom_call.1} parent=11 // pred_check_branch
          %218 = sbr.rel (%p216) target = $region20
        $region19: #{tpu_custom_call.1} parent=11 // pred_region
          _
        $region20: #{tpu_custom_call.1} parent=11 // pred_fallthru
          _
        // Predicated region
        $region21: #{tpu_custom_call.1} parent=11 // pred_check
          %p219 = pneg %p109
        $region22: #{tpu_custom_call.1} parent=11 // pred_check_branch
          %221 = sbr.rel (%p219) target = $region24
        $region23: #{tpu_custom_call.1} parent=11 // pred_region
          %s223 = ssub.s32 9216, 9216
          %224 = vsyncadd [#allocation6], %s223
          %s225 = sshll.u32 [#allocation5], 4
          %s226 = int_to_ptr.vmem [resolvable:$true] %s225
          %231 = dma.hbm_to_vmem [thread:$0]  %s3, 9216, %s226, [#allocation6], 64, 64, 4
        $region24: #{tpu_custom_call.1} parent=11 // pred_fallthru
          _
        // Predicated region
        $region25: #{tpu_custom_call.1} parent=11 // pred_check
          %p232 = pneg %p130
        $region26: #{tpu_custom_call.1} parent=11 // pred_check_branch
          %234 = sbr.rel (%p232) target = $region28
        $region27: #{tpu_custom_call.1} parent=11 // pred_region
          _
        $region28: #{tpu_custom_call.1} parent=11 // pred_fallthru
          _
        // Predicated region
        $region29: #{tpu_custom_call.1} parent=11 // pred_check
          %p235 = pneg %p151
        $region30: #{tpu_custom_call.1} parent=11 // pred_check_branch
          %237 = sbr.rel (%p235) target = $region32
        $region31: #{tpu_custom_call.1} parent=11 // pred_region
          _
        $region32: #{tpu_custom_call.1} parent=11 // pred_fallthru
          _
        // Predicated region
        $region33: #{tpu_custom_call.1} parent=11 // pred_check
          %p238 = pneg %p172
        $region34: #{tpu_custom_call.1} parent=11 // pred_check_branch
          %240 = sbr.rel (%p238) target = $region36
        $region35: #{tpu_custom_call.1} parent=11 // pred_region
          _
        $region36: #{tpu_custom_call.1} parent=11 // pred_fallthru
          _
      $region12: #{tpu_custom_call.1} parent=5 // pred_fallthru
        _
      %p241 = scmp.lt.s32.totalorder %s20, 2
      // Predicated region
      $region37: #{tpu_custom_call.1} parent=5 // pred_check
        %p242 = pneg %p241
      $region38: #{tpu_custom_call.1} parent=5 // pred_check_branch
        %244 = sbr.rel (%p242) target = $region40
      $region39: #{tpu_custom_call.1} parent=5 // pred_region
        // Predicated region
        $region41: #{tpu_custom_call.1} parent=39 // pred_check
          %p245 = pneg %p40
        $region42: #{tpu_custom_call.1} parent=39 // pred_check_branch
          %247 = sbr.rel (%p245) target = $region44
        $region43: #{tpu_custom_call.1} parent=39 // pred_region
          %s248 = sand.u32 %s30, 1
          %s249 = scalar_lea.sflag [#allocation3], %s248
          %s250 = sand.u32 %s30, 1
          %s251 = smul.addr %s250, 16
          %s252 = scalar_lea.vmem [#allocation2], %s251
          %s254 = ssub.s32 256, 256
          %255 = vsyncadd %s249, %s254
          %s256 = smul.addr %s20, 2
          %s257 = smul.addr %s256, 128
          %s258 = scalar_lea.hbm %s0, %s257
          %s259 = sshll.u32 %s252, 4
          %s260 = int_to_ptr.vmem [resolvable:$true] %s259
          %265 = dma.hbm_to_vmem [thread:$0]  %s258, 256, %s260, %s249, 128, 128, 8
        $region44: #{tpu_custom_call.1} parent=39 // pred_fallthru
          _
      $region40: #{tpu_custom_call.1} parent=5 // pred_fallthru
        _
      %p266 = scmp.le.s32.totalorder 1, %s20
      %p267 = scmp.lt.s32.totalorder %s20, 3
      %p268 = pnand %p266, %p267
      %p269 = pneg %p268
      // Predicated region
      $region45: #{tpu_custom_call.1} parent=5 // pred_check
        _
      $region46: #{tpu_custom_call.1} parent=5 // pred_check_branch
        %271 = sbr.rel (%p268) target = $region48
      $region47: #{tpu_custom_call.1} parent=5 // pred_region
        %s272 = ssub.s32 %s20, 1
        %s273 = sand.u32 %s33, 1
        %s274 = scalar_lea.sflag [#allocation3], %s273
        %s275 = sand.u32 %s33, 1
        %s276 = smul.addr %s275, 16
        %s277 = scalar_lea.vmem [#allocation2], %s276
        // Predicated region
        $region49: #{tpu_custom_call.1} parent=47 // pred_check
          %p278 = pneg %p46
        $region50: #{tpu_custom_call.1} parent=47 // pred_check_branch
          %280 = sbr.rel (%p278) target = $region52
        $region51: #{tpu_custom_call.1} parent=47 // pred_region
          %281 = dma.done %s274, 256
        $region52: #{tpu_custom_call.1} parent=47 // pred_fallthru
          _
        // Predicated region
        $region53: #{tpu_custom_call.1} parent=47 // pred_check
          %p282 = pneg %p109
        $region54: #{tpu_custom_call.1} parent=47 // pred_check_branch
          %284 = sbr.rel (%p282) target = $region56
        $region55: #{tpu_custom_call.1} parent=47 // pred_region
          %285 = dma.done [#allocation6], 9216
        $region56: #{tpu_custom_call.1} parent=47 // pred_fallthru
          _
        %s286 = sand.u32 %s33, 1
        %s287 = scalar_lea.sflag [#allocation3], %s286
        %s288 = sand.u32 %s33, 1
        %s289 = smul.addr %s288, 16
        %s290 = scalar_lea.vmem [#allocation2], %s289
        %p291 = pneg %p46
        %p292 = pneg %p43
        %p293 = pneg %p67
        %p294 = pneg %p64
        %p295 = pneg %p88
        %p296 = pneg %p85
        %p297 = pneg %p109
        %p298 = pneg %p106
        %p299 = pneg %p130
        %p300 = pneg %p127
        %p301 = pneg %p151
        %p302 = pneg %p148
        %p303 = pneg %p172
        %p304 = pneg %p169
        %p305 = pneg %p198
        %p306 = pneg %p195
        %s307 = sand.u32 %s185, 1
        %s308 = scalar_lea.sflag [#allocation4], %s307
        %s309 = sand.u32 %s185, 1
        %s310 = smul.addr %s309, 16
        %s311 = scalar_lea.vmem [#allocation7], %s310
        %v313 = vld [vmem:[%s277] sm:$0xff]
        %v314 = vld [vmem:[%s277 + $0x8] sm:$0xff]
        %v315 = vlaneseq
        %v316 = vand.u32 %v315, 127
        %vm317 = vcmp.lt.s32.totalorder %v316, 48
        %318 = vadd.xlane.f32.xlu0 %v313
        %v319 = vpop.xlane.xlu0 %318
        %320 = vadd.xlane.f32.xlu0 %v314
        %v321 = vpop.xlane.xlu0 %320
        %v322 = vmul.f32 %v319, 0.020833334
        %v323 = vmul.f32 %v321, 0.020833334
        %v324 = vsub.f32 %v313, %v322
        %v325 = vsub.f32 %v314, %v323
        %v326 = vsel %vm317, 1, 0
        %vm327 = vcmp.eq.s32.totalorder %v326, 1
        %v328 = vsel %vm327, %v324, 0.0
        %v329 = vsel %vm327, %v325, 0.0
        %v330 = vmul.f32 %v328, %v328
        %v331 = vmul.f32 %v329, %v329
        %332 = vadd.xlane.f32.xlu0 %v330
        %v333 = vpop.xlane.xlu0 %332
        %334 = vadd.xlane.f32.xlu0 %v331
        %v335 = vpop.xlane.xlu0 %334
        %v336 = vmul.f32 %v333, 0.020833334
        %v337 = vmul.f32 %v335, 0.020833334
        %v338 = vadd.f32 %v336, 1e-05
        %v339 = vadd.f32 %v337, 1e-05
        %v340 = vrsqrt.pop %v338
        %v341 = vrsqrt.pop %v339
        %v342 = vmul.f32 %v328, %v340
        %v343 = vmul.f32 %v329, %v341
        %v344 = vld [vmem:[%s1] sm:$0x1]
        %v346 = vlaneseq
        %v347 = vshrl.u32 %v346, 7
        %v348 = vsub.s32 0, %v347
        %v349 = vrot.slane %v344, %v348
        %v351 = vmul.f32 %v342, %v349
        %v352 = vmul.f32 %v343, %v349
        %v353 = vld [vmem:[%s2] sm:$0x1]
        %v355 = vlaneseq
        %v356 = vshrl.u32 %v355, 7
        %v357 = vsub.s32 0, %v356
        %v358 = vrot.slane %v353, %v357
        %v360 = vadd.f32 %v351, %v358
        %v361 = vadd.f32 %v352, %v358
        %v362 = vxor.u32 %v360, 2147483648
        %v363 = vxor.u32 %v361, 2147483648
        %v364 = vmul.f32 %v362, 1.442695
        %v365 = vpow.pop %v364
        %v366 = vmul.f32 %v363, 1.442695
        %v367 = vpow.pop %v366
        %v368 = vadd.f32 %v365, 1.0
        %v369 = vadd.f32 %v367, 1.0
        %v370 = vrcp.pop %v368
        %v371 = vmul.f32 1.0, %v370
        %v372 = vrcp.pop %v369
        %v373 = vmul.f32 1.0, %v372
        %v374 = vmul.f32 %v360, %v371
        %v375 = vmul.f32 %v361, %v373
        %v376 = vpack.c.bf16 %v375, %v374
        %v377 = vld [vmem:[#allocation5] sm:$0xf]
        %v378 = vld [vmem:[#allocation5 + $0x4] sm:$0xf]
        %v379 = vld [vmem:[#allocation5 + $0x8] sm:$0xf]
        %v380 = vld [vmem:[#allocation5 + $0xc] sm:$0xf]
        %v381 = vld [vmem:[#allocation5 + $0x10] sm:$0xf]
        %v382 = vld [vmem:[#allocation5 + $0x14] sm:$0xf]
        %v383 = vld [vmem:[#allocation5 + $0x18] sm:$0xf]
        %v384 = vld [vmem:[#allocation5 + $0x1c] sm:$0xf]
        %v385 = vld [vmem:[#allocation5 + $0x20] sm:$0xf]
        %v386 = vld [vmem:[#allocation5 + $0x24] sm:$0xf]
        %v387 = vld [vmem:[#allocation5 + $0x28] sm:$0xf]
        %v388 = vld [vmem:[#allocation5 + $0x2c] sm:$0xf]
        %v389 = vld [vmem:[#allocation5 + $0x30] sm:$0xf]
        %v390 = vld [vmem:[#allocation5 + $0x34] sm:$0xf]
        %v391 = vld [vmem:[#allocation5 + $0x38] sm:$0xf]
        %v392 = vld [vmem:[#allocation5 + $0x3c] sm:$0xf]
        %v393 = vsub.f32 %v360, -2.2
        %v394 = vsub.f32 %v361, -2.2
        %v395 = vmul.f32 %v393, 2.5
        %v396 = vmul.f32 %v394, 2.5
        %v397 = vfloor.f32 %v395
        %v398 = vfloor.f32 %v396
        %v399 = vsub.f32 %v395, %v397
        %v400 = vsub.f32 %v396, %v398
        %v401 = vmul.f32 %v399, %v399
        %v402 = vmul.f32 %v400, %v400
        %v403 = vmul.f32 %v401, %v399
        %v404 = vmul.f32 %v402, %v400
        %v405 = vsub.f32 1.0, %v399
        %v406 = vsub.f32 1.0, %v400
        %v407 = vmul.f32 %v403, 0.16666667
        %v408 = vmul.f32 %v404, 0.16666667
        %v409 = vmul.f32 %v403, -3.0
        %v410 = vmul.f32 %v404, -3.0
        %v411 = vmul.f32 %v401, 3.0
        %v412 = vmul.f32 %v402, 3.0
        %v413 = vadd.f32 %v409, %v411
        %v414 = vadd.f32 %v410, %v412
        %v415 = vmul.f32 %v399, 3.0
        %v416 = vmul.f32 %v400, 3.0
        %v417 = vadd.f32 %v413, %v415
        %v418 = vadd.f32 %v414, %v416
        %v419 = vadd.f32 %v417, 1.0
        %v420 = vadd.f32 %v418, 1.0
        %v421 = vmul.f32 %v419, 0.16666667
        %v422 = vmul.f32 %v420, 0.16666667
        %v423 = vmul.f32 %v403, 3.0
        %v424 = vmul.f32 %v404, 3.0
        %v425 = vmul.f32 %v401, 6.0
        %v426 = vmul.f32 %v402, 6.0
        %v427 = vsub.f32 %v423, %v425
        %v428 = vsub.f32 %v424, %v426
        %v429 = vadd.f32 %v427, 4.0
        %v430 = vadd.f32 %v428, 4.0
        %v431 = vmul.f32 %v429, 0.16666667
        %v432 = vmul.f32 %v430, 0.16666667
        %v433 = vmul.f32 %v405, %v405
        %v434 = vmul.f32 %v406, %v406
        %v435 = vmul.f32 %v433, %v405
        %v436 = vmul.f32 %v434, %v406
        %v437 = vmul.f32 %v435, 0.16666667
        %v438 = vmul.f32 %v436, 0.16666667
        %vm439 = vcmp.eq.f32.partialorder %v397, 0.0
        %vm440 = vcmp.eq.f32.partialorder %v398, 0.0
        %vm441 = vcmp.eq.f32.partialorder %v397, 1.0
        %vm442 = vcmp.eq.f32.partialorder %v398, 1.0
        %vm443 = vcmp.eq.f32.partialorder %v397, 2.0
        %vm444 = vcmp.eq.f32.partialorder %v398, 2.0
        %vm445 = vcmp.eq.f32.partialorder %v397, 3.0
        %vm446 = vcmp.eq.f32.partialorder %v398, 3.0
        %v447 = vsel %vm445, %v437, 0.0
        %v448 = vsel %vm446, %v438, 0.0
        %v449 = vsel %vm443, %v431, %v447
        %v450 = vsel %vm444, %v432, %v448
        %v451 = vsel %vm441, %v421, %v449
        %v452 = vsel %vm442, %v422, %v450
        %v453 = vsel %vm439, %v407, %v451
        %v454 = vsel %vm440, %v408, %v452
        %v455 = vpack.c.bf16 %v454, %v453
        %v456 = vld [vmem:[#allocation5 + $0x40] sm:$0xf]
        %v457 = vld [vmem:[#allocation5 + $0x44] sm:$0xf]
        %v458 = vld [vmem:[#allocation5 + $0x48] sm:$0xf]
        %v459 = vld [vmem:[#allocation5 + $0x4c] sm:$0xf]
        %v460 = vld [vmem:[#allocation5 + $0x50] sm:$0xf]
        %v461 = vld [vmem:[#allocation5 + $0x54] sm:$0xf]
        %v462 = vld [vmem:[#allocation5 + $0x58] sm:$0xf]
        %v463 = vld [vmem:[#allocation5 + $0x5c] sm:$0xf]
        %v464 = vld [vmem:[#allocation5 + $0x60] sm:$0xf]
        %v465 = vld [vmem:[#allocation5 + $0x64] sm:$0xf]
        %v466 = vld [vmem:[#allocation5 + $0x68] sm:$0xf]
        %v467 = vld [vmem:[#allocation5 + $0x6c] sm:$0xf]
        %v468 = vld [vmem:[#allocation5 + $0x70] sm:$0xf]
        %v469 = vld [vmem:[#allocation5 + $0x74] sm:$0xf]
        %v470 = vld [vmem:[#allocation5 + $0x78] sm:$0xf]
        %v471 = vld [vmem:[#allocation5 + $0x7c] sm:$0xf]
        %v488 = vunpack.c.l.b16 %v456
        %v489 = vunpack.c.l.b16 %v457
        %v490 = vunpack.c.l.b16 %v458
        %v491 = vunpack.c.l.b16 %v459
        %v492 = vunpack.c.l.b16 %v460
        %v493 = vunpack.c.l.b16 %v461
        %v494 = vunpack.c.l.b16 %v462
        %v495 = vunpack.c.l.b16 %v463
        %v496 = vunpack.c.l.b16 %v464
        %v497 = vunpack.c.l.b16 %v465
        %v498 = vunpack.c.l.b16 %v466
        %v499 = vunpack.c.l.b16 %v467
        %v500 = vunpack.c.l.b16 %v468
        %v501 = vunpack.c.l.b16 %v469
        %v502 = vunpack.c.l.b16 %v470
        %v503 = vunpack.c.l.b16 %v471
        %v504 = vpack.c.b16 %v489, %v488
        %v505 = vpack.c.b16 %v491, %v490
        %v506 = vpack.c.b16 %v493, %v492
        %v507 = vpack.c.b16 %v495, %v494
        %v508 = vpack.c.b16 %v497, %v496
        %v509 = vpack.c.b16 %v499, %v498
        %v510 = vpack.c.b16 %v501, %v500
        %v511 = vpack.c.b16 %v503, %v502
        %520 = vmatprep.subr.bf16.mxu0 0
        %521 = vmatpush1.bf16.msra.mxu0 %v504
        %522 = vmatprep.subr.bf16.mxu0 0
        %523 = vmatpush1.bf16.msra.mxu0 %v505
        %524 = vmatprep.subr.bf16.mxu0 0
        %525 = vmatpush1.bf16.msra.mxu0 %v506
        %526 = vmatprep.subr.bf16.mxu0 0
        %527 = vmatpush1.bf16.msra.mxu0 %v507
        %528 = vmatprep.subr.bf16.mxu0 0
        %529 = vmatpush1.bf16.msra.mxu0 %v508
        %530 = vmatprep.subr.bf16.mxu0 0
        %531 = vmatpush1.bf16.msra.mxu0 %v509
        %532 = vmatprep.subr.bf16.mxu0 0
        %533 = vmatpush1.bf16.msra.mxu0 %v510
        %534 = vmatprep.subr.bf16.mxu0 0
        %535 = vmatpush1.bf16.msra.mxu0 %v511
        %536 = vmatprep.subr.bf16.mxu0 0
        %537 = vmatpush1.bf16.msra.mxu0 0
        %538 = vmatprep.subr.bf16.mxu0 0
        %539 = vmatpush1.bf16.msra.mxu0 0
        %540 = vmatprep.subr.bf16.mxu0 0
        %541 = vmatpush1.bf16.msra.mxu0 0
        %542 = vmatprep.subr.bf16.mxu0 0
        %543 = vmatpush1.bf16.msra.mxu0 0
        %544 = vmatprep.subr.bf16.mxu0 0
        %545 = vmatpush1.bf16.msra.mxu0 0
        %546 = vmatprep.subr.bf16.mxu0 0
        %547 = vmatpush1.bf16.msra.mxu0 0
        %548 = vmatprep.subr.bf16.mxu0 0
        %549 = vmatpush1.bf16.msra.mxu0 0
        %550 = vmatprep.subr.bf16.mxu0 0
        %551 = vmatpush1.bf16.msra.mxu0 0
        %552 = vmatprep.mubr.bf16.mxu0 0
        %553 = vmatmul.mubr.bf16.gmra.mrb[0].mxu0 %v455
        %v554 = vpop.f32.mrb[0].mxu0
        %v555 = vadd.f32 0.0, %v554
        %v556 = vpop.f32.mrb[0].mxu0
        %v557 = vpop.f32.mrb[0].mxu0
        %v558 = vadd.f32 0.0, %v557
        %v559 = vpop.f32.mrb[0].mxu0
        %560 = vdwg.mxu0
        %v577 = vunpack.c.l.b16 %v377
        %v578 = vunpack.c.l.b16 %v378
        %v579 = vunpack.c.l.b16 %v379
        %v580 = vunpack.c.l.b16 %v380
        %v581 = vunpack.c.l.b16 %v381
        %v582 = vunpack.c.l.b16 %v382
        %v583 = vunpack.c.l.b16 %v383
        %v584 = vunpack.c.l.b16 %v384
        %v585 = vunpack.c.l.b16 %v385
        %v586 = vunpack.c.l.b16 %v386
        %v587 = vunpack.c.l.b16 %v387
        %v588 = vunpack.c.l.b16 %v388
        %v589 = vunpack.c.l.b16 %v389
        %v590 = vunpack.c.l.b16 %v390
        %v591 = vunpack.c.l.b16 %v391
        %v592 = vunpack.c.l.b16 %v392
        %v593 = vpack.c.b16 %v578, %v577
        %v594 = vpack.c.b16 %v580, %v579
        %v595 = vpack.c.b16 %v582, %v581
        %v596 = vpack.c.b16 %v584, %v583
        %v597 = vpack.c.b16 %v586, %v585
        %v598 = vpack.c.b16 %v588, %v587
        %v599 = vpack.c.b16 %v590, %v589
        %v600 = vpack.c.b16 %v592, %v591
        %609 = vmatprep.subr.bf16.mxu0 0
        %610 = vmatpush1.bf16.msra.mxu0 %v593
        %611 = vmatprep.subr.bf16.mxu0 0
        %612 = vmatpush1.bf16.msra.mxu0 %v594
        %613 = vmatprep.subr.bf16.mxu0 0
        %614 = vmatpush1.bf16.msra.mxu0 %v595
        %615 = vmatprep.subr.bf16.mxu0 0
        %616 = vmatpush1.bf16.msra.mxu0 %v596
        %617 = vmatprep.subr.bf16.mxu0 0
        %618 = vmatpush1.bf16.msra.mxu0 %v597
        %619 = vmatprep.subr.bf16.mxu0 0
        %620 = vmatpush1.bf16.msra.mxu0 %v598
        %621 = vmatprep.subr.bf16.mxu0 0
        %622 = vmatpush1.bf16.msra.mxu0 %v599
        %623 = vmatprep.subr.bf16.mxu0 0
        %624 = vmatpush1.bf16.msra.mxu0 %v600
        %625 = vmatprep.subr.bf16.mxu0 0
        %626 = vmatpush1.bf16.msra.mxu0 0
        %627 = vmatprep.subr.bf16.mxu0 0
        %628 = vmatpush1.bf16.msra.mxu0 0
        %629 = vmatprep.subr.bf16.mxu0 0
        %630 = vmatpush1.bf16.msra.mxu0 0
        %631 = vmatprep.subr.bf16.mxu0 0
        %632 = vmatpush1.bf16.msra.mxu0 0
        %633 = vmatprep.subr.bf16.mxu0 0
        %634 = vmatpush1.bf16.msra.mxu0 0
        %635 = vmatprep.subr.bf16.mxu0 0
        %636 = vmatpush1.bf16.msra.mxu0 0
        %637 = vmatprep.subr.bf16.mxu0 0
        %638 = vmatpush1.bf16.msra.mxu0 0
        %639 = vmatprep.subr.bf16.mxu0 0
        %640 = vmatpush1.bf16.msra.mxu0 0
        %641 = vmatprep.mubr.bf16.mxu0 0
        %642 = vmatmul.mubr.bf16.gmra.mrb[0].mxu0 %v376
        %v643 = vpop.f32.mrb[0].mxu0
        %v644 = vadd.f32 %v555, %v643
        %v645 = vpop.f32.mrb[0].mxu0
        %v646 = vpop.f32.mrb[0].mxu0
        %v647 = vadd.f32 %v558, %v646
        %v648 = vpop.f32.mrb[0].mxu0
        %649 = vdwg.mxu0
        %vm650 = vcmp.eq.f32.partialorder %v397, 4.0
        %vm651 = vcmp.eq.f32.partialorder %v398, 4.0
        %v652 = vsel %vm650, %v437, 0.0
        %v653 = vsel %vm651, %v438, 0.0
        %v654 = vsel %vm445, %v431, %v652
        %v655 = vsel %vm446, %v432, %v653
        %v656 = vsel %vm443, %v421, %v654
        %v657 = vsel %vm444, %v422, %v655
        %v658 = vsel %vm441, %v407, %v656
        %v659 = vsel %vm442, %v408, %v657
        %v660 = vpack.c.bf16 %v659, %v658
        %v661 = vld [vmem:[#allocation5 + $0x80] sm:$0xf]
        %v662 = vld [vmem:[#allocation5 + $0x84] sm:$0xf]
        %v663 = vld [vmem:[#allocation5 + $0x88] sm:$0xf]
        %v664 = vld [vmem:[#allocation5 + $0x8c] sm:$0xf]
        %v665 = vld [vmem:[#allocation5 + $0x90] sm:$0xf]
        %v666 = vld [vmem:[#allocation5 + $0x94] sm:$0xf]
        %v667 = vld [vmem:[#allocation5 + $0x98] sm:$0xf]
        %v668 = vld [vmem:[#allocation5 + $0x9c] sm:$0xf]
        %v669 = vld [vmem:[#allocation5 + $0xa0] sm:$0xf]
        %v670 = vld [vmem:[#allocation5 + $0xa4] sm:$0xf]
        %v671 = vld [vmem:[#allocation5 + $0xa8] sm:$0xf]
        %v672 = vld [vmem:[#allocation5 + $0xac] sm:$0xf]
        %v673 = vld [vmem:[#allocation5 + $0xb0] sm:$0xf]
        %v674 = vld [vmem:[#allocation5 + $0xb4] sm:$0xf]
        %v675 = vld [vmem:[#allocation5 + $0xb8] sm:$0xf]
        %v676 = vld [vmem:[#allocation5 + $0xbc] sm:$0xf]
        %v693 = vunpack.c.l.b16 %v661
        %v694 = vunpack.c.l.b16 %v662
        %v695 = vunpack.c.l.b16 %v663
        %v696 = vunpack.c.l.b16 %v664
        %v697 = vunpack.c.l.b16 %v665
        %v698 = vunpack.c.l.b16 %v666
        %v699 = vunpack.c.l.b16 %v667
        %v700 = vunpack.c.l.b16 %v668
        %v701 = vunpack.c.l.b16 %v669
        %v702 = vunpack.c.l.b16 %v670
        %v703 = vunpack.c.l.b16 %v671
        %v704 = vunpack.c.l.b16 %v672
        %v705 = vunpack.c.l.b16 %v673
        %v706 = vunpack.c.l.b16 %v674
        %v707 = vunpack.c.l.b16 %v675
        %v708 = vunpack.c.l.b16 %v676
        %v709 = vpack.c.b16 %v694, %v693
        %v710 = vpack.c.b16 %v696, %v695
        %v711 = vpack.c.b16 %v698, %v697
        %v712 = vpack.c.b16 %v700, %v699
        %v713 = vpack.c.b16 %v702, %v701
        %v714 = vpack.c.b16 %v704, %v703
        %v715 = vpack.c.b16 %v706, %v705
        %v716 = vpack.c.b16 %v708, %v707
        %725 = vmatprep.subr.bf16.mxu0 0
        %726 = vmatpush1.bf16.msra.mxu0 %v709
        %727 = vmatprep.subr.bf16.mxu0 0
        %728 = vmatpush1.bf16.msra.mxu0 %v710
        %729 = vmatprep.subr.bf16.mxu0 0
        %730 = vmatpush1.bf16.msra.mxu0 %v711
        %731 = vmatprep.subr.bf16.mxu0 0
        %732 = vmatpush1.bf16.msra.mxu0 %v712
        %733 = vmatprep.subr.bf16.mxu0 0
        %734 = vmatpush1.bf16.msra.mxu0 %v713
        %735 = vmatprep.subr.bf16.mxu0 0
        %736 = vmatpush1.bf16.msra.mxu0 %v714
        %737 = vmatprep.subr.bf16.mxu0 0
        %738 = vmatpush1.bf16.msra.mxu0 %v715
        %739 = vmatprep.subr.bf16.mxu0 0
        %740 = vmatpush1.bf16.msra.mxu0 %v716
        %741 = vmatprep.subr.bf16.mxu0 0
        %742 = vmatpush1.bf16.msra.mxu0 0
        %743 = vmatprep.subr.bf16.mxu0 0
        %744 = vmatpush1.bf16.msra.mxu0 0
        %745 = vmatprep.subr.bf16.mxu0 0
        %746 = vmatpush1.bf16.msra.mxu0 0
        %747 = vmatprep.subr.bf16.mxu0 0
        %748 = vmatpush1.bf16.msra.mxu0 0
        %749 = vmatprep.subr.bf16.mxu0 0
        %750 = vmatpush1.bf16.msra.mxu0 0
        %751 = vmatprep.subr.bf16.mxu0 0
        %752 = vmatpush1.bf16.msra.mxu0 0
        %753 = vmatprep.subr.bf16.mxu0 0
        %754 = vmatpush1.bf16.msra.mxu0 0
        %755 = vmatprep.subr.bf16.mxu0 0
        %756 = vmatpush1.bf16.msra.mxu0 0
        %757 = vmatprep.mubr.bf16.mxu0 0
        %758 = vmatmul.mubr.bf16.gmra.mrb[0].mxu0 %v660
        %v759 = vpop.f32.mrb[0].mxu0
        %v760 = vadd.f32 0.0, %v759
        %v761 = vpop.f32.mrb[0].mxu0
        %v762 = vpop.f32.mrb[0].mxu0
        %v763 = vadd.f32 0.0, %v762
        %v764 = vpop.f32.mrb[0].mxu0
        %765 = vdwg.mxu0
        %v766 = vadd.f32 %v644, %v760
        %v767 = vadd.f32 %v647, %v763
        %vm768 = vcmp.eq.f32.partialorder %v397, 5.0
        %vm769 = vcmp.eq.f32.partialorder %v398, 5.0
        %v770 = vsel %vm768, %v437, 0.0
        %v771 = vsel %vm769, %v438, 0.0
        %v772 = vsel %vm650, %v431, %v770
        %v773 = vsel %vm651, %v432, %v771
        %v774 = vsel %vm445, %v421, %v772
        %v775 = vsel %vm446, %v422, %v773
        %v776 = vsel %vm443, %v407, %v774
        %v777 = vsel %vm444, %v408, %v775
        %v778 = vpack.c.bf16 %v777, %v776
        %v779 = vld [vmem:[#allocation5 + $0xc0] sm:$0xf]
        %v780 = vld [vmem:[#allocation5 + $0xc4] sm:$0xf]
        %v781 = vld [vmem:[#allocation5 + $0xc8] sm:$0xf]
        %v782 = vld [vmem:[#allocation5 + $0xcc] sm:$0xf]
        %v783 = vld [vmem:[#allocation5 + $0xd0] sm:$0xf]
        %v784 = vld [vmem:[#allocation5 + $0xd4] sm:$0xf]
        %v785 = vld [vmem:[#allocation5 + $0xd8] sm:$0xf]
        %v786 = vld [vmem:[#allocation5 + $0xdc] sm:$0xf]
        %v787 = vld [vmem:[#allocation5 + $0xe0] sm:$0xf]
        %v788 = vld [vmem:[#allocation5 + $0xe4] sm:$0xf]
        %v789 = vld [vmem:[#allocation5 + $0xe8] sm:$0xf]
        %v790 = vld [vmem:[#allocation5 + $0xec] sm:$0xf]
        %v791 = vld [vmem:[#allocation5 + $0xf0] sm:$0xf]
        %v792 = vld [vmem:[#allocation5 + $0xf4] sm:$0xf]
        %v793 = vld [vmem:[#allocation5 + $0xf8] sm:$0xf]
        %v794 = vld [vmem:[#allocation5 + $0xfc] sm:$0xf]
        %v811 = vunpack.c.l.b16 %v779
        %v812 = vunpack.c.l.b16 %v780
        %v813 = vunpack.c.l.b16 %v781
        %v814 = vunpack.c.l.b16 %v782
        %v815 = vunpack.c.l.b16 %v783
        %v816 = vunpack.c.l.b16 %v784
        %v817 = vunpack.c.l.b16 %v785
        %v818 = vunpack.c.l.b16 %v786
        %v819 = vunpack.c.l.b16 %v787
        %v820 = vunpack.c.l.b16 %v788
        %v821 = vunpack.c.l.b16 %v789
        %v822 = vunpack.c.l.b16 %v790
        %v823 = vunpack.c.l.b16 %v791
        %v824 = vunpack.c.l.b16 %v792
        %v825 = vunpack.c.l.b16 %v793
        %v826 = vunpack.c.l.b16 %v794
        %v827 = vpack.c.b16 %v812, %v811
        %v828 = vpack.c.b16 %v814, %v813
        %v829 = vpack.c.b16 %v816, %v815
        %v830 = vpack.c.b16 %v818, %v817
        %v831 = vpack.c.b16 %v820, %v819
        %v832 = vpack.c.b16 %v822, %v821
        %v833 = vpack.c.b16 %v824, %v823
        %v834 = vpack.c.b16 %v826, %v825
        %843 = vmatprep.subr.bf16.mxu0 0
        %844 = vmatpush1.bf16.msra.mxu0 %v827
        %845 = vmatprep.subr.bf16.mxu0 0
        %846 = vmatpush1.bf16.msra.mxu0 %v828
        %847 = vmatprep.subr.bf16.mxu0 0
        %848 = vmatpush1.bf16.msra.mxu0 %v829
        %849 = vmatprep.subr.bf16.mxu0 0
        %850 = vmatpush1.bf16.msra.mxu0 %v830
        %851 = vmatprep.subr.bf16.mxu0 0
        %852 = vmatpush1.bf16.msra.mxu0 %v831
        %853 = vmatprep.subr.bf16.mxu0 0
        %854 = vmatpush1.bf16.msra.mxu0 %v832
        %855 = vmatprep.subr.bf16.mxu0 0
        %856 = vmatpush1.bf16.msra.mxu0 %v833
        %857 = vmatprep.subr.bf16.mxu0 0
        %858 = vmatpush1.bf16.msra.mxu0 %v834
        %859 = vmatprep.subr.bf16.mxu0 0
        %860 = vmatpush1.bf16.msra.mxu0 0
        %861 = vmatprep.subr.bf16.mxu0 0
        %862 = vmatpush1.bf16.msra.mxu0 0
        %863 = vmatprep.subr.bf16.mxu0 0
        %864 = vmatpush1.bf16.msra.mxu0 0
        %865 = vmatprep.subr.bf16.mxu0 0
        %866 = vmatpush1.bf16.msra.mxu0 0
        %867 = vmatprep.subr.bf16.mxu0 0
        %868 = vmatpush1.bf16.msra.mxu0 0
        %869 = vmatprep.subr.bf16.mxu0 0
        %870 = vmatpush1.bf16.msra.mxu0 0
        %871 = vmatprep.subr.bf16.mxu0 0
        %872 = vmatpush1.bf16.msra.mxu0 0
        %873 = vmatprep.subr.bf16.mxu0 0
        %874 = vmatpush1.bf16.msra.mxu0 0
        %875 = vmatprep.mubr.bf16.mxu0 0
        %876 = vmatmul.mubr.bf16.gmra.mrb[0].mxu0 %v778
        %v877 = vpop.f32.mrb[0].mxu0
        %v878 = vadd.f32 0.0, %v877
        %v879 = vpop.f32.mrb[0].mxu0
        %v880 = vpop.f32.mrb[0].mxu0
        %v881 = vadd.f32 0.0, %v880
        %v882 = vpop.f32.mrb[0].mxu0
        %883 = vdwg.mxu0
        %v884 = vadd.f32 %v766, %v878
        %v885 = vadd.f32 %v767, %v881
        %vm886 = vcmp.eq.f32.partialorder %v397, 6.0
        %vm887 = vcmp.eq.f32.partialorder %v398, 6.0
        %v888 = vsel %vm886, %v437, 0.0
        %v889 = vsel %vm887, %v438, 0.0
        %v890 = vsel %vm768, %v431, %v888
        %v891 = vsel %vm769, %v432, %v889
        %v892 = vsel %vm650, %v421, %v890
        %v893 = vsel %vm651, %v422, %v891
        %v894 = vsel %vm445, %v407, %v892
        %v895 = vsel %vm446, %v408, %v893
        %v896 = vpack.c.bf16 %v895, %v894
        %v897 = vld [vmem:[#allocation5 + $0x100] sm:$0xf]
        %v898 = vld [vmem:[#allocation5 + $0x104] sm:$0xf]
        %v899 = vld [vmem:[#allocation5 + $0x108] sm:$0xf]
        %v900 = vld [vmem:[#allocation5 + $0x10c] sm:$0xf]
        %v901 = vld [vmem:[#allocation5 + $0x110] sm:$0xf]
        %v902 = vld [vmem:[#allocation5 + $0x114] sm:$0xf]
        %v903 = vld [vmem:[#allocation5 + $0x118] sm:$0xf]
        %v904 = vld [vmem:[#allocation5 + $0x11c] sm:$0xf]
        %v905 = vld [vmem:[#allocation5 + $0x120] sm:$0xf]
        %v906 = vld [vmem:[#allocation5 + $0x124] sm:$0xf]
        %v907 = vld [vmem:[#allocation5 + $0x128] sm:$0xf]
        %v908 = vld [vmem:[#allocation5 + $0x12c] sm:$0xf]
        %v909 = vld [vmem:[#allocation5 + $0x130] sm:$0xf]
        %v910 = vld [vmem:[#allocation5 + $0x134] sm:$0xf]
        %v911 = vld [vmem:[#allocation5 + $0x138] sm:$0xf]
        %v912 = vld [vmem:[#allocation5 + $0x13c] sm:$0xf]
        %v929 = vunpack.c.l.b16 %v897
        %v930 = vunpack.c.l.b16 %v898
        %v931 = vunpack.c.l.b16 %v899
        %v932 = vunpack.c.l.b16 %v900
        %v933 = vunpack.c.l.b16 %v901
        %v934 = vunpack.c.l.b16 %v902
        %v935 = vunpack.c.l.b16 %v903
        %v936 = vunpack.c.l.b16 %v904
        %v937 = vunpack.c.l.b16 %v905
        %v938 = vunpack.c.l.b16 %v906
        %v939 = vunpack.c.l.b16 %v907
        %v940 = vunpack.c.l.b16 %v908
        %v941 = vunpack.c.l.b16 %v909
        %v942 = vunpack.c.l.b16 %v910
        %v943 = vunpack.c.l.b16 %v911
        %v944 = vunpack.c.l.b16 %v912
        %v945 = vpack.c.b16 %v930, %v929
        %v946 = vpack.c.b16 %v932, %v931
        %v947 = vpack.c.b16 %v934, %v933
        %v948 = vpack.c.b16 %v936, %v935
        %v949 = vpack.c.b16 %v938, %v937
        %v950 = vpack.c.b16 %v940, %v939
        %v951 = vpack.c.b16 %v942, %v941
        %v952 = vpack.c.b16 %v944, %v943
        %961 = vmatprep.subr.bf16.mxu0 0
        %962 = vmatpush1.bf16.msra.mxu0 %v945
        %963 = vmatprep.subr.bf16.mxu0 0
        %964 = vmatpush1.bf16.msra.mxu0 %v946
        %965 = vmatprep.subr.bf16.mxu0 0
        %966 = vmatpush1.bf16.msra.mxu0 %v947
        %967 = vmatprep.subr.bf16.mxu0 0
        %968 = vmatpush1.bf16.msra.mxu0 %v948
        %969 = vmatprep.subr.bf16.mxu0 0
        %970 = vmatpush1.bf16.msra.mxu0 %v949
        %971 = vmatprep.subr.bf16.mxu0 0
        %972 = vmatpush1.bf16.msra.mxu0 %v950
        %973 = vmatprep.subr.bf16.mxu0 0
        %974 = vmatpush1.bf16.msra.mxu0 %v951
        %975 = vmatprep.subr.bf16.mxu0 0
        %976 = vmatpush1.bf16.msra.mxu0 %v952
        %977 = vmatprep.subr.bf16.mxu0 0
        %978 = vmatpush1.bf16.msra.mxu0 0
        %979 = vmatprep.subr.bf16.mxu0 0
        %980 = vmatpush1.bf16.msra.mxu0 0
        %981 = vmatprep.subr.bf16.mxu0 0
        %982 = vmatpush1.bf16.msra.mxu0 0
        %983 = vmatprep.subr.bf16.mxu0 0
        %984 = vmatpush1.bf16.msra.mxu0 0
        %985 = vmatprep.subr.bf16.mxu0 0
        %986 = vmatpush1.bf16.msra.mxu0 0
        %987 = vmatprep.subr.bf16.mxu0 0
        %988 = vmatpush1.bf16.msra.mxu0 0
        %989 = vmatprep.subr.bf16.mxu0 0
        %990 = vmatpush1.bf16.msra.mxu0 0
        %991 = vmatprep.subr.bf16.mxu0 0
        %992 = vmatpush1.bf16.msra.mxu0 0
        %993 = vmatprep.mubr.bf16.mxu0 0
        %994 = vmatmul.mubr.bf16.gmra.mrb[0].mxu0 %v896
        %v995 = vpop.f32.mrb[0].mxu0
        %v996 = vadd.f32 0.0, %v995
        %v997 = vpop.f32.mrb[0].mxu0
        %v998 = vpop.f32.mrb[0].mxu0
        %v999 = vadd.f32 0.0, %v998
        %v1000 = vpop.f32.mrb[0].mxu0
        %1001 = vdwg.mxu0
        %v1002 = vadd.f32 %v884, %v996
        %v1003 = vadd.f32 %v885, %v999
        %vm1004 = vcmp.eq.f32.partialorder %v397, 7.0
        %vm1005 = vcmp.eq.f32.partialorder %v398, 7.0
        %v1006 = vsel %vm1004, %v437, 0.0
        %v1007 = vsel %vm1005, %v438, 0.0
        %v1008 = vsel %vm886, %v431, %v1006
        %v1009 = vsel %vm887, %v432, %v1007
        %v1010 = vsel %vm768, %v421, %v1008
        %v1011 = vsel %vm769, %v422, %v1009
        %v1012 = vsel %vm650, %v407, %v1010
        %v1013 = vsel %vm651, %v408, %v1011
        %v1014 = vpack.c.bf16 %v1013, %v1012
        %v1015 = vld [vmem:[#allocation5 + $0x140] sm:$0xf]
        %v1016 = vld [vmem:[#allocation5 + $0x144] sm:$0xf]
        %v1017 = vld [vmem:[#allocation5 + $0x148] sm:$0xf]
        %v1018 = vld [vmem:[#allocation5 + $0x14c] sm:$0xf]
        %v1019 = vld [vmem:[#allocation5 + $0x150] sm:$0xf]
        %v1020 = vld [vmem:[#allocation5 + $0x154] sm:$0xf]
        %v1021 = vld [vmem:[#allocation5 + $0x158] sm:$0xf]
        %v1022 = vld [vmem:[#allocation5 + $0x15c] sm:$0xf]
        %v1023 = vld [vmem:[#allocation5 + $0x160] sm:$0xf]
        %v1024 = vld [vmem:[#allocation5 + $0x164] sm:$0xf]
        %v1025 = vld [vmem:[#allocation5 + $0x168] sm:$0xf]
        %v1026 = vld [vmem:[#allocation5 + $0x16c] sm:$0xf]
        %v1027 = vld [vmem:[#allocation5 + $0x170] sm:$0xf]
        %v1028 = vld [vmem:[#allocation5 + $0x174] sm:$0xf]
        %v1029 = vld [vmem:[#allocation5 + $0x178] sm:$0xf]
        %v1030 = vld [vmem:[#allocation5 + $0x17c] sm:$0xf]
        %v1047 = vunpack.c.l.b16 %v1015
        %v1048 = vunpack.c.l.b16 %v1016
        %v1049 = vunpack.c.l.b16 %v1017
        %v1050 = vunpack.c.l.b16 %v1018
        %v1051 = vunpack.c.l.b16 %v1019
        %v1052 = vunpack.c.l.b16 %v1020
        %v1053 = vunpack.c.l.b16 %v1021
        %v1054 = vunpack.c.l.b16 %v1022
        %v1055 = vunpack.c.l.b16 %v1023
        %v1056 = vunpack.c.l.b16 %v1024
        %v1057 = vunpack.c.l.b16 %v1025
        %v1058 = vunpack.c.l.b16 %v1026
        %v1059 = vunpack.c.l.b16 %v1027
        %v1060 = vunpack.c.l.b16 %v1028
        %v1061 = vunpack.c.l.b16 %v1029
        %v1062 = vunpack.c.l.b16 %v1030
        %v1063 = vpack.c.b16 %v1048, %v1047
        %v1064 = vpack.c.b16 %v1050, %v1049
        %v1065 = vpack.c.b16 %v1052, %v1051
        %v1066 = vpack.c.b16 %v1054, %v1053
        %v1067 = vpack.c.b16 %v1056, %v1055
        %v1068 = vpack.c.b16 %v1058, %v1057
        %v1069 = vpack.c.b16 %v1060, %v1059
        %v1070 = vpack.c.b16 %v1062, %v1061
        %1079 = vmatprep.subr.bf16.mxu0 0
        %1080 = vmatpush1.bf16.msra.mxu0 %v1063
        %1081 = vmatprep.subr.bf16.mxu0 0
        %1082 = vmatpush1.bf16.msra.mxu0 %v1064
        %1083 = vmatprep.subr.bf16.mxu0 0
        %1084 = vmatpush1.bf16.msra.mxu0 %v1065
        %1085 = vmatprep.subr.bf16.mxu0 0
        %1086 = vmatpush1.bf16.msra.mxu0 %v1066
        %1087 = vmatprep.subr.bf16.mxu0 0
        %1088 = vmatpush1.bf16.msra.mxu0 %v1067
        %1089 = vmatprep.subr.bf16.mxu0 0
        %1090 = vmatpush1.bf16.msra.mxu0 %v1068
        %1091 = vmatprep.subr.bf16.mxu0 0
        %1092 = vmatpush1.bf16.msra.mxu0 %v1069
        %1093 = vmatprep.subr.bf16.mxu0 0
        %1094 = vmatpush1.bf16.msra.mxu0 %v1070
        %1095 = vmatprep.subr.bf16.mxu0 0
        %1096 = vmatpush1.bf16.msra.mxu0 0
        %1097 = vmatprep.subr.bf16.mxu0 0
        %1098 = vmatpush1.bf16.msra.mxu0 0
        %1099 = vmatprep.subr.bf16.mxu0 0
        %1100 = vmatpush1.bf16.msra.mxu0 0
        %1101 = vmatprep.subr.bf16.mxu0 0
        %1102 = vmatpush1.bf16.msra.mxu0 0
        %1103 = vmatprep.subr.bf16.mxu0 0
        %1104 = vmatpush1.bf16.msra.mxu0 0
        %1105 = vmatprep.subr.bf16.mxu0 0
        %1106 = vmatpush1.bf16.msra.mxu0 0
        %1107 = vmatprep.subr.bf16.mxu0 0
        %1108 = vmatpush1.bf16.msra.mxu0 0
        %1109 = vmatprep.subr.bf16.mxu0 0
        %1110 = vmatpush1.bf16.msra.mxu0 0
        %1111 = vmatprep.mubr.bf16.mxu0 0
        %1112 = vmatmul.mubr.bf16.gmra.mrb[0].mxu0 %v1014
        %v1113 = vpop.f32.mrb[0].mxu0
        %v1114 = vadd.f32 0.0, %v1113
        %v1115 = vpop.f32.mrb[0].mxu0
        %v1116 = vpop.f32.mrb[0].mxu0
        %v1117 = vadd.f32 0.0, %v1116
        %v1118 = vpop.f32.mrb[0].mxu0
        %1119 = vdwg.mxu0
        %v1120 = vadd.f32 %v1002, %v1114
        %v1121 = vadd.f32 %v1003, %v1117
        %vm1122 = vcmp.eq.f32.partialorder %v397, 8.0
        %vm1123 = vcmp.eq.f32.partialorder %v398, 8.0
        %v1124 = vsel %vm1122, %v437, 0.0
        %v1125 = vsel %vm1123, %v438, 0.0
        %v1126 = vsel %vm1004, %v431, %v1124
        %v1127 = vsel %vm1005, %v432, %v1125
        %v1128 = vsel %vm886, %v421, %v1126
        %v1129 = vsel %vm887, %v422, %v1127
        %v1130 = vsel %vm768, %v407, %v1128
        %v1131 = vsel %vm769, %v408, %v1129
        %v1132 = vpack.c.bf16 %v1131, %v1130
        %v1133 = vld [vmem:[#allocation5 + $0x180] sm:$0xf]
        %v1134 = vld [vmem:[#allocation5 + $0x184] sm:$0xf]
        %v1135 = vld [vmem:[#allocation5 + $0x188] sm:$0xf]
        %v1136 = vld [vmem:[#allocation5 + $0x18c] sm:$0xf]
        %v1137 = vld [vmem:[#allocation5 + $0x190] sm:$0xf]
        %v1138 = vld [vmem:[#allocation5 + $0x194] sm:$0xf]
        %v1139 = vld [vmem:[#allocation5 + $0x198] sm:$0xf]
        %v1140 = vld [vmem:[#allocation5 + $0x19c] sm:$0xf]
        %v1141 = vld [vmem:[#allocation5 + $0x1a0] sm:$0xf]
        %v1142 = vld [vmem:[#allocation5 + $0x1a4] sm:$0xf]
        %v1143 = vld [vmem:[#allocation5 + $0x1a8] sm:$0xf]
        %v1144 = vld [vmem:[#allocation5 + $0x1ac] sm:$0xf]
        %v1145 = vld [vmem:[#allocation5 + $0x1b0] sm:$0xf]
        %v1146 = vld [vmem:[#allocation5 + $0x1b4] sm:$0xf]
        %v1147 = vld [vmem:[#allocation5 + $0x1b8] sm:$0xf]
        %v1148 = vld [vmem:[#allocation5 + $0x1bc] sm:$0xf]
        %v1165 = vunpack.c.l.b16 %v1133
        %v1166 = vunpack.c.l.b16 %v1134
        %v1167 = vunpack.c.l.b16 %v1135
        %v1168 = vunpack.c.l.b16 %v1136
        %v1169 = vunpack.c.l.b16 %v1137
        %v1170 = vunpack.c.l.b16 %v1138
        %v1171 = vunpack.c.l.b16 %v1139
        %v1172 = vunpack.c.l.b16 %v1140
        %v1173 = vunpack.c.l.b16 %v1141
        %v1174 = vunpack.c.l.b16 %v1142
        %v1175 = vunpack.c.l.b16 %v1143
        %v1176 = vunpack.c.l.b16 %v1144
        %v1177 = vunpack.c.l.b16 %v1145
        %v1178 = vunpack.c.l.b16 %v1146
        %v1179 = vunpack.c.l.b16 %v1147
        %v1180 = vunpack.c.l.b16 %v1148
        %v1181 = vpack.c.b16 %v1166, %v1165
        %v1182 = vpack.c.b16 %v1168, %v1167
        %v1183 = vpack.c.b16 %v1170, %v1169
        %v1184 = vpack.c.b16 %v1172, %v1171
        %v1185 = vpack.c.b16 %v1174, %v1173
        %v1186 = vpack.c.b16 %v1176, %v1175
        %v1187 = vpack.c.b16 %v1178, %v1177
        %v1188 = vpack.c.b16 %v1180, %v1179
        %1197 = vmatprep.subr.bf16.mxu0 0
        %1198 = vmatpush1.bf16.msra.mxu0 %v1181
        %1199 = vmatprep.subr.bf16.mxu0 0
        %1200 = vmatpush1.bf16.msra.mxu0 %v1182
        %1201 = vmatprep.subr.bf16.mxu0 0
        %1202 = vmatpush1.bf16.msra.mxu0 %v1183
        %1203 = vmatprep.subr.bf16.mxu0 0
        %1204 = vmatpush1.bf16.msra.mxu0 %v1184
        %1205 = vmatprep.subr.bf16.mxu0 0
        %1206 = vmatpush1.bf16.msra.mxu0 %v1185
        %1207 = vmatprep.subr.bf16.mxu0 0
        %1208 = vmatpush1.bf16.msra.mxu0 %v1186
        %1209 = vmatprep.subr.bf16.mxu0 0
        %1210 = vmatpush1.bf16.msra.mxu0 %v1187
        %1211 = vmatprep.subr.bf16.mxu0 0
        %1212 = vmatpush1.bf16.msra.mxu0 %v1188
        %1213 = vmatprep.subr.bf16.mxu0 0
        %1214 = vmatpush1.bf16.msra.mxu0 0
        %1215 = vmatprep.subr.bf16.mxu0 0
        %1216 = vmatpush1.bf16.msra.mxu0 0
        %1217 = vmatprep.subr.bf16.mxu0 0
        %1218 = vmatpush1.bf16.msra.mxu0 0
        %1219 = vmatprep.subr.bf16.mxu0 0
        %1220 = vmatpush1.bf16.msra.mxu0 0
        %1221 = vmatprep.subr.bf16.mxu0 0
        %1222 = vmatpush1.bf16.msra.mxu0 0
        %1223 = vmatprep.subr.bf16.mxu0 0
        %1224 = vmatpush1.bf16.msra.mxu0 0
        %1225 = vmatprep.subr.bf16.mxu0 0
        %1226 = vmatpush1.bf16.msra.mxu0 0
        %1227 = vmatprep.subr.bf16.mxu0 0
        %1228 = vmatpush1.bf16.msra.mxu0 0
        %1229 = vmatprep.mubr.bf16.mxu0 0
        %1230 = vmatmul.mubr.bf16.gmra.mrb[0].mxu0 %v1132
        %v1231 = vpop.f32.mrb[0].mxu0
        %v1232 = vadd.f32 0.0, %v1231
        %v1233 = vpop.f32.mrb[0].mxu0
        %v1234 = vpop.f32.mrb[0].mxu0
        %v1235 = vadd.f32 0.0, %v1234
        %v1236 = vpop.f32.mrb[0].mxu0
        %1237 = vdwg.mxu0
        %v1238 = vadd.f32 %v1120, %v1232
        %v1239 = vadd.f32 %v1121, %v1235
        %vm1240 = vcmp.eq.f32.partialorder %v397, 9.0
        %vm1241 = vcmp.eq.f32.partialorder %v398, 9.0
        %v1242 = vsel %vm1240, %v437, 0.0
        %v1243 = vsel %vm1241, %v438, 0.0
        %v1244 = vsel %vm1122, %v431, %v1242
        %v1245 = vsel %vm1123, %v432, %v1243
        %v1246 = vsel %vm1004, %v421, %v1244
        %v1247 = vsel %vm1005, %v422, %v1245
        %v1248 = vsel %vm886, %v407, %v1246
        %v1249 = vsel %vm887, %v408, %v1247
        %v1250 = vpack.c.bf16 %v1249, %v1248
        %v1251 = vld [vmem:[#allocation5 + $0x1c0] sm:$0xf]
        %v1252 = vld [vmem:[#allocation5 + $0x1c4] sm:$0xf]
        %v1253 = vld [vmem:[#allocation5 + $0x1c8] sm:$0xf]
        %v1254 = vld [vmem:[#allocation5 + $0x1cc] sm:$0xf]
        %v1255 = vld [vmem:[#allocation5 + $0x1d0] sm:$0xf]
        %v1256 = vld [vmem:[#allocation5 + $0x1d4] sm:$0xf]
        %v1257 = vld [vmem:[#allocation5 + $0x1d8] sm:$0xf]
        %v1258 = vld [vmem:[#allocation5 + $0x1dc] sm:$0xf]
        %v1259 = vld [vmem:[#allocation5 + $0x1e0] sm:$0xf]
        %v1260 = vld [vmem:[#allocation5 + $0x1e4] sm:$0xf]
        %v1261 = vld [vmem:[#allocation5 + $0x1e8] sm:$0xf]
        %v1262 = vld [vmem:[#allocation5 + $0x1ec] sm:$0xf]
        %v1263 = vld [vmem:[#allocation5 + $0x1f0] sm:$0xf]
        %v1264 = vld [vmem:[#allocation5 + $0x1f4] sm:$0xf]
        %v1265 = vld [vmem:[#allocation5 + $0x1f8] sm:$0xf]
        %v1266 = vld [vmem:[#allocation5 + $0x1fc] sm:$0xf]
        %v1283 = vunpack.c.l.b16 %v1251
        %v1284 = vunpack.c.l.b16 %v1252
        %v1285 = vunpack.c.l.b16 %v1253
        %v1286 = vunpack.c.l.b16 %v1254
        %v1287 = vunpack.c.l.b16 %v1255
        %v1288 = vunpack.c.l.b16 %v1256
        %v1289 = vunpack.c.l.b16 %v1257
        %v1290 = vunpack.c.l.b16 %v1258
        %v1291 = vunpack.c.l.b16 %v1259
        %v1292 = vunpack.c.l.b16 %v1260
        %v1293 = vunpack.c.l.b16 %v1261
        %v1294 = vunpack.c.l.b16 %v1262
        %v1295 = vunpack.c.l.b16 %v1263
        %v1296 = vunpack.c.l.b16 %v1264
        %v1297 = vunpack.c.l.b16 %v1265
        %v1298 = vunpack.c.l.b16 %v1266
        %v1299 = vpack.c.b16 %v1284, %v1283
        %v1300 = vpack.c.b16 %v1286, %v1285
        %v1301 = vpack.c.b16 %v1288, %v1287
        %v1302 = vpack.c.b16 %v1290, %v1289
        %v1303 = vpack.c.b16 %v1292, %v1291
        %v1304 = vpack.c.b16 %v1294, %v1293
        %v1305 = vpack.c.b16 %v1296, %v1295
        %v1306 = vpack.c.b16 %v1298, %v1297
        %1315 = vmatprep.subr.bf16.mxu0 0
        %1316 = vmatpush1.bf16.msra.mxu0 %v1299
        %1317 = vmatprep.subr.bf16.mxu0 0
        %1318 = vmatpush1.bf16.msra.mxu0 %v1300
        %1319 = vmatprep.subr.bf16.mxu0 0
        %1320 = vmatpush1.bf16.msra.mxu0 %v1301
        %1321 = vmatprep.subr.bf16.mxu0 0
        %1322 = vmatpush1.bf16.msra.mxu0 %v1302
        %1323 = vmatprep.subr.bf16.mxu0 0
        %1324 = vmatpush1.bf16.msra.mxu0 %v1303
        %1325 = vmatprep.subr.bf16.mxu0 0
        %1326 = vmatpush1.bf16.msra.mxu0 %v1304
        %1327 = vmatprep.subr.bf16.mxu0 0
        %1328 = vmatpush1.bf16.msra.mxu0 %v1305
        %1329 = vmatprep.subr.bf16.mxu0 0
        %1330 = vmatpush1.bf16.msra.mxu0 %v1306
        %1331 = vmatprep.subr.bf16.mxu0 0
        %1332 = vmatpush1.bf16.msra.mxu0 0
        %1333 = vmatprep.subr.bf16.mxu0 0
        %1334 = vmatpush1.bf16.msra.mxu0 0
        %1335 = vmatprep.subr.bf16.mxu0 0
        %1336 = vmatpush1.bf16.msra.mxu0 0
        %1337 = vmatprep.subr.bf16.mxu0 0
        %1338 = vmatpush1.bf16.msra.mxu0 0
        %1339 = vmatprep.subr.bf16.mxu0 0
        %1340 = vmatpush1.bf16.msra.mxu0 0
        %1341 = vmatprep.subr.bf16.mxu0 0
        %1342 = vmatpush1.bf16.msra.mxu0 0
        %1343 = vmatprep.subr.bf16.mxu0 0
        %1344 = vmatpush1.bf16.msra.mxu0 0
        %1345 = vmatprep.subr.bf16.mxu0 0
        %1346 = vmatpush1.bf16.msra.mxu0 0
        %1347 = vmatprep.mubr.bf16.mxu0 0
        %1348 = vmatmul.mubr.bf16.gmra.mrb[0].mxu0 %v1250
        %v1349 = vpop.f32.mrb[0].mxu0
        %v1350 = vadd.f32 0.0, %v1349
        %v1351 = vpop.f32.mrb[0].mxu0
        %v1352 = vpop.f32.mrb[0].mxu0
        %v1353 = vadd.f32 0.0, %v1352
        %v1354 = vpop.f32.mrb[0].mxu0
        %1355 = vdwg.mxu0
        %v1356 = vadd.f32 %v1238, %v1350
        %v1357 = vadd.f32 %v1239, %v1353
        %vm1358 = vcmp.eq.f32.partialorder %v397, 10.0
        %vm1359 = vcmp.eq.f32.partialorder %v398, 10.0
        %v1360 = vsel %vm1358, %v437, 0.0
        %v1361 = vsel %vm1359, %v438, 0.0
        %v1362 = vsel %vm1240, %v431, %v1360
        %v1363 = vsel %vm1241, %v432, %v1361
        %v1364 = vsel %vm1122, %v421, %v1362
        %v1365 = vsel %vm1123, %v422, %v1363
        %v1366 = vsel %vm1004, %v407, %v1364
        %v1367 = vsel %vm1005, %v408, %v1365
        %v1368 = vpack.c.bf16 %v1367, %v1366
        %v1369 = vld [vmem:[#allocation5 + $0x200] sm:$0xf]
        %v1370 = vld [vmem:[#allocation5 + $0x204] sm:$0xf]
        %v1371 = vld [vmem:[#allocation5 + $0x208] sm:$0xf]
        %v1372 = vld [vmem:[#allocation5 + $0x20c] sm:$0xf]
        %v1373 = vld [vmem:[#allocation5 + $0x210] sm:$0xf]
        %v1374 = vld [vmem:[#allocation5 + $0x214] sm:$0xf]
        %v1375 = vld [vmem:[#allocation5 + $0x218] sm:$0xf]
        %v1376 = vld [vmem:[#allocation5 + $0x21c] sm:$0xf]
        %v1377 = vld [vmem:[#allocation5 + $0x220] sm:$0xf]
        %v1378 = vld [vmem:[#allocation5 + $0x224] sm:$0xf]
        %v1379 = vld [vmem:[#allocation5 + $0x228] sm:$0xf]
        %v1380 = vld [vmem:[#allocation5 + $0x22c] sm:$0xf]
        %v1381 = vld [vmem:[#allocation5 + $0x230] sm:$0xf]
        %v1382 = vld [vmem:[#allocation5 + $0x234] sm:$0xf]
        %v1383 = vld [vmem:[#allocation5 + $0x238] sm:$0xf]
        %v1384 = vld [vmem:[#allocation5 + $0x23c] sm:$0xf]
        %v1401 = vunpack.c.l.b16 %v1369
        %v1402 = vunpack.c.l.b16 %v1370
        %v1403 = vunpack.c.l.b16 %v1371
        %v1404 = vunpack.c.l.b16 %v1372
        %v1405 = vunpack.c.l.b16 %v1373
        %v1406 = vunpack.c.l.b16 %v1374
        %v1407 = vunpack.c.l.b16 %v1375
        %v1408 = vunpack.c.l.b16 %v1376
        %v1409 = vunpack.c.l.b16 %v1377
        %v1410 = vunpack.c.l.b16 %v1378
        %v1411 = vunpack.c.l.b16 %v1379
        %v1412 = vunpack.c.l.b16 %v1380
        %v1413 = vunpack.c.l.b16 %v1381
        %v1414 = vunpack.c.l.b16 %v1382
        %v1415 = vunpack.c.l.b16 %v1383
        %v1416 = vunpack.c.l.b16 %v1384
        %v1417 = vpack.c.b16 %v1402, %v1401
        %v1418 = vpack.c.b16 %v1404, %v1403
        %v1419 = vpack.c.b16 %v1406, %v1405
        %v1420 = vpack.c.b16 %v1408, %v1407
        %v1421 = vpack.c.b16 %v1410, %v1409
        %v1422 = vpack.c.b16 %v1412, %v1411
        %v1423 = vpack.c.b16 %v1414, %v1413
        %v1424 = vpack.c.b16 %v1416, %v1415
        %1433 = vmatprep.subr.bf16.mxu0 0
        %1434 = vmatpush1.bf16.msra.mxu0 %v1417
        %1435 = vmatprep.subr.bf16.mxu0 0
        %1436 = vmatpush1.bf16.msra.mxu0 %v1418
        %1437 = vmatprep.subr.bf16.mxu0 0
        %1438 = vmatpush1.bf16.msra.mxu0 %v1419
        %1439 = vmatprep.subr.bf16.mxu0 0
        %1440 = vmatpush1.bf16.msra.mxu0 %v1420
        %1441 = vmatprep.subr.bf16.mxu0 0
        %1442 = vmatpush1.bf16.msra.mxu0 %v1421
        %1443 = vmatprep.subr.bf16.mxu0 0
        %1444 = vmatpush1.bf16.msra.mxu0 %v1422
        %1445 = vmatprep.subr.bf16.mxu0 0
        %1446 = vmatpush1.bf16.msra.mxu0 %v1423
        %1447 = vmatprep.subr.bf16.mxu0 0
        %1448 = vmatpush1.bf16.msra.mxu0 %v1424
        %1449 = vmatprep.subr.bf16.mxu0 0
        %1450 = vmatpush1.bf16.msra.mxu0 0
        %1451 = vmatprep.subr.bf16.mxu0 0
        %1452 = vmatpush1.bf16.msra.mxu0 0
        %1453 = vmatprep.subr.bf16.mxu0 0
        %1454 = vmatpush1.bf16.msra.mxu0 0
        %1455 = vmatprep.subr.bf16.mxu0 0
        %1456 = vmatpush1.bf16.msra.mxu0 0
        %1457 = vmatprep.subr.bf16.mxu0 0
        %1458 = vmatpush1.bf16.msra.mxu0 0
        %1459 = vmatprep.subr.bf16.mxu0 0
        %1460 = vmatpush1.bf16.msra.mxu0 0
        %1461 = vmatprep.subr.bf16.mxu0 0
        %1462 = vmatpush1.bf16.msra.mxu0 0
        %1463 = vmatprep.subr.bf16.mxu0 0
        %1464 = vmatpush1.bf16.msra.mxu0 0
        %1465 = vmatprep.mubr.bf16.mxu0 0
        %1466 = vmatmul.mubr.bf16.gmra.mrb[0].mxu0 %v1368
        %v1467 = vpop.f32.mrb[0].mxu0
        %v1468 = vadd.f32 0.0, %v1467
        %v1469 = vpop.f32.mrb[0].mxu0
        %v1470 = vpop.f32.mrb[0].mxu0
        %v1471 = vadd.f32 0.0, %v1470
        %v1472 = vpop.f32.mrb[0].mxu0
        %1473 = vdwg.mxu0
        %v1474 = vadd.f32 %v1356, %v1468
        %v1475 = vadd.f32 %v1357, %v1471
        %vm1476 = vcmp.lt.s32.totalorder %v316, 32
        %1477 = vadd.xlane.f32.xlu0 %v1474
        %v1478 = vpop.xlane.xlu0 %1477
        %1479 = vadd.xlane.f32.xlu0 %v1475
        %v1480 = vpop.xlane.xlu0 %1479
        %v1481 = vmul.f32 %v1478, 0.03125
        %v1482 = vmul.f32 %v1480, 0.03125
        %v1483 = vsub.f32 %v1474, %v1481
        %v1484 = vsub.f32 %v1475, %v1482
        %v1485 = vsel %vm1476, 1, 0
        %vm1486 = vcmp.eq.s32.totalorder %v1485, 1
        %v1487 = vsel %vm1486, %v1483, 0.0
        %v1488 = vsel %vm1486, %v1484, 0.0
        %v1489 = vmul.f32 %v1487, %v1487
        %v1490 = vmul.f32 %v1488, %v1488
        %1491 = vadd.xlane.f32.xlu0 %v1489
        %v1492 = vpop.xlane.xlu0 %1491
        %1493 = vadd.xlane.f32.xlu0 %v1490
        %v1494 = vpop.xlane.xlu0 %1493
        %v1495 = vmul.f32 %v1492, 0.03125
        %v1496 = vmul.f32 %v1494, 0.03125
        %v1497 = vadd.f32 %v1495, 1e-05
        %v1498 = vadd.f32 %v1496, 1e-05
        %v1499 = vrsqrt.pop %v1497
        %v1500 = vrsqrt.pop %v1498
        %v1501 = vmul.f32 %v1487, %v1499
        %v1502 = vmul.f32 %v1488, %v1500
        %v1503 = vld [vmem:[%s4] sm:$0x1]
        %v1505 = vlaneseq
        %v1506 = vshrl.u32 %v1505, 7
        %v1507 = vsub.s32 0, %v1506
        %v1508 = vrot.slane %v1503, %v1507
        %v1510 = vmul.f32 %v1501, %v1508
        %v1511 = vmul.f32 %v1502, %v1508
        %v1512 = vld [vmem:[%s5] sm:$0x1]
        %v1514 = vlaneseq
        %v1515 = vshrl.u32 %v1514, 7
        %v1516 = vsub.s32 0, %v1515
        %v1517 = vrot.slane %v1512, %v1516
        %v1519 = vadd.f32 %v1510, %v1517
        %v1520 = vadd.f32 %v1511, %v1517
        %v1521 = vld [vmem:[%s6] sm:$0xff]
        %v1522 = vld [vmem:[%s6 + $0x8] sm:$0xff]
        %v1523 = vadd.f32 %v1519, %v1521
        %v1524 = vadd.f32 %v1520, %v1522
        %1525 = vst [vmem:[%s311] sm:$0xff] %v1523
        %1526 = vst [vmem:[%s311 + $0x8] sm:$0xff] %v1524
        %s1527 = sand.u32 %s185, 1
        %s1528 = scalar_lea.sflag [#allocation4], %s1527
        %s1529 = sand.u32 %s185, 1
        %s1530 = smul.addr %s1529, 16
        %s1531 = scalar_lea.vmem [#allocation7], %s1530
        // Predicated region
        $region57: #{tpu_custom_call.1} parent=47 // pred_check
          %p1532 = pneg %p195
        $region58: #{tpu_custom_call.1} parent=47 // pred_check_branch
          %1534 = sbr.rel (%p1532) target = $region60
        $region59: #{tpu_custom_call.1} parent=47 // pred_region
          %s1536 = ssub.s32 256, 256
          %1537 = vsyncadd %s1528, %s1536
          %s1538 = smul.addr %s25, 2
          %s1539 = smul.addr %s1538, 128
          %s1540 = scalar_lea.hbm %s7, %s1539
          %s1541 = sshll.u32 %s1531, 4
          %s1542 = int_to_ptr.vmem [resolvable:$true] %s1541
          %1547 = dma.vmem_to_hbm [thread:$0]  %s1542, 256, %s1540, %s1528, 128, 128, 8
        $region60: #{tpu_custom_call.1} parent=47 // pred_fallthru
          _
      $region48: #{tpu_custom_call.1} parent=5 // pred_fallthru
        _
      %p1548 = scmp.le.s32.totalorder 2, %s20
      // Predicated region
      $region61: #{tpu_custom_call.1} parent=5 // pred_check
        %p1549 = pneg %p1548
      $region62: #{tpu_custom_call.1} parent=5 // pred_check_branch
        %1551 = sbr.rel (%p1549) target = $region64
      $region63: #{tpu_custom_call.1} parent=5 // pred_region
        %s1552 = ssub.s32 %s20, 2
        // Predicated region
        $region65: #{tpu_custom_call.1} parent=63 // pred_check
          %p1553 = pneg %p201
        $region66: #{tpu_custom_call.1} parent=63 // pred_check_branch
          %1555 = sbr.rel (%p1553) target = $region68
        $region67: #{tpu_custom_call.1} parent=63 // pred_region
          %s1556 = sand.u32 %s186, 1
          %s1557 = scalar_lea.sflag [#allocation4], %s1556
          %s1558 = sand.u32 %s186, 1
          %s1559 = smul.addr %s1558, 16
          %s1560 = scalar_lea.vmem [#allocation7], %s1559
          %1561 = dma.done %s1557, 256
        $region68: #{tpu_custom_call.1} parent=63 // pred_fallthru
          _
      $region64: #{tpu_custom_call.1} parent=5 // pred_fallthru
        _
    $region6: #{tpu_custom_call.1} parent=1 // loop_footer
      %s24 = sadd.s32 1, %s20
    $region7: #{tpu_custom_call.1} parent=1 // loop_footer_branch
      %19 = sbr.rel target = $region3
    $region8: #{tpu_custom_call.1} parent=1 // loop_exit
      _
    %1562 = vsyncpa [#allocation3], 1
    %s1563 = scalar_lea.sflag [#allocation3], 1
    %1564 = vsyncpa %s1563, 1
    %1565 = vsyncpa [#allocation6], 1
    %1566 = vsyncpa [#allocation4], 1
    %s1567 = scalar_lea.sflag [#allocation4], 1
    %1568 = vsyncpa %s1567, 1

// kernel: tpu_custom_call.1
$region0: #{tpu_custom_call.1}
  #allocation0 [shape = 'u32[]', space=smem, size = 0x4, offset = 0x4, fixed_abs, tag = 'smem constant byte address 0x4 - core index']
  #allocation1 [shape = 'u32[144,128]{1,0:T(1,128)}', space=vmem, size = 0x12000, scoped, tag = 'internal scratch']
  %s0 = inlined_call_operand.hbm [shape: f32[2,16,128], index: 0, kind: input, shape index: {}]
  %s1 = inlined_call_operand.vmem [shape: f32[1,128], index: 1, kind: input, shape index: {}]
  %s2 = inlined_call_operand.vmem [shape: f32[1,128], index: 2, kind: input, shape index: {}]
  %s3 = inlined_call_operand.hbm [shape: bf16[1152,128], index: 3, kind: input, shape index: {}]
  %s4 = inlined_call_operand.vmem [shape: f32[1,128], index: 4, kind: input, shape index: {}]
  %s5 = inlined_call_operand.vmem [shape: f32[1,128], index: 5, kind: input, shape index: {}]
  %s6 = inlined_call_operand.vmem [shape: f32[16,128], index: 6, kind: input, shape index: {}]
  %s7 = inlined_call_operand.hbm [shape: f32[2,16,128], index: 7, kind: output, shape index: {}]
  %s8 = sld [smem:[#allocation0]]
  $region69: #{tpu_custom_call.1} parent=0
    _
  %s10 = ssub.s32 1, %s8
  %s11 = scalar_select 0, %s10, %s8
  $region1: #{tpu_custom_call.1} parent=0
    #allocation2 [shape = 'u8[16384]{0}', space=vmem, size = 0x4000, scoped, tag = 'input window, operand 0']
    #allocation3 [shape = 's32[2]{0}', space=sflag, size = 0x8, scoped, tag = 'scoped memory for tpu_custom_call.1']
    #allocation4 [shape = 's32[2]{0}', space=sflag, size = 0x8, scoped, tag = 'scoped memory for tpu_custom_call.1']
    #allocation5 [shape = 'u8[294912]{0}', space=vmem, size = 0x48000, scoped, tag = 'input window, operand 3, single buffered']
    #allocation6 [shape = 's32[1]{0}', space=sflag, size = 0x4, scoped, tag = 'scoped memory for tpu_custom_call.1']
    #allocation7 [shape = 'u8[16384]{0}', space=vmem, size = 0x4000, scoped, tag = 'output window, operand 0']
    %12 = vsyncpa [#allocation3], 0
    %s13 = scalar_lea.sflag [#allocation3], 1
    %14 = vsyncpa %s13, 0
    %15 = vsyncpa [#allocation6], 0
    %16 = vsyncpa [#allocation4], 0
    %s17 = scalar_lea.sflag [#allocation4], 1
    %18 = vsyncpa %s17, 0
    loop: start=0, step=1, limit=4
    $region2: #{tpu_custom_call.1} parent=1 // loop_pre_header
      _
    $region3: #{tpu_custom_call.1} parent=1 // loop_header
      %s20 = sphi 0, %s24
      %p21 = scmp.ge.s32.totalorder %s20, 4
      %s30 = sphi 0, %s32
      %s33 = sphi 0, %s30
      %s34 = sphi 0, %s33
      %s50 = sphi 0, %s34
      %s54 = sphi 0, %s54
      %s56 = sphi 0, %s54
      %s57 = sphi 0, %s56
      %s71 = sphi 0, %s57
      %s75 = sphi 0, %s75
      %s77 = sphi 0, %s75
      %s78 = sphi 0, %s77
      %s92 = sphi 0, %s78
      %s96 = sphi 0, %s96
      %s98 = sphi 0, %s96
      %s99 = sphi 0, %s98
      %s113 = sphi 0, %s99
      %s117 = sphi 0, %s117
      %s119 = sphi 0, %s117
      %s120 = sphi 0, %s119
      %s134 = sphi 0, %s120
      %s138 = sphi 0, %s138
      %s140 = sphi 0, %s138
      %s141 = sphi 0, %s140
      %s155 = sphi 0, %s141
      %s159 = sphi 0, %s159
      %s161 = sphi 0, %s159
      %s162 = sphi 0, %s161
      %s176 = sphi 0, %s162
      %s182 = sphi 0, %s184
      %s185 = sphi 0, %s182
      %s186 = sphi 0, %s185
      %s202 = sphi 0, %s186
    $region4: #{tpu_custom_call.1} parent=1 // loop_header_branch
      %23 = sbr.rel (%p21) target = $region8
    $region5: #{tpu_custom_call.1} parent=1 // loop_body
      %s25 = ssub.s32 %s20, 1
      %s26 = ssub.s32 %s20, 2
      %s27 = sadd.s32 %s20, 1
      %s28 = ssub.s32 %s20, %s27
      %p29 = scmp.eq.s32.totalorder %s28, 0
      %s31 = sadd.s32 %s30, 1
      %s32 = scalar_select %p29, %s30, %s31
      %p35 = pneg %p29
      %p36 = scmp.eq.s32.totalorder %s20, 1
      %p37 = por %p35, %p36
      %p38 = scmp.ne.s32.totalorder %s30, %s33
      %p39 = scmp.eq.s32.totalorder %s20, 0
      %p40 = por %p38, %p39
      %p41 = scmp.ne.s32.totalorder %s30, %s33
      %p42 = scmp.eq.s32.totalorder %s25, 1
      %p43 = por %p41, %p42
      %p44 = scmp.ne.s32.totalorder %s33, %s34
      %p45 = scmp.eq.s32.totalorder %s25, 0
      %p46 = por %p44, %p45
      %p47 = scmp.ne.s32.totalorder %s33, %s34
      %p48 = scmp.eq.s32.totalorder %s26, 1
      %p49 = por %p47, %p48
      %p51 = scmp.ne.s32.totalorder %s34, %s50
      %p52 = scmp.eq.s32.totalorder %s26, 0
      %p53 = por %p51, %p52
      %s55 = sadd.s32 %s54, 1
      %p58 = scmp.eq.s32.totalorder %s20, 1
      %p59 = scmp.ne.s32.totalorder %s54, %s56
      %p60 = scmp.eq.s32.totalorder %s20, 0
      %p61 = por %p59, %p60
      %p62 = scmp.ne.s32.totalorder %s54, %s56
      %p63 = scmp.eq.s32.totalorder %s25, 1
      %p64 = por %p62, %p63
      %p65 = scmp.ne.s32.totalorder %s56, %s57
      %p66 = scmp.eq.s32.totalorder %s25, 0
      %p67 = por %p65, %p66
      %p68 = scmp.ne.s32.totalorder %s56, %s57
      %p69 = scmp.eq.s32.totalorder %s26, 1
      %p70 = por %p68, %p69
      %p72 = scmp.ne.s32.totalorder %s57, %s71
      %p73 = scmp.eq.s32.totalorder %s26, 0
      %p74 = por %p72, %p73
      %s76 = sadd.s32 %s75, 1
      %p79 = scmp.eq.s32.totalorder %s20, 1
      %p80 = scmp.ne.s32.totalorder %s75, %s77
      %p81 = scmp.eq.s32.totalorder %s20, 0
      %p82 = por %p80, %p81
      %p83 = scmp.ne.s32.totalorder %s75, %s77
      %p84 = scmp.eq.s32.totalorder %s25, 1
      %p85 = por %p83, %p84
      %p86 = scmp.ne.s32.totalorder %s77, %s78
      %p87 = scmp.eq.s32.totalorder %s25, 0
      %p88 = por %p86, %p87
      %p89 = scmp.ne.s32.totalorder %s77, %s78
      %p90 = scmp.eq.s32.totalorder %s26, 1
      %p91 = por %p89, %p90
      %p93 = scmp.ne.s32.totalorder %s78, %s92
      %p94 = scmp.eq.s32.totalorder %s26, 0
      %p95 = por %p93, %p94
      %s97 = sadd.s32 %s96, 1
      %p100 = scmp.eq.s32.totalorder %s20, 1
      %p101 = scmp.ne.s32.totalorder %s96, %s98
      %p102 = scmp.eq.s32.totalorder %s20, 0
      %p103 = por %p101, %p102
      %p104 = scmp.ne.s32.totalorder %s96, %s98
      %p105 = scmp.eq.s32.totalorder %s25, 1
      %p106 = por %p104, %p105
      %p107 = scmp.ne.s32.totalorder %s98, %s99
      %p108 = scmp.eq.s32.totalorder %s25, 0
      %p109 = por %p107, %p108
      %p110 = scmp.ne.s32.totalorder %s98, %s99
      %p111 = scmp.eq.s32.totalorder %s26, 1
      %p112 = por %p110, %p111
      %p114 = scmp.ne.s32.totalorder %s99, %s113
      %p115 = scmp.eq.s32.totalorder %s26, 0
      %p116 = por %p114, %p115
      %s118 = sadd.s32 %s117, 1
      %p121 = scmp.eq.s32.totalorder %s20, 1
      %p122 = scmp.ne.s32.totalorder %s117, %s119
      %p123 = scmp.eq.s32.totalorder %s20, 0
      %p124 = por %p122, %p123
      %p125 = scmp.ne.s32.totalorder %s117, %s119
      %p126 = scmp.eq.s32.totalorder %s25, 1
      %p127 = por %p125, %p126
      %p128 = scmp.ne.s32.totalorder %s119, %s120
      %p129 = scmp.eq.s32.totalorder %s25, 0
      %p130 = por %p128, %p129
      %p131 = scmp.ne.s32.totalorder %s119, %s120
      %p132 = scmp.eq.s32.totalorder %s26, 1
      %p133 = por %p131, %p132
      %p135 = scmp.ne.s32.totalorder %s120, %s134
      %p136 = scmp.eq.s32.totalorder %s26, 0
      %p137 = por %p135, %p136
      %s139 = sadd.s32 %s138, 1
      %p142 = scmp.eq.s32.totalorder %s20, 1
      %p143 = scmp.ne.s32.totalorder %s138, %s140
      %p144 = scmp.eq.s32.totalorder %s20, 0
      %p145 = por %p143, %p144
      %p146 = scmp.ne.s32.totalorder %s138, %s140
      %p147 = scmp.eq.s32.totalorder %s25, 1
      %p148 = por %p146, %p147
      %p149 = scmp.ne.s32.totalorder %s140, %s141
      %p150 = scmp.eq.s32.totalorder %s25, 0
      %p151 = por %p149, %p150
      %p152 = scmp.ne.s32.totalorder %s140, %s141
      %p153 = scmp.eq.s32.totalorder %s26, 1
      %p154 = por %p152, %p153
      %p156 = scmp.ne.s32.totalorder %s141, %s155
      %p157 = scmp.eq.s32.totalorder %s26, 0
      %p158 = por %p156, %p157
      %s160 = sadd.s32 %s159, 1
      %p163 = scmp.eq.s32.totalorder %s20, 1
      %p164 = scmp.ne.s32.totalorder %s159, %s161
      %p165 = scmp.eq.s32.totalorder %s20, 0
      %p166 = por %p164, %p165
      %p167 = scmp.ne.s32.totalorder %s159, %s161
      %p168 = scmp.eq.s32.totalorder %s25, 1
      %p169 = por %p167, %p168
      %p170 = scmp.ne.s32.totalorder %s161, %s162
      %p171 = scmp.eq.s32.totalorder %s25, 0
      %p172 = por %p170, %p171
      %p173 = scmp.ne.s32.totalorder %s161, %s162
      %p174 = scmp.eq.s32.totalorder %s26, 1
      %p175 = por %p173, %p174
      %p177 = scmp.ne.s32.totalorder %s162, %s176
      %p178 = scmp.eq.s32.totalorder %s26, 0
      %p179 = por %p177, %p178
      %s180 = ssub.s32 %s20, %s27
      %p181 = scmp.eq.s32.totalorder %s180, 0
      %s183 = sadd.s32 %s182, 1
      %s184 = scalar_select %p181, %s182, %s183
      %p187 = pneg %p181
      %p188 = scmp.eq.s32.totalorder %s20, 1
      %p189 = por %p187, %p188
      %p190 = scmp.ne.s32.totalorder %s182, %s185
      %p191 = scmp.eq.s32.totalorder %s20, 0
      %p192 = por %p190, %p191
      %p193 = scmp.ne.s32.totalorder %s182, %s185
      %p194 = scmp.eq.s32.totalorder %s25, 1
      %p195 = por %p193, %p194
      %p196 = scmp.ne.s32.totalorder %s185, %s186
      %p197 = scmp.eq.s32.totalorder %s25, 0
      %p198 = por %p196, %p197
      %p199 = scmp.ne.s32.totalorder %s185, %s186
      %p200 = scmp.eq.s32.totalorder %s26, 1
      %p201 = por %p199, %p200
      %p203 = scmp.ne.s32.totalorder %s186, %s202
      %p204 = scmp.eq.s32.totalorder %s26, 0
      %p205 = por %p203, %p204
      %p206 = scmp.le.s32.totalorder 1, %s20
      %p207 = scmp.lt.s32.totalorder %s20, 3
      %p208 = pnand %p206, %p207
      %p209 = pneg %p208
      // Predicated region
      $region9: #{tpu_custom_call.1} parent=5 // pred_check
        _
      $region10: #{tpu_custom_call.1} parent=5 // pred_check_branch
        %211 = sbr.rel (%p208) target = $region12
      $region11: #{tpu_custom_call.1} parent=5 // pred_region
        %s212 = ssub.s32 %s20, 1
        // Predicated region
        $region13: #{tpu_custom_call.1} parent=11 // pred_check
          %p213 = pneg %p67
        $region14: #{tpu_custom_call.1} parent=11 // pred_check_branch
          %215 = sbr.rel (%p213) target = $region16
        $region15: #{tpu_custom_call.1} parent=11 // pred_region
          _
        $region16: #{tpu_custom_call.1} parent=11 // pred_fallthru
          _
        // Predicated region
        $region17: #{tpu_custom_call.1} parent=11 // pred_check
          %p216 = pneg %p88
        $region18: #{tpu_custom_call.1} parent=11 // pred_check_branch
          %218 = sbr.rel (%p216) target = $region20
        $region19: #{tpu_custom_call.1} parent=11 // pred_region
          _
        $region20: #{tpu_custom_call.1} parent=11 // pred_fallthru
          _
        // Predicated region
        $region21: #{tpu_custom_call.1} parent=11 // pred_check
          %p219 = pneg %p109
        $region22: #{tpu_custom_call.1} parent=11 // pred_check_branch
          %221 = sbr.rel (%p219) target = $region24
        $region23: #{tpu_custom_call.1} parent=11 // pred_region
          %s223 = ssub.s32 9216, 9216
          %224 = vsyncadd [#allocation6], %s223
          %s225 = sshll.u32 [#allocation5], 4
          %s226 = int_to_ptr.vmem [resolvable:$true] %s225
          %231 = dma.hbm_to_vmem [thread:$0]  %s3, 9216, %s226, [#allocation6], 64, 64, 4
        $region24: #{tpu_custom_call.1} parent=11 // pred_fallthru
          _
        // Predicated region
        $region25: #{tpu_custom_call.1} parent=11 // pred_check
          %p232 = pneg %p130
        $region26: #{tpu_custom_call.1} parent=11 // pred_check_branch
          %234 = sbr.rel (%p232) target = $region28
        $region27: #{tpu_custom_call.1} parent=11 // pred_region
          _
        $region28: #{tpu_custom_call.1} parent=11 // pred_fallthru
          _
        // Predicated region
        $region29: #{tpu_custom_call.1} parent=11 // pred_check
          %p235 = pneg %p151
        $region30: #{tpu_custom_call.1} parent=11 // pred_check_branch
          %237 = sbr.rel (%p235) target = $region32
        $region31: #{tpu_custom_call.1} parent=11 // pred_region
          _
        $region32: #{tpu_custom_call.1} parent=11 // pred_fallthru
          _
        // Predicated region
        $region33: #{tpu_custom_call.1} parent=11 // pred_check
          %p238 = pneg %p172
        $region34: #{tpu_custom_call.1} parent=11 // pred_check_branch
          %240 = sbr.rel (%p238) target = $region36
        $region35: #{tpu_custom_call.1} parent=11 // pred_region
          _
        $region36: #{tpu_custom_call.1} parent=11 // pred_fallthru
          _
      $region12: #{tpu_custom_call.1} parent=5 // pred_fallthru
        _
      %p241 = scmp.lt.s32.totalorder %s20, 2
      // Predicated region
      $region37: #{tpu_custom_call.1} parent=5 // pred_check
        %p242 = pneg %p241
      $region38: #{tpu_custom_call.1} parent=5 // pred_check_branch
        %244 = sbr.rel (%p242) target = $region40
      $region39: #{tpu_custom_call.1} parent=5 // pred_region
        // Predicated region
        $region41: #{tpu_custom_call.1} parent=39 // pred_check
          %p245 = pneg %p40
        $region42: #{tpu_custom_call.1} parent=39 // pred_check_branch
          %247 = sbr.rel (%p245) target = $region44
        $region43: #{tpu_custom_call.1} parent=39 // pred_region
          %s248 = sand.u32 %s30, 1
          %s249 = scalar_lea.sflag [#allocation3], %s248
          %s250 = sand.u32 %s30, 1
          %s251 = smul.addr %s250, 16
          %s252 = scalar_lea.vmem [#allocation2], %s251
          %s254 = ssub.s32 256, 256
          %255 = vsyncadd %s249, %s254
          %s256 = smul.addr %s20, 2
          %s257 = smul.addr %s256, 128
          %s258 = scalar_lea.hbm %s0, %s257
          %s259 = sshll.u32 %s252, 4
          %s260 = int_to_ptr.vmem [resolvable:$true] %s259
          %265 = dma.hbm_to_vmem [thread:$0]  %s258, 256, %s260, %s249, 128, 128, 8
        $region44: #{tpu_custom_call.1} parent=39 // pred_fallthru
          _
      $region40: #{tpu_custom_call.1} parent=5 // pred_fallthru
        _
      %p266 = scmp.le.s32.totalorder 1, %s20
      %p267 = scmp.lt.s32.totalorder %s20, 3
      %p268 = pnand %p266, %p267
      %p269 = pneg %p268
      // Predicated region
      $region45: #{tpu_custom_call.1} parent=5 // pred_check
        _
      $region46: #{tpu_custom_call.1} parent=5 // pred_check_branch
        %271 = sbr.rel (%p268) target = $region48
      $region47: #{tpu_custom_call.1} parent=5 // pred_region
        %s272 = ssub.s32 %s20, 1
        %s273 = sand.u32 %s33, 1
        %s274 = scalar_lea.sflag [#allocation3], %s273
        %s275 = sand.u32 %s33, 1
        %s276 = smul.addr %s275, 16
        %s277 = scalar_lea.vmem [#allocation2], %s276
        // Predicated region
        $region49: #{tpu_custom_call.1} parent=47 // pred_check
          %p278 = pneg %p46
        $region50: #{tpu_custom_call.1} parent=47 // pred_check_branch
          %280 = sbr.rel (%p278) target = $region52
        $region51: #{tpu_custom_call.1} parent=47 // pred_region
          %281 = dma.done %s274, 256
        $region52: #{tpu_custom_call.1} parent=47 // pred_fallthru
          _
        // Predicated region
        $region53: #{tpu_custom_call.1} parent=47 // pred_check
          %p282 = pneg %p109
        $region54: #{tpu_custom_call.1} parent=47 // pred_check_branch
          %284 = sbr.rel (%p282) target = $region56
        $region55: #{tpu_custom_call.1} parent=47 // pred_region
          %285 = dma.done [#allocation6], 9216
        $region56: #{tpu_custom_call.1} parent=47 // pred_fallthru
          _
        %s286 = sand.u32 %s33, 1
        %s287 = scalar_lea.sflag [#allocation3], %s286
        %s288 = sand.u32 %s33, 1
        %s289 = smul.addr %s288, 16
        %s290 = scalar_lea.vmem [#allocation2], %s289
        %p291 = pneg %p46
        %p292 = pneg %p43
        %p293 = pneg %p67
        %p294 = pneg %p64
        %p295 = pneg %p88
        %p296 = pneg %p85
        %p297 = pneg %p109
        %p298 = pneg %p106
        %p299 = pneg %p130
        %p300 = pneg %p127
        %p301 = pneg %p151
        %p302 = pneg %p148
        %p303 = pneg %p172
        %p304 = pneg %p169
        %p305 = pneg %p198
        %p306 = pneg %p195
        %s307 = sand.u32 %s185, 1
        %s308 = scalar_lea.sflag [#allocation4], %s307
        %s309 = sand.u32 %s185, 1
        %s310 = smul.addr %s309, 16
        %s311 = scalar_lea.vmem [#allocation7], %s310
        %v313 = vld [vmem:[%s277] sm:$0xff]
        %v314 = vld [vmem:[%s277 + $0x8] sm:$0xff]
        %v315 = vlaneseq
        %v316 = vand.u32 %v315, 127
        %vm317 = vcmp.lt.s32.totalorder %v316, 48
        %318 = vadd.xlane.f32.xlu0 %v313
        %v319 = vpop.xlane.xlu0 %318
        %320 = vadd.xlane.f32.xlu0 %v314
        %v321 = vpop.xlane.xlu0 %320
        %v322 = vmul.f32 %v319, 0.020833334
        %v323 = vmul.f32 %v321, 0.020833334
        %v324 = vsub.f32 %v313, %v322
        %v325 = vsub.f32 %v314, %v323
        %v326 = vsel %vm317, 1, 0
        %vm327 = vcmp.eq.s32.totalorder %v326, 1
        %v328 = vsel %vm327, %v324, 0.0
        %v329 = vsel %vm327, %v325, 0.0
        %v330 = vmul.f32 %v328, %v328
        %v331 = vmul.f32 %v329, %v329
        %332 = vadd.xlane.f32.xlu0 %v330
        %v333 = vpop.xlane.xlu0 %332
        %334 = vadd.xlane.f32.xlu0 %v331
        %v335 = vpop.xlane.xlu0 %334
        %v336 = vmul.f32 %v333, 0.020833334
        %v337 = vmul.f32 %v335, 0.020833334
        %v338 = vadd.f32 %v336, 1e-05
        %v339 = vadd.f32 %v337, 1e-05
        %v340 = vrsqrt.pop %v338
        %v341 = vrsqrt.pop %v339
        %v342 = vmul.f32 %v328, %v340
        %v343 = vmul.f32 %v329, %v341
        %v344 = vld [vmem:[%s1] sm:$0x1]
        %v346 = vlaneseq
        %v347 = vshrl.u32 %v346, 7
        %v348 = vsub.s32 0, %v347
        %v349 = vrot.slane %v344, %v348
        %v351 = vmul.f32 %v342, %v349
        %v352 = vmul.f32 %v343, %v349
        %v353 = vld [vmem:[%s2] sm:$0x1]
        %v355 = vlaneseq
        %v356 = vshrl.u32 %v355, 7
        %v357 = vsub.s32 0, %v356
        %v358 = vrot.slane %v353, %v357
        %v360 = vadd.f32 %v351, %v358
        %v361 = vadd.f32 %v352, %v358
        %v362 = vxor.u32 %v360, 2147483648
        %v363 = vxor.u32 %v361, 2147483648
        %v364 = vmul.f32 %v362, 1.442695
        %v365 = vpow.pop %v364
        %v366 = vmul.f32 %v363, 1.442695
        %v367 = vpow.pop %v366
        %v368 = vadd.f32 %v365, 1.0
        %v369 = vadd.f32 %v367, 1.0
        %v370 = vrcp.pop %v368
        %v371 = vmul.f32 1.0, %v370
        %v372 = vrcp.pop %v369
        %v373 = vmul.f32 1.0, %v372
        %v374 = vmul.f32 %v360, %v371
        %v375 = vmul.f32 %v361, %v373
        %v376 = vpack.c.bf16 %v375, %v374
        %v377 = vld [vmem:[#allocation5] sm:$0xf]
        %v378 = vld [vmem:[#allocation5 + $0x4] sm:$0xf]
        %v379 = vld [vmem:[#allocation5 + $0x8] sm:$0xf]
        %v380 = vld [vmem:[#allocation5 + $0xc] sm:$0xf]
        %v381 = vld [vmem:[#allocation5 + $0x10] sm:$0xf]
        %v382 = vld [vmem:[#allocation5 + $0x14] sm:$0xf]
        %v383 = vld [vmem:[#allocation5 + $0x18] sm:$0xf]
        %v384 = vld [vmem:[#allocation5 + $0x1c] sm:$0xf]
        %v385 = vld [vmem:[#allocation5 + $0x20] sm:$0xf]
        %v386 = vld [vmem:[#allocation5 + $0x24] sm:$0xf]
        %v387 = vld [vmem:[#allocation5 + $0x28] sm:$0xf]
        %v388 = vld [vmem:[#allocation5 + $0x2c] sm:$0xf]
        %v389 = vld [vmem:[#allocation5 + $0x30] sm:$0xf]
        %v390 = vld [vmem:[#allocation5 + $0x34] sm:$0xf]
        %v391 = vld [vmem:[#allocation5 + $0x38] sm:$0xf]
        %v392 = vld [vmem:[#allocation5 + $0x3c] sm:$0xf]
        %v393 = vsub.f32 %v360, -2.2
        %v394 = vsub.f32 %v361, -2.2
        %v395 = vmul.f32 %v393, 2.5
        %v396 = vmul.f32 %v394, 2.5
        %v397 = vfloor.f32 %v395
        %v398 = vfloor.f32 %v396
        %v399 = vsub.f32 %v395, %v397
        %v400 = vsub.f32 %v396, %v398
        %v401 = vmul.f32 %v399, %v399
        %v402 = vmul.f32 %v400, %v400
        %v403 = vmul.f32 %v401, %v399
        %v404 = vmul.f32 %v402, %v400
        %v405 = vsub.f32 1.0, %v399
        %v406 = vsub.f32 1.0, %v400
        %v407 = vmul.f32 %v403, 0.16666667
        %v408 = vmul.f32 %v404, 0.16666667
        %v409 = vmul.f32 %v403, -3.0
        %v410 = vmul.f32 %v404, -3.0
        %v411 = vmul.f32 %v401, 3.0
        %v412 = vmul.f32 %v402, 3.0
        %v413 = vadd.f32 %v409, %v411
        %v414 = vadd.f32 %v410, %v412
        %v415 = vmul.f32 %v399, 3.0
        %v416 = vmul.f32 %v400, 3.0
        %v417 = vadd.f32 %v413, %v415
        %v418 = vadd.f32 %v414, %v416
        %v419 = vadd.f32 %v417, 1.0
        %v420 = vadd.f32 %v418, 1.0
        %v421 = vmul.f32 %v419, 0.16666667
        %v422 = vmul.f32 %v420, 0.16666667
        %v423 = vmul.f32 %v403, 3.0
        %v424 = vmul.f32 %v404, 3.0
        %v425 = vmul.f32 %v401, 6.0
        %v426 = vmul.f32 %v402, 6.0
        %v427 = vsub.f32 %v423, %v425
        %v428 = vsub.f32 %v424, %v426
        %v429 = vadd.f32 %v427, 4.0
        %v430 = vadd.f32 %v428, 4.0
        %v431 = vmul.f32 %v429, 0.16666667
        %v432 = vmul.f32 %v430, 0.16666667
        %v433 = vmul.f32 %v405, %v405
        %v434 = vmul.f32 %v406, %v406
        %v435 = vmul.f32 %v433, %v405
        %v436 = vmul.f32 %v434, %v406
        %v437 = vmul.f32 %v435, 0.16666667
        %v438 = vmul.f32 %v436, 0.16666667
        %vm439 = vcmp.eq.f32.partialorder %v397, 0.0
        %vm440 = vcmp.eq.f32.partialorder %v398, 0.0
        %vm441 = vcmp.eq.f32.partialorder %v397, 1.0
        %vm442 = vcmp.eq.f32.partialorder %v398, 1.0
        %vm443 = vcmp.eq.f32.partialorder %v397, 2.0
        %vm444 = vcmp.eq.f32.partialorder %v398, 2.0
        %vm445 = vcmp.eq.f32.partialorder %v397, 3.0
        %vm446 = vcmp.eq.f32.partialorder %v398, 3.0
        %v447 = vsel %vm445, %v437, 0.0
        %v448 = vsel %vm446, %v438, 0.0
        %v449 = vsel %vm443, %v431, %v447
        %v450 = vsel %vm444, %v432, %v448
        %v451 = vsel %vm441, %v421, %v449
        %v452 = vsel %vm442, %v422, %v450
        %v453 = vsel %vm439, %v407, %v451
        %v454 = vsel %vm440, %v408, %v452
        %v455 = vpack.c.bf16 %v454, %v453
        %v456 = vld [vmem:[#allocation5 + $0x40] sm:$0xf]
        %v457 = vld [vmem:[#allocation5 + $0x44] sm:$0xf]
        %v458 = vld [vmem:[#allocation5 + $0x48] sm:$0xf]
        %v459 = vld [vmem:[#allocation5 + $0x4c] sm:$0xf]
        %v460 = vld [vmem:[#allocation5 + $0x50] sm:$0xf]
        %v461 = vld [vmem:[#allocation5 + $0x54] sm:$0xf]
        %v462 = vld [vmem:[#allocation5 + $0x58] sm:$0xf]
        %v463 = vld [vmem:[#allocation5 + $0x5c] sm:$0xf]
        %v464 = vld [vmem:[#allocation5 + $0x60] sm:$0xf]
        %v465 = vld [vmem:[#allocation5 + $0x64] sm:$0xf]
        %v466 = vld [vmem:[#allocation5 + $0x68] sm:$0xf]
        %v467 = vld [vmem:[#allocation5 + $0x6c] sm:$0xf]
        %v468 = vld [vmem:[#allocation5 + $0x70] sm:$0xf]
        %v469 = vld [vmem:[#allocation5 + $0x74] sm:$0xf]
        %v470 = vld [vmem:[#allocation5 + $0x78] sm:$0xf]
        %v471 = vld [vmem:[#allocation5 + $0x7c] sm:$0xf]
        %v488 = vunpack.c.l.b16 %v456
        %v489 = vunpack.c.l.b16 %v457
        %v490 = vunpack.c.l.b16 %v458
        %v491 = vunpack.c.l.b16 %v459
        %v492 = vunpack.c.l.b16 %v460
        %v493 = vunpack.c.l.b16 %v461
        %v494 = vunpack.c.l.b16 %v462
        %v495 = vunpack.c.l.b16 %v463
        %v496 = vunpack.c.l.b16 %v464
        %v497 = vunpack.c.l.b16 %v465
        %v498 = vunpack.c.l.b16 %v466
        %v499 = vunpack.c.l.b16 %v467
        %v500 = vunpack.c.l.b16 %v468
        %v501 = vunpack.c.l.b16 %v469
        %v502 = vunpack.c.l.b16 %v470
        %v503 = vunpack.c.l.b16 %v471
        %v504 = vpack.c.b16 %v489, %v488
        %v505 = vpack.c.b16 %v491, %v490
        %v506 = vpack.c.b16 %v493, %v492
        %v507 = vpack.c.b16 %v495, %v494
        %v508 = vpack.c.b16 %v497, %v496
        %v509 = vpack.c.b16 %v499, %v498
        %v510 = vpack.c.b16 %v501, %v500
        %v511 = vpack.c.b16 %v503, %v502
        %520 = vmatprep.subr.bf16.mxu0 0
        %521 = vmatpush1.bf16.msra.mxu0 %v504
        %522 = vmatprep.subr.bf16.mxu0 0
        %523 = vmatpush1.bf16.msra.mxu0 %v505
        %524 = vmatprep.subr.bf16.mxu0 0
        %525 = vmatpush1.bf16.msra.mxu0 %v506
        %526 = vmatprep.subr.bf16.mxu0 0
        %527 = vmatpush1.bf16.msra.mxu0 %v507
        %528 = vmatprep.subr.bf16.mxu0 0
        %529 = vmatpush1.bf16.msra.mxu0 %v508
        %530 = vmatprep.subr.bf16.mxu0 0
        %531 = vmatpush1.bf16.msra.mxu0 %v509
        %532 = vmatprep.subr.bf16.mxu0 0
        %533 = vmatpush1.bf16.msra.mxu0 %v510
        %534 = vmatprep.subr.bf16.mxu0 0
        %535 = vmatpush1.bf16.msra.mxu0 %v511
        %536 = vmatprep.subr.bf16.mxu0 0
        %537 = vmatpush1.bf16.msra.mxu0 0
        %538 = vmatprep.subr.bf16.mxu0 0
        %539 = vmatpush1.bf16.msra.mxu0 0
        %540 = vmatprep.subr.bf16.mxu0 0
        %541 = vmatpush1.bf16.msra.mxu0 0
        %542 = vmatprep.subr.bf16.mxu0 0
        %543 = vmatpush1.bf16.msra.mxu0 0
        %544 = vmatprep.subr.bf16.mxu0 0
        %545 = vmatpush1.bf16.msra.mxu0 0
        %546 = vmatprep.subr.bf16.mxu0 0
        %547 = vmatpush1.bf16.msra.mxu0 0
        %548 = vmatprep.subr.bf16.mxu0 0
        %549 = vmatpush1.bf16.msra.mxu0 0
        %550 = vmatprep.subr.bf16.mxu0 0
        %551 = vmatpush1.bf16.msra.mxu0 0
        %552 = vmatprep.mubr.bf16.mxu0 0
        %553 = vmatmul.mubr.bf16.gmra.mrb[0].mxu0 %v455
        %v554 = vpop.f32.mrb[0].mxu0
        %v555 = vadd.f32 0.0, %v554
        %v556 = vpop.f32.mrb[0].mxu0
        %v557 = vpop.f32.mrb[0].mxu0
        %v558 = vadd.f32 0.0, %v557
        %v559 = vpop.f32.mrb[0].mxu0
        %560 = vdwg.mxu0
        %v577 = vunpack.c.l.b16 %v377
        %v578 = vunpack.c.l.b16 %v378
        %v579 = vunpack.c.l.b16 %v379
        %v580 = vunpack.c.l.b16 %v380
        %v581 = vunpack.c.l.b16 %v381
        %v582 = vunpack.c.l.b16 %v382
        %v583 = vunpack.c.l.b16 %v383
        %v584 = vunpack.c.l.b16 %v384
        %v585 = vunpack.c.l.b16 %v385
        %v586 = vunpack.c.l.b16 %v386
        %v587 = vunpack.c.l.b16 %v387
        %v588 = vunpack.c.l.b16 %v388
        %v589 = vunpack.c.l.b16 %v389
        %v590 = vunpack.c.l.b16 %v390
        %v591 = vunpack.c.l.b16 %v391
        %v592 = vunpack.c.l.b16 %v392
        %v593 = vpack.c.b16 %v578, %v577
        %v594 = vpack.c.b16 %v580, %v579
        %v595 = vpack.c.b16 %v582, %v581
        %v596 = vpack.c.b16 %v584, %v583
        %v597 = vpack.c.b16 %v586, %v585
        %v598 = vpack.c.b16 %v588, %v587
        %v599 = vpack.c.b16 %v590, %v589
        %v600 = vpack.c.b16 %v592, %v591
        %609 = vmatprep.subr.bf16.mxu0 0
        %610 = vmatpush1.bf16.msra.mxu0 %v593
        %611 = vmatprep.subr.bf16.mxu0 0
        %612 = vmatpush1.bf16.msra.mxu0 %v594
        %613 = vmatprep.subr.bf16.mxu0 0
        %614 = vmatpush1.bf16.msra.mxu0 %v595
        %615 = vmatprep.subr.bf16.mxu0 0
        %616 = vmatpush1.bf16.msra.mxu0 %v596
        %617 = vmatprep.subr.bf16.mxu0 0
        %618 = vmatpush1.bf16.msra.mxu0 %v597
        %619 = vmatprep.subr.bf16.mxu0 0
        %620 = vmatpush1.bf16.msra.mxu0 %v598
        %621 = vmatprep.subr.bf16.mxu0 0
        %622 = vmatpush1.bf16.msra.mxu0 %v599
        %623 = vmatprep.subr.bf16.mxu0 0
        %624 = vmatpush1.bf16.msra.mxu0 %v600
        %625 = vmatprep.subr.bf16.mxu0 0
        %626 = vmatpush1.bf16.msra.mxu0 0
        %627 = vmatprep.subr.bf16.mxu0 0
        %628 = vmatpush1.bf16.msra.mxu0 0
        %629 = vmatprep.subr.bf16.mxu0 0
        %630 = vmatpush1.bf16.msra.mxu0 0
        %631 = vmatprep.subr.bf16.mxu0 0
        %632 = vmatpush1.bf16.msra.mxu0 0
        %633 = vmatprep.subr.bf16.mxu0 0
        %634 = vmatpush1.bf16.msra.mxu0 0
        %635 = vmatprep.subr.bf16.mxu0 0
        %636 = vmatpush1.bf16.msra.mxu0 0
        %637 = vmatprep.subr.bf16.mxu0 0
        %638 = vmatpush1.bf16.msra.mxu0 0
        %639 = vmatprep.subr.bf16.mxu0 0
        %640 = vmatpush1.bf16.msra.mxu0 0
        %641 = vmatprep.mubr.bf16.mxu0 0
        %642 = vmatmul.mubr.bf16.gmra.mrb[0].mxu0 %v376
        %v643 = vpop.f32.mrb[0].mxu0
        %v644 = vadd.f32 %v555, %v643
        %v645 = vpop.f32.mrb[0].mxu0
        %v646 = vpop.f32.mrb[0].mxu0
        %v647 = vadd.f32 %v558, %v646
        %v648 = vpop.f32.mrb[0].mxu0
        %649 = vdwg.mxu0
        %vm650 = vcmp.eq.f32.partialorder %v397, 4.0
        %vm651 = vcmp.eq.f32.partialorder %v398, 4.0
        %v652 = vsel %vm650, %v437, 0.0
        %v653 = vsel %vm651, %v438, 0.0
        %v654 = vsel %vm445, %v431, %v652
        %v655 = vsel %vm446, %v432, %v653
        %v656 = vsel %vm443, %v421, %v654
        %v657 = vsel %vm444, %v422, %v655
        %v658 = vsel %vm441, %v407, %v656
        %v659 = vsel %vm442, %v408, %v657
        %v660 = vpack.c.bf16 %v659, %v658
        %v661 = vld [vmem:[#allocation5 + $0x80] sm:$0xf]
        %v662 = vld [vmem:[#allocation5 + $0x84] sm:$0xf]
        %v663 = vld [vmem:[#allocation5 + $0x88] sm:$0xf]
        %v664 = vld [vmem:[#allocation5 + $0x8c] sm:$0xf]
        %v665 = vld [vmem:[#allocation5 + $0x90] sm:$0xf]
        %v666 = vld [vmem:[#allocation5 + $0x94] sm:$0xf]
        %v667 = vld [vmem:[#allocation5 + $0x98] sm:$0xf]
        %v668 = vld [vmem:[#allocation5 + $0x9c] sm:$0xf]
        %v669 = vld [vmem:[#allocation5 + $0xa0] sm:$0xf]
        %v670 = vld [vmem:[#allocation5 + $0xa4] sm:$0xf]
        %v671 = vld [vmem:[#allocation5 + $0xa8] sm:$0xf]
        %v672 = vld [vmem:[#allocation5 + $0xac] sm:$0xf]
        %v673 = vld [vmem:[#allocation5 + $0xb0] sm:$0xf]
        %v674 = vld [vmem:[#allocation5 + $0xb4] sm:$0xf]
        %v675 = vld [vmem:[#allocation5 + $0xb8] sm:$0xf]
        %v676 = vld [vmem:[#allocation5 + $0xbc] sm:$0xf]
        %v693 = vunpack.c.l.b16 %v661
        %v694 = vunpack.c.l.b16 %v662
        %v695 = vunpack.c.l.b16 %v663
        %v696 = vunpack.c.l.b16 %v664
        %v697 = vunpack.c.l.b16 %v665
        %v698 = vunpack.c.l.b16 %v666
        %v699 = vunpack.c.l.b16 %v667
        %v700 = vunpack.c.l.b16 %v668
        %v701 = vunpack.c.l.b16 %v669
        %v702 = vunpack.c.l.b16 %v670
        %v703 = vunpack.c.l.b16 %v671
        %v704 = vunpack.c.l.b16 %v672
        %v705 = vunpack.c.l.b16 %v673
        %v706 = vunpack.c.l.b16 %v674
        %v707 = vunpack.c.l.b16 %v675
        %v708 = vunpack.c.l.b16 %v676
        %v709 = vpack.c.b16 %v694, %v693
        %v710 = vpack.c.b16 %v696, %v695
        %v711 = vpack.c.b16 %v698, %v697
        %v712 = vpack.c.b16 %v700, %v699
        %v713 = vpack.c.b16 %v702, %v701
        %v714 = vpack.c.b16 %v704, %v703
        %v715 = vpack.c.b16 %v706, %v705
        %v716 = vpack.c.b16 %v708, %v707
        %725 = vmatprep.subr.bf16.mxu0 0
        %726 = vmatpush1.bf16.msra.mxu0 %v709
        %727 = vmatprep.subr.bf16.mxu0 0
        %728 = vmatpush1.bf16.msra.mxu0 %v710
        %729 = vmatprep.subr.bf16.mxu0 0
        %730 = vmatpush1.bf16.msra.mxu0 %v711
        %731 = vmatprep.subr.bf16.mxu0 0
        %732 = vmatpush1.bf16.msra.mxu0 %v712
        %733 = vmatprep.subr.bf16.mxu0 0
        %734 = vmatpush1.bf16.msra.mxu0 %v713
        %735 = vmatprep.subr.bf16.mxu0 0
        %736 = vmatpush1.bf16.msra.mxu0 %v714
        %737 = vmatprep.subr.bf16.mxu0 0
        %738 = vmatpush1.bf16.msra.mxu0 %v715
        %739 = vmatprep.subr.bf16.mxu0 0
        %740 = vmatpush1.bf16.msra.mxu0 %v716
        %741 = vmatprep.subr.bf16.mxu0 0
        %742 = vmatpush1.bf16.msra.mxu0 0
        %743 = vmatprep.subr.bf16.mxu0 0
        %744 = vmatpush1.bf16.msra.mxu0 0
        %745 = vmatprep.subr.bf16.mxu0 0
        %746 = vmatpush1.bf16.msra.mxu0 0
        %747 = vmatprep.subr.bf16.mxu0 0
        %748 = vmatpush1.bf16.msra.mxu0 0
        %749 = vmatprep.subr.bf16.mxu0 0
        %750 = vmatpush1.bf16.msra.mxu0 0
        %751 = vmatprep.subr.bf16.mxu0 0
        %752 = vmatpush1.bf16.msra.mxu0 0
        %753 = vmatprep.subr.bf16.mxu0 0
        %754 = vmatpush1.bf16.msra.mxu0 0
        %755 = vmatprep.subr.bf16.mxu0 0
        %756 = vmatpush1.bf16.msra.mxu0 0
        %757 = vmatprep.mubr.bf16.mxu0 0
        %758 = vmatmul.mubr.bf16.gmra.mrb[0].mxu0 %v660
        %v759 = vpop.f32.mrb[0].mxu0
        %v760 = vadd.f32 0.0, %v759
        %v761 = vpop.f32.mrb[0].mxu0
        %v762 = vpop.f32.mrb[0].mxu0
        %v763 = vadd.f32 0.0, %v762
        %v764 = vpop.f32.mrb[0].mxu0
        %765 = vdwg.mxu0
        %v766 = vadd.f32 %v644, %v760
        %v767 = vadd.f32 %v647, %v763
        %vm768 = vcmp.eq.f32.partialorder %v397, 5.0
        %vm769 = vcmp.eq.f32.partialorder %v398, 5.0
        %v770 = vsel %vm768, %v437, 0.0
        %v771 = vsel %vm769, %v438, 0.0
        %v772 = vsel %vm650, %v431, %v770
        %v773 = vsel %vm651, %v432, %v771
        %v774 = vsel %vm445, %v421, %v772
        %v775 = vsel %vm446, %v422, %v773
        %v776 = vsel %vm443, %v407, %v774
        %v777 = vsel %vm444, %v408, %v775
        %v778 = vpack.c.bf16 %v777, %v776
        %v779 = vld [vmem:[#allocation5 + $0xc0] sm:$0xf]
        %v780 = vld [vmem:[#allocation5 + $0xc4] sm:$0xf]
        %v781 = vld [vmem:[#allocation5 + $0xc8] sm:$0xf]
        %v782 = vld [vmem:[#allocation5 + $0xcc] sm:$0xf]
        %v783 = vld [vmem:[#allocation5 + $0xd0] sm:$0xf]
        %v784 = vld [vmem:[#allocation5 + $0xd4] sm:$0xf]
        %v785 = vld [vmem:[#allocation5 + $0xd8] sm:$0xf]
        %v786 = vld [vmem:[#allocation5 + $0xdc] sm:$0xf]
        %v787 = vld [vmem:[#allocation5 + $0xe0] sm:$0xf]
        %v788 = vld [vmem:[#allocation5 + $0xe4] sm:$0xf]
        %v789 = vld [vmem:[#allocation5 + $0xe8] sm:$0xf]
        %v790 = vld [vmem:[#allocation5 + $0xec] sm:$0xf]
        %v791 = vld [vmem:[#allocation5 + $0xf0] sm:$0xf]
        %v792 = vld [vmem:[#allocation5 + $0xf4] sm:$0xf]
        %v793 = vld [vmem:[#allocation5 + $0xf8] sm:$0xf]
        %v794 = vld [vmem:[#allocation5 + $0xfc] sm:$0xf]
        %v811 = vunpack.c.l.b16 %v779
        %v812 = vunpack.c.l.b16 %v780
        %v813 = vunpack.c.l.b16 %v781
        %v814 = vunpack.c.l.b16 %v782
        %v815 = vunpack.c.l.b16 %v783
        %v816 = vunpack.c.l.b16 %v784
        %v817 = vunpack.c.l.b16 %v785
        %v818 = vunpack.c.l.b16 %v786
        %v819 = vunpack.c.l.b16 %v787
        %v820 = vunpack.c.l.b16 %v788
        %v821 = vunpack.c.l.b16 %v789
        %v822 = vunpack.c.l.b16 %v790
        %v823 = vunpack.c.l.b16 %v791
        %v824 = vunpack.c.l.b16 %v792
        %v825 = vunpack.c.l.b16 %v793
        %v826 = vunpack.c.l.b16 %v794
        %v827 = vpack.c.b16 %v812, %v811
        %v828 = vpack.c.b16 %v814, %v813
        %v829 = vpack.c.b16 %v816, %v815
        %v830 = vpack.c.b16 %v818, %v817
        %v831 = vpack.c.b16 %v820, %v819
        %v832 = vpack.c.b16 %v822, %v821
        %v833 = vpack.c.b16 %v824, %v823
        %v834 = vpack.c.b16 %v826, %v825
        %843 = vmatprep.subr.bf16.mxu0 0
        %844 = vmatpush1.bf16.msra.mxu0 %v827
        %845 = vmatprep.subr.bf16.mxu0 0
        %846 = vmatpush1.bf16.msra.mxu0 %v828
        %847 = vmatprep.subr.bf16.mxu0 0
        %848 = vmatpush1.bf16.msra.mxu0 %v829
        %849 = vmatprep.subr.bf16.mxu0 0
        %850 = vmatpush1.bf16.msra.mxu0 %v830
        %851 = vmatprep.subr.bf16.mxu0 0
        %852 = vmatpush1.bf16.msra.mxu0 %v831
        %853 = vmatprep.subr.bf16.mxu0 0
        %854 = vmatpush1.bf16.msra.mxu0 %v832
        %855 = vmatprep.subr.bf16.mxu0 0
        %856 = vmatpush1.bf16.msra.mxu0 %v833
        %857 = vmatprep.subr.bf16.mxu0 0
        %858 = vmatpush1.bf16.msra.mxu0 %v834
        %859 = vmatprep.subr.bf16.mxu0 0
        %860 = vmatpush1.bf16.msra.mxu0 0
        %861 = vmatprep.subr.bf16.mxu0 0
        %862 = vmatpush1.bf16.msra.mxu0 0
        %863 = vmatprep.subr.bf16.mxu0 0
        %864 = vmatpush1.bf16.msra.mxu0 0
        %865 = vmatprep.subr.bf16.mxu0 0
        %866 = vmatpush1.bf16.msra.mxu0 0
        %867 = vmatprep.subr.bf16.mxu0 0
        %868 = vmatpush1.bf16.msra.mxu0 0
        %869 = vmatprep.subr.bf16.mxu0 0
        %870 = vmatpush1.bf16.msra.mxu0 0
        %871 = vmatprep.subr.bf16.mxu0 0
        %872 = vmatpush1.bf16.msra.mxu0 0
        %873 = vmatprep.subr.bf16.mxu0 0
        %874 = vmatpush1.bf16.msra.mxu0 0
        %875 = vmatprep.mubr.bf16.mxu0 0
        %876 = vmatmul.mubr.bf16.gmra.mrb[0].mxu0 %v778
        %v877 = vpop.f32.mrb[0].mxu0
        %v878 = vadd.f32 0.0, %v877
        %v879 = vpop.f32.mrb[0].mxu0
        %v880 = vpop.f32.mrb[0].mxu0
        %v881 = vadd.f32 0.0, %v880
        %v882 = vpop.f32.mrb[0].mxu0
        %883 = vdwg.mxu0
        %v884 = vadd.f32 %v766, %v878
        %v885 = vadd.f32 %v767, %v881
        %vm886 = vcmp.eq.f32.partialorder %v397, 6.0
        %vm887 = vcmp.eq.f32.partialorder %v398, 6.0
        %v888 = vsel %vm886, %v437, 0.0
        %v889 = vsel %vm887, %v438, 0.0
        %v890 = vsel %vm768, %v431, %v888
        %v891 = vsel %vm769, %v432, %v889
        %v892 = vsel %vm650, %v421, %v890
        %v893 = vsel %vm651, %v422, %v891
        %v894 = vsel %vm445, %v407, %v892
        %v895 = vsel %vm446, %v408, %v893
        %v896 = vpack.c.bf16 %v895, %v894
        %v897 = vld [vmem:[#allocation5 + $0x100] sm:$0xf]
        %v898 = vld [vmem:[#allocation5 + $0x104] sm:$0xf]
        %v899 = vld [vmem:[#allocation5 + $0x108] sm:$0xf]
        %v900 = vld [vmem:[#allocation5 + $0x10c] sm:$0xf]
        %v901 = vld [vmem:[#allocation5 + $0x110] sm:$0xf]
        %v902 = vld [vmem:[#allocation5 + $0x114] sm:$0xf]
        %v903 = vld [vmem:[#allocation5 + $0x118] sm:$0xf]
        %v904 = vld [vmem:[#allocation5 + $0x11c] sm:$0xf]
        %v905 = vld [vmem:[#allocation5 + $0x120] sm:$0xf]
        %v906 = vld [vmem:[#allocation5 + $0x124] sm:$0xf]
        %v907 = vld [vmem:[#allocation5 + $0x128] sm:$0xf]
        %v908 = vld [vmem:[#allocation5 + $0x12c] sm:$0xf]
        %v909 = vld [vmem:[#allocation5 + $0x130] sm:$0xf]
        %v910 = vld [vmem:[#allocation5 + $0x134] sm:$0xf]
        %v911 = vld [vmem:[#allocation5 + $0x138] sm:$0xf]
        %v912 = vld [vmem:[#allocation5 + $0x13c] sm:$0xf]
        %v929 = vunpack.c.l.b16 %v897
        %v930 = vunpack.c.l.b16 %v898
        %v931 = vunpack.c.l.b16 %v899
        %v932 = vunpack.c.l.b16 %v900
        %v933 = vunpack.c.l.b16 %v901
        %v934 = vunpack.c.l.b16 %v902
        %v935 = vunpack.c.l.b16 %v903
        %v936 = vunpack.c.l.b16 %v904
        %v937 = vunpack.c.l.b16 %v905
        %v938 = vunpack.c.l.b16 %v906
        %v939 = vunpack.c.l.b16 %v907
        %v940 = vunpack.c.l.b16 %v908
        %v941 = vunpack.c.l.b16 %v909
        %v942 = vunpack.c.l.b16 %v910
        %v943 = vunpack.c.l.b16 %v911
        %v944 = vunpack.c.l.b16 %v912
        %v945 = vpack.c.b16 %v930, %v929
        %v946 = vpack.c.b16 %v932, %v931
        %v947 = vpack.c.b16 %v934, %v933
        %v948 = vpack.c.b16 %v936, %v935
        %v949 = vpack.c.b16 %v938, %v937
        %v950 = vpack.c.b16 %v940, %v939
        %v951 = vpack.c.b16 %v942, %v941
        %v952 = vpack.c.b16 %v944, %v943
        %961 = vmatprep.subr.bf16.mxu0 0
        %962 = vmatpush1.bf16.msra.mxu0 %v945
        %963 = vmatprep.subr.bf16.mxu0 0
        %964 = vmatpush1.bf16.msra.mxu0 %v946
        %965 = vmatprep.subr.bf16.mxu0 0
        %966 = vmatpush1.bf16.msra.mxu0 %v947
        %967 = vmatprep.subr.bf16.mxu0 0
        %968 = vmatpush1.bf16.msra.mxu0 %v948
        %969 = vmatprep.subr.bf16.mxu0 0
        %970 = vmatpush1.bf16.msra.mxu0 %v949
        %971 = vmatprep.subr.bf16.mxu0 0
        %972 = vmatpush1.bf16.msra.mxu0 %v950
        %973 = vmatprep.subr.bf16.mxu0 0
        %974 = vmatpush1.bf16.msra.mxu0 %v951
        %975 = vmatprep.subr.bf16.mxu0 0
        %976 = vmatpush1.bf16.msra.mxu0 %v952
        %977 = vmatprep.subr.bf16.mxu0 0
        %978 = vmatpush1.bf16.msra.mxu0 0
        %979 = vmatprep.subr.bf16.mxu0 0
        %980 = vmatpush1.bf16.msra.mxu0 0
        %981 = vmatprep.subr.bf16.mxu0 0
        %982 = vmatpush1.bf16.msra.mxu0 0
        %983 = vmatprep.subr.bf16.mxu0 0
        %984 = vmatpush1.bf16.msra.mxu0 0
        %985 = vmatprep.subr.bf16.mxu0 0
        %986 = vmatpush1.bf16.msra.mxu0 0
        %987 = vmatprep.subr.bf16.mxu0 0
        %988 = vmatpush1.bf16.msra.mxu0 0
        %989 = vmatprep.subr.bf16.mxu0 0
        %990 = vmatpush1.bf16.msra.mxu0 0
        %991 = vmatprep.subr.bf16.mxu0 0
        %992 = vmatpush1.bf16.msra.mxu0 0
        %993 = vmatprep.mubr.bf16.mxu0 0
        %994 = vmatmul.mubr.bf16.gmra.mrb[0].mxu0 %v896
        %v995 = vpop.f32.mrb[0].mxu0
        %v996 = vadd.f32 0.0, %v995
        %v997 = vpop.f32.mrb[0].mxu0
        %v998 = vpop.f32.mrb[0].mxu0
        %v999 = vadd.f32 0.0, %v998
        %v1000 = vpop.f32.mrb[0].mxu0
        %1001 = vdwg.mxu0
        %v1002 = vadd.f32 %v884, %v996
        %v1003 = vadd.f32 %v885, %v999
        %vm1004 = vcmp.eq.f32.partialorder %v397, 7.0
        %vm1005 = vcmp.eq.f32.partialorder %v398, 7.0
        %v1006 = vsel %vm1004, %v437, 0.0
        %v1007 = vsel %vm1005, %v438, 0.0
        %v1008 = vsel %vm886, %v431, %v1006
        %v1009 = vsel %vm887, %v432, %v1007
        %v1010 = vsel %vm768, %v421, %v1008
        %v1011 = vsel %vm769, %v422, %v1009
        %v1012 = vsel %vm650, %v407, %v1010
        %v1013 = vsel %vm651, %v408, %v1011
        %v1014 = vpack.c.bf16 %v1013, %v1012
        %v1015 = vld [vmem:[#allocation5 + $0x140] sm:$0xf]
        %v1016 = vld [vmem:[#allocation5 + $0x144] sm:$0xf]
        %v1017 = vld [vmem:[#allocation5 + $0x148] sm:$0xf]
        %v1018 = vld [vmem:[#allocation5 + $0x14c] sm:$0xf]
        %v1019 = vld [vmem:[#allocation5 + $0x150] sm:$0xf]
        %v1020 = vld [vmem:[#allocation5 + $0x154] sm:$0xf]
        %v1021 = vld [vmem:[#allocation5 + $0x158] sm:$0xf]
        %v1022 = vld [vmem:[#allocation5 + $0x15c] sm:$0xf]
        %v1023 = vld [vmem:[#allocation5 + $0x160] sm:$0xf]
        %v1024 = vld [vmem:[#allocation5 + $0x164] sm:$0xf]
        %v1025 = vld [vmem:[#allocation5 + $0x168] sm:$0xf]
        %v1026 = vld [vmem:[#allocation5 + $0x16c] sm:$0xf]
        %v1027 = vld [vmem:[#allocation5 + $0x170] sm:$0xf]
        %v1028 = vld [vmem:[#allocation5 + $0x174] sm:$0xf]
        %v1029 = vld [vmem:[#allocation5 + $0x178] sm:$0xf]
        %v1030 = vld [vmem:[#allocation5 + $0x17c] sm:$0xf]
        %v1047 = vunpack.c.l.b16 %v1015
        %v1048 = vunpack.c.l.b16 %v1016
        %v1049 = vunpack.c.l.b16 %v1017
        %v1050 = vunpack.c.l.b16 %v1018
        %v1051 = vunpack.c.l.b16 %v1019
        %v1052 = vunpack.c.l.b16 %v1020
        %v1053 = vunpack.c.l.b16 %v1021
        %v1054 = vunpack.c.l.b16 %v1022
        %v1055 = vunpack.c.l.b16 %v1023
        %v1056 = vunpack.c.l.b16 %v1024
        %v1057 = vunpack.c.l.b16 %v1025
        %v1058 = vunpack.c.l.b16 %v1026
        %v1059 = vunpack.c.l.b16 %v1027
        %v1060 = vunpack.c.l.b16 %v1028
        %v1061 = vunpack.c.l.b16 %v1029
        %v1062 = vunpack.c.l.b16 %v1030
        %v1063 = vpack.c.b16 %v1048, %v1047
        %v1064 = vpack.c.b16 %v1050, %v1049
        %v1065 = vpack.c.b16 %v1052, %v1051
        %v1066 = vpack.c.b16 %v1054, %v1053
        %v1067 = vpack.c.b16 %v1056, %v1055
        %v1068 = vpack.c.b16 %v1058, %v1057
        %v1069 = vpack.c.b16 %v1060, %v1059
        %v1070 = vpack.c.b16 %v1062, %v1061
        %1079 = vmatprep.subr.bf16.mxu0 0
        %1080 = vmatpush1.bf16.msra.mxu0 %v1063
        %1081 = vmatprep.subr.bf16.mxu0 0
        %1082 = vmatpush1.bf16.msra.mxu0 %v1064
        %1083 = vmatprep.subr.bf16.mxu0 0
        %1084 = vmatpush1.bf16.msra.mxu0 %v1065
        %1085 = vmatprep.subr.bf16.mxu0 0
        %1086 = vmatpush1.bf16.msra.mxu0 %v1066
        %1087 = vmatprep.subr.bf16.mxu0 0
        %1088 = vmatpush1.bf16.msra.mxu0 %v1067
        %1089 = vmatprep.subr.bf16.mxu0 0
        %1090 = vmatpush1.bf16.msra.mxu0 %v1068
        %1091 = vmatprep.subr.bf16.mxu0 0
        %1092 = vmatpush1.bf16.msra.mxu0 %v1069
        %1093 = vmatprep.subr.bf16.mxu0 0
        %1094 = vmatpush1.bf16.msra.mxu0 %v1070
        %1095 = vmatprep.subr.bf16.mxu0 0
        %1096 = vmatpush1.bf16.msra.mxu0 0
        %1097 = vmatprep.subr.bf16.mxu0 0
        %1098 = vmatpush1.bf16.msra.mxu0 0
        %1099 = vmatprep.subr.bf16.mxu0 0
        %1100 = vmatpush1.bf16.msra.mxu0 0
        %1101 = vmatprep.subr.bf16.mxu0 0
        %1102 = vmatpush1.bf16.msra.mxu0 0
        %1103 = vmatprep.subr.bf16.mxu0 0
        %1104 = vmatpush1.bf16.msra.mxu0 0
        %1105 = vmatprep.subr.bf16.mxu0 0
        %1106 = vmatpush1.bf16.msra.mxu0 0
        %1107 = vmatprep.subr.bf16.mxu0 0
        %1108 = vmatpush1.bf16.msra.mxu0 0
        %1109 = vmatprep.subr.bf16.mxu0 0
        %1110 = vmatpush1.bf16.msra.mxu0 0
        %1111 = vmatprep.mubr.bf16.mxu0 0
        %1112 = vmatmul.mubr.bf16.gmra.mrb[0].mxu0 %v1014
        %v1113 = vpop.f32.mrb[0].mxu0
        %v1114 = vadd.f32 0.0, %v1113
        %v1115 = vpop.f32.mrb[0].mxu0
        %v1116 = vpop.f32.mrb[0].mxu0
        %v1117 = vadd.f32 0.0, %v1116
        %v1118 = vpop.f32.mrb[0].mxu0
        %1119 = vdwg.mxu0
        %v1120 = vadd.f32 %v1002, %v1114
        %v1121 = vadd.f32 %v1003, %v1117
        %vm1122 = vcmp.eq.f32.partialorder %v397, 8.0
        %vm1123 = vcmp.eq.f32.partialorder %v398, 8.0
        %v1124 = vsel %vm1122, %v437, 0.0
        %v1125 = vsel %vm1123, %v438, 0.0
        %v1126 = vsel %vm1004, %v431, %v1124
        %v1127 = vsel %vm1005, %v432, %v1125
        %v1128 = vsel %vm886, %v421, %v1126
        %v1129 = vsel %vm887, %v422, %v1127
        %v1130 = vsel %vm768, %v407, %v1128
        %v1131 = vsel %vm769, %v408, %v1129
        %v1132 = vpack.c.bf16 %v1131, %v1130
        %v1133 = vld [vmem:[#allocation5 + $0x180] sm:$0xf]
        %v1134 = vld [vmem:[#allocation5 + $0x184] sm:$0xf]
        %v1135 = vld [vmem:[#allocation5 + $0x188] sm:$0xf]
        %v1136 = vld [vmem:[#allocation5 + $0x18c] sm:$0xf]
        %v1137 = vld [vmem:[#allocation5 + $0x190] sm:$0xf]
        %v1138 = vld [vmem:[#allocation5 + $0x194] sm:$0xf]
        %v1139 = vld [vmem:[#allocation5 + $0x198] sm:$0xf]
        %v1140 = vld [vmem:[#allocation5 + $0x19c] sm:$0xf]
        %v1141 = vld [vmem:[#allocation5 + $0x1a0] sm:$0xf]
        %v1142 = vld [vmem:[#allocation5 + $0x1a4] sm:$0xf]
        %v1143 = vld [vmem:[#allocation5 + $0x1a8] sm:$0xf]
        %v1144 = vld [vmem:[#allocation5 + $0x1ac] sm:$0xf]
        %v1145 = vld [vmem:[#allocation5 + $0x1b0] sm:$0xf]
        %v1146 = vld [vmem:[#allocation5 + $0x1b4] sm:$0xf]
        %v1147 = vld [vmem:[#allocation5 + $0x1b8] sm:$0xf]
        %v1148 = vld [vmem:[#allocation5 + $0x1bc] sm:$0xf]
        %v1165 = vunpack.c.l.b16 %v1133
        %v1166 = vunpack.c.l.b16 %v1134
        %v1167 = vunpack.c.l.b16 %v1135
        %v1168 = vunpack.c.l.b16 %v1136
        %v1169 = vunpack.c.l.b16 %v1137
        %v1170 = vunpack.c.l.b16 %v1138
        %v1171 = vunpack.c.l.b16 %v1139
        %v1172 = vunpack.c.l.b16 %v1140
        %v1173 = vunpack.c.l.b16 %v1141
        %v1174 = vunpack.c.l.b16 %v1142
        %v1175 = vunpack.c.l.b16 %v1143
        %v1176 = vunpack.c.l.b16 %v1144
        %v1177 = vunpack.c.l.b16 %v1145
        %v1178 = vunpack.c.l.b16 %v1146
        %v1179 = vunpack.c.l.b16 %v1147
        %v1180 = vunpack.c.l.b16 %v1148
        %v1181 = vpack.c.b16 %v1166, %v1165
        %v1182 = vpack.c.b16 %v1168, %v1167
        %v1183 = vpack.c.b16 %v1170, %v1169
        %v1184 = vpack.c.b16 %v1172, %v1171
        %v1185 = vpack.c.b16 %v1174, %v1173
        %v1186 = vpack.c.b16 %v1176, %v1175
        %v1187 = vpack.c.b16 %v1178, %v1177
        %v1188 = vpack.c.b16 %v1180, %v1179
        %1197 = vmatprep.subr.bf16.mxu0 0
        %1198 = vmatpush1.bf16.msra.mxu0 %v1181
        %1199 = vmatprep.subr.bf16.mxu0 0
        %1200 = vmatpush1.bf16.msra.mxu0 %v1182
        %1201 = vmatprep.subr.bf16.mxu0 0
        %1202 = vmatpush1.bf16.msra.mxu0 %v1183
        %1203 = vmatprep.subr.bf16.mxu0 0
        %1204 = vmatpush1.bf16.msra.mxu0 %v1184
        %1205 = vmatprep.subr.bf16.mxu0 0
        %1206 = vmatpush1.bf16.msra.mxu0 %v1185
        %1207 = vmatprep.subr.bf16.mxu0 0
        %1208 = vmatpush1.bf16.msra.mxu0 %v1186
        %1209 = vmatprep.subr.bf16.mxu0 0
        %1210 = vmatpush1.bf16.msra.mxu0 %v1187
        %1211 = vmatprep.subr.bf16.mxu0 0
        %1212 = vmatpush1.bf16.msra.mxu0 %v1188
        %1213 = vmatprep.subr.bf16.mxu0 0
        %1214 = vmatpush1.bf16.msra.mxu0 0
        %1215 = vmatprep.subr.bf16.mxu0 0
        %1216 = vmatpush1.bf16.msra.mxu0 0
        %1217 = vmatprep.subr.bf16.mxu0 0
        %1218 = vmatpush1.bf16.msra.mxu0 0
        %1219 = vmatprep.subr.bf16.mxu0 0
        %1220 = vmatpush1.bf16.msra.mxu0 0
        %1221 = vmatprep.subr.bf16.mxu0 0
        %1222 = vmatpush1.bf16.msra.mxu0 0
        %1223 = vmatprep.subr.bf16.mxu0 0
        %1224 = vmatpush1.bf16.msra.mxu0 0
        %1225 = vmatprep.subr.bf16.mxu0 0
        %1226 = vmatpush1.bf16.msra.mxu0 0
        %1227 = vmatprep.subr.bf16.mxu0 0
        %1228 = vmatpush1.bf16.msra.mxu0 0
        %1229 = vmatprep.mubr.bf16.mxu0 0
        %1230 = vmatmul.mubr.bf16.gmra.mrb[0].mxu0 %v1132
        %v1231 = vpop.f32.mrb[0].mxu0
        %v1232 = vadd.f32 0.0, %v1231
        %v1233 = vpop.f32.mrb[0].mxu0
        %v1234 = vpop.f32.mrb[0].mxu0
        %v1235 = vadd.f32 0.0, %v1234
        %v1236 = vpop.f32.mrb[0].mxu0
        %1237 = vdwg.mxu0
        %v1238 = vadd.f32 %v1120, %v1232
        %v1239 = vadd.f32 %v1121, %v1235
        %vm1240 = vcmp.eq.f32.partialorder %v397, 9.0
        %vm1241 = vcmp.eq.f32.partialorder %v398, 9.0
        %v1242 = vsel %vm1240, %v437, 0.0
        %v1243 = vsel %vm1241, %v438, 0.0
        %v1244 = vsel %vm1122, %v431, %v1242
        %v1245 = vsel %vm1123, %v432, %v1243
        %v1246 = vsel %vm1004, %v421, %v1244
        %v1247 = vsel %vm1005, %v422, %v1245
        %v1248 = vsel %vm886, %v407, %v1246
        %v1249 = vsel %vm887, %v408, %v1247
        %v1250 = vpack.c.bf16 %v1249, %v1248
        %v1251 = vld [vmem:[#allocation5 + $0x1c0] sm:$0xf]
        %v1252 = vld [vmem:[#allocation5 + $0x1c4] sm:$0xf]
        %v1253 = vld [vmem:[#allocation5 + $0x1c8] sm:$0xf]
        %v1254 = vld [vmem:[#allocation5 + $0x1cc] sm:$0xf]
        %v1255 = vld [vmem:[#allocation5 + $0x1d0] sm:$0xf]
        %v1256 = vld [vmem:[#allocation5 + $0x1d4] sm:$0xf]
        %v1257 = vld [vmem:[#allocation5 + $0x1d8] sm:$0xf]
        %v1258 = vld [vmem:[#allocation5 + $0x1dc] sm:$0xf]
        %v1259 = vld [vmem:[#allocation5 + $0x1e0] sm:$0xf]
        %v1260 = vld [vmem:[#allocation5 + $0x1e4] sm:$0xf]
        %v1261 = vld [vmem:[#allocation5 + $0x1e8] sm:$0xf]
        %v1262 = vld [vmem:[#allocation5 + $0x1ec] sm:$0xf]
        %v1263 = vld [vmem:[#allocation5 + $0x1f0] sm:$0xf]
        %v1264 = vld [vmem:[#allocation5 + $0x1f4] sm:$0xf]
        %v1265 = vld [vmem:[#allocation5 + $0x1f8] sm:$0xf]
        %v1266 = vld [vmem:[#allocation5 + $0x1fc] sm:$0xf]
        %v1283 = vunpack.c.l.b16 %v1251
        %v1284 = vunpack.c.l.b16 %v1252
        %v1285 = vunpack.c.l.b16 %v1253
        %v1286 = vunpack.c.l.b16 %v1254
        %v1287 = vunpack.c.l.b16 %v1255
        %v1288 = vunpack.c.l.b16 %v1256
        %v1289 = vunpack.c.l.b16 %v1257
        %v1290 = vunpack.c.l.b16 %v1258
        %v1291 = vunpack.c.l.b16 %v1259
        %v1292 = vunpack.c.l.b16 %v1260
        %v1293 = vunpack.c.l.b16 %v1261
        %v1294 = vunpack.c.l.b16 %v1262
        %v1295 = vunpack.c.l.b16 %v1263
        %v1296 = vunpack.c.l.b16 %v1264
        %v1297 = vunpack.c.l.b16 %v1265
        %v1298 = vunpack.c.l.b16 %v1266
        %v1299 = vpack.c.b16 %v1284, %v1283
        %v1300 = vpack.c.b16 %v1286, %v1285
        %v1301 = vpack.c.b16 %v1288, %v1287
        %v1302 = vpack.c.b16 %v1290, %v1289
        %v1303 = vpack.c.b16 %v1292, %v1291
        %v1304 = vpack.c.b16 %v1294, %v1293
        %v1305 = vpack.c.b16 %v1296, %v1295
        %v1306 = vpack.c.b16 %v1298, %v1297
        %1315 = vmatprep.subr.bf16.mxu0 0
        %1316 = vmatpush1.bf16.msra.mxu0 %v1299
        %1317 = vmatprep.subr.bf16.mxu0 0
        %1318 = vmatpush1.bf16.msra.mxu0 %v1300
        %1319 = vmatprep.subr.bf16.mxu0 0
        %1320 = vmatpush1.bf16.msra.mxu0 %v1301
        %1321 = vmatprep.subr.bf16.mxu0 0
        %1322 = vmatpush1.bf16.msra.mxu0 %v1302
        %1323 = vmatprep.subr.bf16.mxu0 0
        %1324 = vmatpush1.bf16.msra.mxu0 %v1303
        %1325 = vmatprep.subr.bf16.mxu0 0
        %1326 = vmatpush1.bf16.msra.mxu0 %v1304
        %1327 = vmatprep.subr.bf16.mxu0 0
        %1328 = vmatpush1.bf16.msra.mxu0 %v1305
        %1329 = vmatprep.subr.bf16.mxu0 0
        %1330 = vmatpush1.bf16.msra.mxu0 %v1306
        %1331 = vmatprep.subr.bf16.mxu0 0
        %1332 = vmatpush1.bf16.msra.mxu0 0
        %1333 = vmatprep.subr.bf16.mxu0 0
        %1334 = vmatpush1.bf16.msra.mxu0 0
        %1335 = vmatprep.subr.bf16.mxu0 0
        %1336 = vmatpush1.bf16.msra.mxu0 0
        %1337 = vmatprep.subr.bf16.mxu0 0
        %1338 = vmatpush1.bf16.msra.mxu0 0
        %1339 = vmatprep.subr.bf16.mxu0 0
        %1340 = vmatpush1.bf16.msra.mxu0 0
        %1341 = vmatprep.subr.bf16.mxu0 0
        %1342 = vmatpush1.bf16.msra.mxu0 0
        %1343 = vmatprep.subr.bf16.mxu0 0
        %1344 = vmatpush1.bf16.msra.mxu0 0
        %1345 = vmatprep.subr.bf16.mxu0 0
        %1346 = vmatpush1.bf16.msra.mxu0 0
        %1347 = vmatprep.mubr.bf16.mxu0 0
        %1348 = vmatmul.mubr.bf16.gmra.mrb[0].mxu0 %v1250
        %v1349 = vpop.f32.mrb[0].mxu0
        %v1350 = vadd.f32 0.0, %v1349
        %v1351 = vpop.f32.mrb[0].mxu0
        %v1352 = vpop.f32.mrb[0].mxu0
        %v1353 = vadd.f32 0.0, %v1352
        %v1354 = vpop.f32.mrb[0].mxu0
        %1355 = vdwg.mxu0
        %v1356 = vadd.f32 %v1238, %v1350
        %v1357 = vadd.f32 %v1239, %v1353
        %vm1358 = vcmp.eq.f32.partialorder %v397, 10.0
        %vm1359 = vcmp.eq.f32.partialorder %v398, 10.0
        %v1360 = vsel %vm1358, %v437, 0.0
        %v1361 = vsel %vm1359, %v438, 0.0
        %v1362 = vsel %vm1240, %v431, %v1360
        %v1363 = vsel %vm1241, %v432, %v1361
        %v1364 = vsel %vm1122, %v421, %v1362
        %v1365 = vsel %vm1123, %v422, %v1363
        %v1366 = vsel %vm1004, %v407, %v1364
        %v1367 = vsel %vm1005, %v408, %v1365
        %v1368 = vpack.c.bf16 %v1367, %v1366
        %v1369 = vld [vmem:[#allocation5 + $0x200] sm:$0xf]
        %v1370 = vld [vmem:[#allocation5 + $0x204] sm:$0xf]
        %v1371 = vld [vmem:[#allocation5 + $0x208] sm:$0xf]
        %v1372 = vld [vmem:[#allocation5 + $0x20c] sm:$0xf]
        %v1373 = vld [vmem:[#allocation5 + $0x210] sm:$0xf]
        %v1374 = vld [vmem:[#allocation5 + $0x214] sm:$0xf]
        %v1375 = vld [vmem:[#allocation5 + $0x218] sm:$0xf]
        %v1376 = vld [vmem:[#allocation5 + $0x21c] sm:$0xf]
        %v1377 = vld [vmem:[#allocation5 + $0x220] sm:$0xf]
        %v1378 = vld [vmem:[#allocation5 + $0x224] sm:$0xf]
        %v1379 = vld [vmem:[#allocation5 + $0x228] sm:$0xf]
        %v1380 = vld [vmem:[#allocation5 + $0x22c] sm:$0xf]
        %v1381 = vld [vmem:[#allocation5 + $0x230] sm:$0xf]
        %v1382 = vld [vmem:[#allocation5 + $0x234] sm:$0xf]
        %v1383 = vld [vmem:[#allocation5 + $0x238] sm:$0xf]
        %v1384 = vld [vmem:[#allocation5 + $0x23c] sm:$0xf]
        %v1401 = vunpack.c.l.b16 %v1369
        %v1402 = vunpack.c.l.b16 %v1370
        %v1403 = vunpack.c.l.b16 %v1371
        %v1404 = vunpack.c.l.b16 %v1372
        %v1405 = vunpack.c.l.b16 %v1373
        %v1406 = vunpack.c.l.b16 %v1374
        %v1407 = vunpack.c.l.b16 %v1375
        %v1408 = vunpack.c.l.b16 %v1376
        %v1409 = vunpack.c.l.b16 %v1377
        %v1410 = vunpack.c.l.b16 %v1378
        %v1411 = vunpack.c.l.b16 %v1379
        %v1412 = vunpack.c.l.b16 %v1380
        %v1413 = vunpack.c.l.b16 %v1381
        %v1414 = vunpack.c.l.b16 %v1382
        %v1415 = vunpack.c.l.b16 %v1383
        %v1416 = vunpack.c.l.b16 %v1384
        %v1417 = vpack.c.b16 %v1402, %v1401
        %v1418 = vpack.c.b16 %v1404, %v1403
        %v1419 = vpack.c.b16 %v1406, %v1405
        %v1420 = vpack.c.b16 %v1408, %v1407
        %v1421 = vpack.c.b16 %v1410, %v1409
        %v1422 = vpack.c.b16 %v1412, %v1411
        %v1423 = vpack.c.b16 %v1414, %v1413
        %v1424 = vpack.c.b16 %v1416, %v1415
        %1433 = vmatprep.subr.bf16.mxu0 0
        %1434 = vmatpush1.bf16.msra.mxu0 %v1417
        %1435 = vmatprep.subr.bf16.mxu0 0
        %1436 = vmatpush1.bf16.msra.mxu0 %v1418
        %1437 = vmatprep.subr.bf16.mxu0 0
        %1438 = vmatpush1.bf16.msra.mxu0 %v1419
        %1439 = vmatprep.subr.bf16.mxu0 0
        %1440 = vmatpush1.bf16.msra.mxu0 %v1420
        %1441 = vmatprep.subr.bf16.mxu0 0
        %1442 = vmatpush1.bf16.msra.mxu0 %v1421
        %1443 = vmatprep.subr.bf16.mxu0 0
        %1444 = vmatpush1.bf16.msra.mxu0 %v1422
        %1445 = vmatprep.subr.bf16.mxu0 0
        %1446 = vmatpush1.bf16.msra.mxu0 %v1423
        %1447 = vmatprep.subr.bf16.mxu0 0
        %1448 = vmatpush1.bf16.msra.mxu0 %v1424
        %1449 = vmatprep.subr.bf16.mxu0 0
        %1450 = vmatpush1.bf16.msra.mxu0 0
        %1451 = vmatprep.subr.bf16.mxu0 0
        %1452 = vmatpush1.bf16.msra.mxu0 0
        %1453 = vmatprep.subr.bf16.mxu0 0
        %1454 = vmatpush1.bf16.msra.mxu0 0
        %1455 = vmatprep.subr.bf16.mxu0 0
        %1456 = vmatpush1.bf16.msra.mxu0 0
        %1457 = vmatprep.subr.bf16.mxu0 0
        %1458 = vmatpush1.bf16.msra.mxu0 0
        %1459 = vmatprep.subr.bf16.mxu0 0
        %1460 = vmatpush1.bf16.msra.mxu0 0
        %1461 = vmatprep.subr.bf16.mxu0 0
        %1462 = vmatpush1.bf16.msra.mxu0 0
        %1463 = vmatprep.subr.bf16.mxu0 0
        %1464 = vmatpush1.bf16.msra.mxu0 0
        %1465 = vmatprep.mubr.bf16.mxu0 0
        %1466 = vmatmul.mubr.bf16.gmra.mrb[0].mxu0 %v1368
        %v1467 = vpop.f32.mrb[0].mxu0
        %v1468 = vadd.f32 0.0, %v1467
        %v1469 = vpop.f32.mrb[0].mxu0
        %v1470 = vpop.f32.mrb[0].mxu0
        %v1471 = vadd.f32 0.0, %v1470
        %v1472 = vpop.f32.mrb[0].mxu0
        %1473 = vdwg.mxu0
        %v1474 = vadd.f32 %v1356, %v1468
        %v1475 = vadd.f32 %v1357, %v1471
        %vm1476 = vcmp.lt.s32.totalorder %v316, 32
        %1477 = vadd.xlane.f32.xlu0 %v1474
        %v1478 = vpop.xlane.xlu0 %1477
        %1479 = vadd.xlane.f32.xlu0 %v1475
        %v1480 = vpop.xlane.xlu0 %1479
        %v1481 = vmul.f32 %v1478, 0.03125
        %v1482 = vmul.f32 %v1480, 0.03125
        %v1483 = vsub.f32 %v1474, %v1481
        %v1484 = vsub.f32 %v1475, %v1482
        %v1485 = vsel %vm1476, 1, 0
        %vm1486 = vcmp.eq.s32.totalorder %v1485, 1
        %v1487 = vsel %vm1486, %v1483, 0.0
        %v1488 = vsel %vm1486, %v1484, 0.0
        %v1489 = vmul.f32 %v1487, %v1487
        %v1490 = vmul.f32 %v1488, %v1488
        %1491 = vadd.xlane.f32.xlu0 %v1489
        %v1492 = vpop.xlane.xlu0 %1491
        %1493 = vadd.xlane.f32.xlu0 %v1490
        %v1494 = vpop.xlane.xlu0 %1493
        %v1495 = vmul.f32 %v1492, 0.03125
        %v1496 = vmul.f32 %v1494, 0.03125
        %v1497 = vadd.f32 %v1495, 1e-05
        %v1498 = vadd.f32 %v1496, 1e-05
        %v1499 = vrsqrt.pop %v1497
        %v1500 = vrsqrt.pop %v1498
        %v1501 = vmul.f32 %v1487, %v1499
        %v1502 = vmul.f32 %v1488, %v1500
        %v1503 = vld [vmem:[%s4] sm:$0x1]
        %v1505 = vlaneseq
        %v1506 = vshrl.u32 %v1505, 7
        %v1507 = vsub.s32 0, %v1506
        %v1508 = vrot.slane %v1503, %v1507
        %v1510 = vmul.f32 %v1501, %v1508
        %v1511 = vmul.f32 %v1502, %v1508
        %v1512 = vld [vmem:[%s5] sm:$0x1]
        %v1514 = vlaneseq
        %v1515 = vshrl.u32 %v1514, 7
        %v1516 = vsub.s32 0, %v1515
        %v1517 = vrot.slane %v1512, %v1516
        %v1519 = vadd.f32 %v1510, %v1517
        %v1520 = vadd.f32 %v1511, %v1517
        %v1521 = vld [vmem:[%s6] sm:$0xff]
        %v1522 = vld [vmem:[%s6 + $0x8] sm:$0xff]
        %v1523 = vadd.f32 %v1519, %v1521
        %v1524 = vadd.f32 %v1520, %v1522
        %1525 = vst [vmem:[%s311] sm:$0xff] %v1523
        %1526 = vst [vmem:[%s311 + $0x8] sm:$0xff] %v1524
        %s1527 = sand.u32 %s185, 1
        %s1528 = scalar_lea.sflag [#allocation4], %s1527
        %s1529 = sand.u32 %s185, 1
        %s1530 = smul.addr %s1529, 16
        %s1531 = scalar_lea.vmem [#allocation7], %s1530
        // Predicated region
        $region57: #{tpu_custom_call.1} parent=47 // pred_check
          %p1532 = pneg %p195
        $region58: #{tpu_custom_call.1} parent=47 // pred_check_branch
          %1534 = sbr.rel (%p1532) target = $region60
        $region59: #{tpu_custom_call.1} parent=47 // pred_region
          %s1536 = ssub.s32 256, 256
          %1537 = vsyncadd %s1528, %s1536
          %s1538 = smul.addr %s25, 2
          %s1539 = smul.addr %s1538, 128
          %s1540 = scalar_lea.hbm %s7, %s1539
          %s1541 = sshll.u32 %s1531, 4
          %s1542 = int_to_ptr.vmem [resolvable:$true] %s1541
          %1547 = dma.vmem_to_hbm [thread:$0]  %s1542, 256, %s1540, %s1528, 128, 128, 8
        $region60: #{tpu_custom_call.1} parent=47 // pred_fallthru
          _
      $region48: #{tpu_custom_call.1} parent=5 // pred_fallthru
        _
      %p1548 = scmp.le.s32.totalorder 2, %s20
      // Predicated region
      $region61: #{tpu_custom_call.1} parent=5 // pred_check
        %p1549 = pneg %p1548
      $region62: #{tpu_custom_call.1} parent=5 // pred_check_branch
        %1551 = sbr.rel (%p1549) target = $region64
      $region63: #{tpu_custom_call.1} parent=5 // pred_region
        %s1552 = ssub.s32 %s20, 2
        // Predicated region
        $region65: #{tpu_custom_call.1} parent=63 // pred_check
          %p1553 = pneg %p201
        $region66: #{tpu_custom_call.1} parent=63 // pred_check_branch
          %1555 = sbr.rel (%p1553) target = $region68
        $region67: #{tpu_custom_call.1} parent=63 // pred_region
          %s1556 = sand.u32 %s186, 1
          %s1557 = scalar_lea.sflag [#allocation4], %s1556
          %s1558 = sand.u32 %s186, 1
          %s1559 = smul.addr %s1558, 16
          %s1560 = scalar_lea.vmem [#allocation7], %s1559
          %1561 = dma.done %s1557, 256
        $region68: #{tpu_custom_call.1} parent=63 // pred_fallthru
          _
      $region64: #{tpu_custom_call.1} parent=5 // pred_fallthru
        _
    $region6: #{tpu_custom_call.1} parent=1 // loop_footer
      %s24 = sadd.s32 1, %s20
    $region7: #{tpu_custom_call.1} parent=1 // loop_footer_branch
      %19 = sbr.rel target = $region3
    $region8: #{tpu_custom_call.1} parent=1 // loop_exit
      _
    %1562 = vsyncpa [#allocation3], 1
    %s1563 = scalar_lea.sflag [#allocation3], 1
    %1564 = vsyncpa %s1563, 1
    %1565 = vsyncpa [#allocation6], 1
    %1566 = vsyncpa [#allocation4], 1
    %s1567 = scalar_lea.sflag [#allocation4], 1
    %1568 = vsyncpa %s1567, 1

</llo_original>
